<compile_context>
chip_gen: v7x
topology: tpu7x:2x2x1
jax: 0.10.0
libtpu: 0.0.40
codegen_flags: <defaults>
</compile_context>

<pallas_src>
import functools

import numpy as np

import jax
import jax.numpy as jnp
from jax.experimental import pallas as pl
from jax.experimental.pallas import tpu as pltpu

LRELU_SLOPE = 0.01   # nn.LeakyReLU default
BN_EPS = 1e-5        # nn.BatchNorm2d default
LANE = 128
MAX_TILE_B = 256     # MXU M height on v6e/v7x; two row passes on v5e's 4x128 MXU

CFG = dict(width=8, num_layers=2, conv1x1=4, latent_dim=8, kernel_size=3, padding=1,
           image_size=16, img_channels=1, kl_weight=1e-3, dropout=0.0)


def _round_up(n, m):
    return ((n + m - 1) // m) * m


# ------------------------------------------------------------------ fused Pallas kernel

def _vae_fused_kernel(x_ref, eps_ref,
                      w0_ref, t0_ref, w1_ref, t1_ref, w2_ref, t2_ref,
                      wb_ref,
                      wd0_ref, td0_ref, wd1_ref, td1_ref, wd2_ref, td2_ref,
                      w3_ref, t3_ref,
                      y_ref, mlv_ref, *, latent_dim, last_ch, last_hw):
    """One batch tile of the whole VAE forward. Every layer is a dense matmul over
    NCHW-flattened activations with bias+BN shift and LeakyReLU fused in the epilogue."""

    def dense(a, w_ref, t_ref):
        # bf16 MXU operands, f32 accumulation, f32 epilogue (v5e has no bf16 VPU/EUP).
        y = jnp.dot(a.astype(jnp.bfloat16), w_ref[...],
                    preferred_element_type=jnp.float32) + t_ref[...]
        return jnp.where(y >= 0.0, y, LRELU_SLOPE * y)

    # ---- encoder: conv3x3 s2, conv3x3 s2, conv1x1 (BN + LeakyReLU folded) ----
    h = dense(x_ref[...], w0_ref, t0_ref)             # (TB, 512)
    h = dense(h, w1_ref, t1_ref)                       # (TB, 256)
    h = dense(h, w2_ref, t2_ref)                       # (TB, 128); cols >= 64 are exactly 0

    # ---- bottleneck: ONE fused matmul; cols [0,L)=mu, [L,2L)=logvar, rest exactly 0 ----
    mlv = jnp.dot(h.astype(jnp.bfloat16), wb_ref[...],
                  preferred_element_type=jnp.float32)  # (TB, 128)
    mlv_ref[...] = mlv                                  # single lane-dense store

    # ---- reparameterize: lane-roll (XLU) aligns logvar under the mu lanes ----
    n_lanes = mlv.shape[-1]
    lv_aligned = pltpu.roll(mlv, n_lanes - latent_dim, 1)   # cols [0,L) now hold logvar
    z = eps_ref[...].astype(jnp.float32) * jnp.exp(0.5 * lv_aligned) + mlv
    # Only cols [0, L) of z are meaningful; wd0 rows >= L are zero so the rest cancels exactly.

    # ---- decoder: (decoder_input o reshape o conv1x1 d0) pre-composed, then 2 ConvTranspose ----
    g = dense(z, wd0_ref, td0_ref)                      # (TB, 256)
    g = dense(g, wd1_ref, td1_ref)                      # (TB, 512)
    g = dense(g, wd2_ref, td2_ref)                      # (TB, 2048)

    # ---- final 1x1 conv (width -> 1): per-channel scale + balanced pairwise reduction tree ----
    m = g * w3_ref[...].astype(jnp.float32)
    parts = [m[:, c * last_hw:(c + 1) * last_hw] for c in range(last_ch)]
    while len(parts) > 1:
        nxt = [parts[i] + parts[i + 1] for i in range(0, len(parts) - 1, 2)]
        if len(parts) % 2:
            nxt.append(parts[-1])
        parts = nxt
    y_ref[...] = parts[0] + t3_ref[...]


# ------------------------------------------------------------------ one-time weight prep

def _np(x):
    return np.asarray(x, dtype=np.float32)


def _conv_dense(w_oikk, stride, pad, hin, win):
    """Exact dense matrix of nn.Conv2d over NCHW-flattened activations: out = in_flat @ M."""
    o, i, kh, kw = w_oikk.shape
    ho = (hin + 2 * pad - kh) // stride + 1
    wo = (win + 2 * pad - kw) // stride + 1
    m = np.zeros((i * hin * win, o * ho * wo), np.float32)
    wt = np.transpose(w_oikk, (1, 0, 2, 3))             # (I, O, kh, kw)
    for dh in range(kh):
        for dw in range(kw):
            for oy in range(ho):
                iy = oy * stride - pad + dh
                if iy < 0 or iy >= hin:
                    continue
                for ox in range(wo):
                    ix = ox * stride - pad + dw
                    if ix < 0 or ix >= win:
                        continue
                    rows = np.arange(i) * (hin * win) + iy * win + ix
                    cols = np.arange(o) * (ho * wo) + oy * wo + ox
                    m[rows[:, None], cols[None, :]] += wt[:, :, dh, dw]
    return m, ho, wo


def _convT_dense(w_iokk, stride, pad, out_pad, hin, win):
    """Exact dense matrix of nn.ConvTranspose2d over NCHW-flattened activations."""
    i, o, kh, kw = w_iokk.shape
    ho = (hin - 1) * stride - 2 * pad + kh + out_pad
    wo = (win - 1) * stride - 2 * pad + kw + out_pad
    m = np.zeros((i * hin * win, o * ho * wo), np.float32)
    for dh in range(kh):
        for dw in range(kw):
            for iy in range(hin):
                oy = iy * stride - pad + dh
                if oy < 0 or oy >= ho:
                    continue
                for ix in range(win):
                    ox = ix * stride - pad + dw
                    if ox < 0 or ox >= wo:
                        continue
                    rows = np.arange(i) * (hin * win) + iy * win + ix
                    cols = np.arange(o) * (ho * wo) + oy * wo + ox
                    m[rows[:, None], cols[None, :]] += w_iokk[:, :, dh, dw]
    return m, ho, wo


def _fold_bn(m, bias, bn, hw):
    """Fold conv bias + eval-mode BN affine into (scaled matrix, per-column shift)."""
    gamma, beta, mean, var = (_np(a) for a in bn)
    s = gamma / np.sqrt(var + BN_EPS)
    t = beta - mean * s + _np(bias) * s
    return m * np.repeat(s, hw)[None, :], np.repeat(t, hw).astype(np.float32)


def _raw_params(key):
    """Random parameters in PyTorch layouts (linears stored pre-transposed as (in, out))."""
    hidden = [CFG["width"] * 2 ** i for i in range(CFG["num_layers"])]       # [8, 16]
    inter_res = CFG["image_size"]
    for _ in range(CFG["num_layers"]):
        inter_res = (inter_res - CFG["kernel_size"] + 2 * CFG["padding"]) // 2 + 1
    inter_feats = inter_res * inter_res * CFG["conv1x1"]

    keys = iter(jax.random.split(key, 64))

    def w(shape, scale=0.1):
        return scale * jax.random.normal(next(keys), shape, jnp.float32)

    def bn(c):
        return (1.0 + 0.1 * jax.random.normal(next(keys), (c,), jnp.float32),          # gamma
                0.1 * jax.random.normal(next(keys), (c,), jnp.float32),                 # beta
                0.1 * jax.random.normal(next(keys), (c,), jnp.float32),                 # running_mean
                1.0 + jnp.abs(0.1 * jax.random.normal(next(keys), (c,), jnp.float32)))  # running_var

    p = {}
    p["e0_w"], p["e0_b"], p["e0_bn"] = w((hidden[0], 3, 3, 3)), w((hidden[0],)), bn(hidden[0])
    p["e1_w"], p["e1_b"], p["e1_bn"] = w((hidden[1], hidden[0], 3, 3)), w((hidden[1],)), bn(hidden[1])
    p["e2_w"], p["e2_b"], p["e2_bn"] = w((CFG["conv1x1"], hidden[1], 1, 1)), w((CFG["conv1x1"],)), bn(CFG["conv1x1"])
    p["bneck_w"] = w((inter_feats, 2 * CFG["latent_dim"]))      # (in, out), bias-free
    p["dinp_w"] = w((CFG["latent_dim"], inter_feats))           # (in, out), bias-free
    p["d0_w"], p["d0_b"], p["d0_bn"] = w((hidden[1], CFG["conv1x1"], 1, 1)), w((hidden[1],)), bn(hidden[1])
    p["d1_w"], p["d1_b"], p["d1_bn"] = w((hidden[1], hidden[0], 3, 3)), w((hidden[0],)), bn(hidden[0])
    p["d2_w"], p["d2_b"], p["d2_bn"] = w((hidden[0], hidden[0], 3, 3)), w((hidden[0],)), bn(hidden[0])
    p["d3_w"], p["d3_b"] = w((CFG["img_channels"], hidden[0], 1, 1)), w((CFG["img_channels"],))
    p["inter_res"], p["inter_feats"], p["hidden"] = inter_res, inter_feats, hidden
    return p


def make_params(key):
    """Kernel-ready parameters: dense per-layer matrices with BN/bias folded, bf16 matrices,
    f32 shifts, 128-lane padding where it keeps the kernel lane-dense."""
    assert CFG["img_channels"] == 1  # final 1x1 conv lowered as a per-channel lane reduction
    r = _raw_params(key)
    S, ir, L = CFG["image_size"], r["inter_res"], CFG["latent_dim"]
    pad = CFG["padding"]

    # encoder
    m0, s1, _ = _conv_dense(_np(r["e0_w"]), 2, pad, S, S)              # 16 -> 8
    m0, t0 = _fold_bn(m0, r["e0_b"], r["e0_bn"], s1 * s1)
    # fold torch's x.repeat(1,3,1,1) (1-channel input replicated to 3) into w0: sum the three
    # identical channel blocks of rows -> input to the kernel is the 1-channel flatten (B, S*S).
    m0 = m0.reshape(3, S * S, -1).sum(axis=0)

    m1, s2, _ = _conv_dense(_np(r["e1_w"]), 2, pad, s1, s1)            # 8 -> 4
    m1, t1 = _fold_bn(m1, r["e1_b"], r["e1_bn"], s2 * s2)
    m2, _, _ = _conv_dense(_np(r["e2_w"]), 1, 0, s2, s2)               # 1x1, 16 -> 4 ch
    m2, t2 = _fold_bn(m2, r["e2_b"], r["e2_bn"], s2 * s2)
    assert s2 == ir

    # pad the conv1x1 stage and the bottleneck to 128 lanes (exact: zero columns -> zero act)
    feat2 = m2.shape[1]                                                # 64
    m2 = np.pad(m2, ((0, 0), (0, LANE - feat2)))
    t2 = np.pad(t2, (0, LANE - feat2))

    # bottleneck (nn.Flatten of NCHW == c-major flatten) fused to one (128,128) matrix:
    # cols [0,L)=mu weights, [L,2L)=logvar weights, rest zero; rows >= 64 zero.
    wb = _np(r["bneck_w"])                                             # (64, 2L)
    wb = np.pad(wb, ((0, LANE - wb.shape[0]), (0, LANE - wb.shape[1])))

    # decoder_input (bias-free) o Reshape o d0 (1x1 conv + BN), composed; rows padded L -> 128
    md0, _, _ = _conv_dense(_np(r["d0_w"]), 1, 0, ir, ir)
    md0, td0 = _fold_bn(md0, r["d0_b"], r["d0_bn"], ir * ir)
    wd0 = _np(r["dinp_w"]) @ md0                                       # (L, 16*ir*ir)
    wd0 = np.pad(wd0, ((0, LANE - L), (0, 0)))

    # ConvTranspose layers (exact dense lowering; output_padding=1 as in the reference model)
    md1, s3, _ = _convT_dense(_np(r["d1_w"]), 2, pad, 1, ir, ir)       # 4 -> 8
    md1, td1 = _fold_bn(md1, r["d1_b"], r["d1_bn"], s3 * s3)
    md2, s4, _ = _convT_dense(_np(r["d2_w"]), 2, pad, 1, s3, s3)       # 8 -> 16
    md2, td2 = _fold_bn(md2, r["d2_b"], r["d2_bn"], s4 * s4)
    assert s4 == S

    # final 1x1 conv (width -> 1), no BN: per-channel scale vector + scalar bias
    w3 = _np(r["d3_w"])[0, :, 0, 0]                                    # (width,)
    w3_full = np.repeat(w3, S * S)                                     # matches d2 flatten order
    t3 = np.full((S * S,), float(_np(r["d3_b"])[0]), np.float32)

    bf16, f32 = jnp.bfloat16, jnp.float32
    params = dict(
        w0=jnp.asarray(m0, bf16), t0=jnp.asarray(t0[None, :], f32),
        w1=jnp.asarray(m1, bf16), t1=jnp.asarray(t1[None, :], f32),
        w2=jnp.asarray(m2, bf16), t2=jnp.asarray(t2[None, :], f32),
        wb=jnp.asarray(wb, bf16),
        wd0=jnp.asarray(wd0, bf16), td0=jnp.asarray(td0[None, :], f32),
        wd1=jnp.asarray(md1, bf16), td1=jnp.asarray(td1[None, :], f32),
        wd2=jnp.asarray(md2, bf16), td2=jnp.asarray(td2[None, :], f32),
        w3=jnp.asarray(w3_full[None, :], bf16), t3=jnp.asarray(t3[None, :], f32),
    )

    # VMEM scaling guard: resident (double-buffered) weights must stay well under the scoped
    # VMEM budget on every generation (v7x: 64 MiB physical / 32 MiB scoped default).
    total_bytes = sum(int(np.prod(v.shape)) * v.dtype.itemsize for v in params.values())
    assert total_bytes < 12 * 1024 * 1024, (
        "dense-lowered weights too large for the resident-in-VMEM strategy; switch the big "
        "conv/convT layers to shifted-tap convolutions and tile M over the grid")
    return params


# ------------------------------------------------------------------ forward (batch-tile grid)

def vae_forward(x_nchw, params, eps):
    B, C, S, _ = x_nchw.shape
    assert C == 1 and S == CFG["image_size"]
    L = CFG["latent_dim"]
    S2 = S * S

    # batch tiling: >= 16 rows (bf16 sublane packing), up to 256 rows per tile
    tile_b = min(MAX_TILE_B, _round_up(max(B, 16), 16))
    b_pad = _round_up(B, tile_b)
    n_tiles = b_pad // tile_b

    # dropout(eval) = identity; the 1->3 channel repeat is folded into w0, so feed the
    # single-channel NCHW flatten directly. Pre-cast to bf16 (weights are bf16, accum f32).
    x_flat = x_nchw.reshape(B, S2).astype(jnp.bfloat16)
    x_flat = jnp.pad(x_flat, ((0, b_pad - B), (0, 0)))
    eps_pad = jnp.pad(eps.astype(jnp.bfloat16), ((0, b_pad - B), (0, LANE - L)))

    order = ("w0", "t0", "w1", "t1", "w2", "t2", "wb",
             "wd0", "td0", "wd1", "td1", "wd2", "td2", "w3", "t3")
    weights = tuple(params[k] for k in order)

    in_specs = [pl.BlockSpec((tile_b, S2), lambda i: (i, 0)),          # x: tiled over batch
                pl.BlockSpec((tile_b, LANE), lambda i: (i, 0))]        # eps: tiled over batch
    # constant index_map -> weight blocks stay VMEM-resident across all grid steps
    in_specs += [pl.BlockSpec(w.shape, lambda i: (0, 0)) for w in weights]

    out_shape = (jax.ShapeDtypeStruct((b_pad, S2), jnp.float32),       # y (flattened image)
                 jax.ShapeDtypeStruct((b_pad, LANE), jnp.float32))     # [mu | logvar | 0-pad]
    out_specs = (pl.BlockSpec((tile_b, S2), lambda i: (i, 0)),
                 pl.BlockSpec((tile_b, LANE), lambda i: (i, 0)))

    kern = functools.partial(_vae_fused_kernel, latent_dim=L,
                             last_ch=CFG["width"], last_hw=S2)
    y_flat, mlv = pl.pallas_call(
        kern,
        out_shape=out_shape,
        grid=(n_tiles,),
        in_specs=in_specs,
        out_specs=out_specs,
        compiler_params=pltpu.CompilerParams(
            dimension_semantics=("parallel",),          # batch tiles -> both v7x TensorCores
            vmem_limit_bytes=32 * 1024 * 1024),
    )(x_flat, eps_pad, *weights)

    y = y_flat[:B].reshape(B, CFG["img_channels"], S, S)
    mu = mlv[:B, :L]
    logvar = mlv[:B, L:2 * L]
    return y, mu, logvar


# ------------------------------------------------------------------ plain-JAX reference

def _reference_forward(x_nchw, p, eps):
    """Same folded math in plain jnp (bf16 matmuls, f32 accumulation) for a correctness check."""
    B = x_nchw.shape[0]
    S, L = CFG["image_size"], CFG["latent_dim"]
    bf16, f32 = jnp.bfloat16, jnp.float32

    def dense(a, w, t):
        y = jnp.dot(a.astype(bf16), w, preferred_element_type=f32) + t
        return jnp.where(y >= 0.0, y, LRELU_SLOPE * y)

    xf = x_nchw.reshape(B, S * S).astype(bf16)
    h = dense(xf, p["w0"], p["t0"])
    h = dense(h, p["w1"], p["t1"])
    h = dense(h, p["w2"], p["t2"])
    mlv = jnp.dot(h.astype(bf16), p["wb"], preferred_element_type=f32)
    mu, lv = mlv[:, :L], mlv[:, L:2 * L]
    z = eps.astype(bf16).astype(f32) * jnp.exp(0.5 * lv) + mu
    g = dense(z, p["wd0"][:L], p["td0"])
    g = dense(g, p["wd1"], p["td1"])
    g = dense(g, p["wd2"], p["td2"])
    m = (g * p["w3"].astype(f32)).reshape(B, CFG["width"], S * S)
    y = m.sum(axis=1) + p["t3"]
    return y.reshape(B, CFG["img_channels"], S, S), mu, lv


# ------------------------------------------------------------------ main

if __name__ == "__main__":
    key = jax.random.PRNGKey(0)
    k_x, k_eps, k_p = jax.random.split(key, 3)
    S, L = CFG["image_size"], CFG["latent_dim"]

    params = make_params(k_p)
    fwd = jax.jit(vae_forward)

    # small example consistent with the module (B=2, 1x16x16 image)
    x = jax.random.normal(k_x, (2, CFG["img_channels"], S, S), jnp.float32)
    eps = jax.random.normal(k_eps, (2, L), jnp.float32)
    y, mu, logvar = fwd(x, params, eps)
    jax.block_until_ready((y, mu, logvar))
    assert y.shape == (2, CFG["img_channels"], S, S)
    assert mu.shape == (2, L) and logvar.shape == (2, L)

    # correctness vs plain-JAX reference of the same folded math
    y_ref, mu_ref, lv_ref = _reference_forward(x, params, eps)
    np.testing.assert_allclose(np.asarray(y), np.asarray(y_ref), rtol=5e-2, atol=5e-2)
    np.testing.assert_allclose(np.asarray(mu), np.asarray(mu_ref), rtol=5e-2, atol=5e-2)
    np.testing.assert_allclose(np.asarray(logvar), np.asarray(lv_ref), rtol=5e-2, atol=5e-2)

    # larger batch exercises the multi-tile "parallel" grid (weights stay VMEM-resident)
    xb = jax.random.normal(k_x, (300, CFG["img_channels"], S, S), jnp.float32)
    epsb = jax.random.normal(k_eps, (300, L), jnp.float32)
    yb, mub, lvb = fwd(xb, params, epsb)
    jax.block_until_ready((yb, mub, lvb))
    assert yb.shape == (300, CFG["img_channels"], S, S)
    assert mub.shape == (300, L) and lvb.shape == (300, L)

    print("KERNEL_OK")
</pallas_src>

<mosaic_0001>
module attributes {stable_mosaic.version = 11 : i64} {
  func.func @_vae_fused_kernel(%arg0: i32, %arg1: memref<16x256xbf16, #tpu.memory_space<vmem>>, %arg2: memref<16x128xbf16, #tpu.memory_space<vmem>>, %arg3: memref<256x512xbf16, #tpu.memory_space<vmem>>, %arg4: memref<1x512xf32, #tpu.memory_space<vmem>>, %arg5: memref<512x256xbf16, #tpu.memory_space<vmem>>, %arg6: memref<1x256xf32, #tpu.memory_space<vmem>>, %arg7: memref<256x128xbf16, #tpu.memory_space<vmem>>, %arg8: memref<1x128xf32, #tpu.memory_space<vmem>>, %arg9: memref<128x128xbf16, #tpu.memory_space<vmem>>, %arg10: memref<128x256xbf16, #tpu.memory_space<vmem>>, %arg11: memref<1x256xf32, #tpu.memory_space<vmem>>, %arg12: memref<256x512xbf16, #tpu.memory_space<vmem>>, %arg13: memref<1x512xf32, #tpu.memory_space<vmem>>, %arg14: memref<512x2048xbf16, #tpu.memory_space<vmem>>, %arg15: memref<1x2048xf32, #tpu.memory_space<vmem>>, %arg16: memref<1x2048xbf16, #tpu.memory_space<vmem>>, %arg17: memref<1x256xf32, #tpu.memory_space<vmem>>, %arg18: memref<16x256xf32, #tpu.memory_space<vmem>>, %arg19: memref<16x128xf32, #tpu.memory_space<vmem>>) attributes {dimension_semantics = [#tpu.dimension_semantics<parallel>], iteration_bounds = array<i64: 1>, scalar_prefetch = 0 : i64, scratch_operands = 0 : i64, tpu.core_type = #tpu.core_type<tc>, window_params = [{transform_indices = @transform_0, window_bounds = array<i64: 16, 256>}, {transform_indices = @transform_1, window_bounds = array<i64: 16, 128>}, {pipeline_mode = #tpu.pipeline_mode<synchronous>, transform_indices = @transform_2, window_bounds = array<i64: 256, 512>}, {pipeline_mode = #tpu.pipeline_mode<synchronous>, transform_indices = @transform_3, window_bounds = array<i64: 1, 512>}, {pipeline_mode = #tpu.pipeline_mode<synchronous>, transform_indices = @transform_4, window_bounds = array<i64: 512, 256>}, {pipeline_mode = #tpu.pipeline_mode<synchronous>, transform_indices = @transform_5, window_bounds = array<i64: 1, 256>}, {pipeline_mode = #tpu.pipeline_mode<synchronous>, transform_indices = @transform_6, window_bounds = array<i64: 256, 128>}, {pipeline_mode = #tpu.pipeline_mode<synchronous>, transform_indices = @transform_7, window_bounds = array<i64: 1, 128>}, {pipeline_mode = #tpu.pipeline_mode<synchronous>, transform_indices = @transform_8, window_bounds = array<i64: 128, 128>}, {pipeline_mode = #tpu.pipeline_mode<synchronous>, transform_indices = @transform_9, window_bounds = array<i64: 128, 256>}, {pipeline_mode = #tpu.pipeline_mode<synchronous>, transform_indices = @transform_10, window_bounds = array<i64: 1, 256>}, {pipeline_mode = #tpu.pipeline_mode<synchronous>, transform_indices = @transform_11, window_bounds = array<i64: 256, 512>}, {pipeline_mode = #tpu.pipeline_mode<synchronous>, transform_indices = @transform_12, window_bounds = array<i64: 1, 512>}, {pipeline_mode = #tpu.pipeline_mode<synchronous>, transform_indices = @transform_13, window_bounds = array<i64: 512, 2048>}, {pipeline_mode = #tpu.pipeline_mode<synchronous>, transform_indices = @transform_14, window_bounds = array<i64: 1, 2048>}, {pipeline_mode = #tpu.pipeline_mode<synchronous>, transform_indices = @transform_15, window_bounds = array<i64: 1, 2048>}, {pipeline_mode = #tpu.pipeline_mode<synchronous>, transform_indices = @transform_16, window_bounds = array<i64: 1, 256>}, {transform_indices = @transform_17, window_bounds = array<i64: 16, 256>}, {transform_indices = @transform_18, window_bounds = array<i64: 16, 128>}]} {
    %c0 = arith.constant 0 : index
    %c0_0 = arith.constant 0 : index
    %0 = vector.load %arg1[%c0, %c0_0] : memref<16x256xbf16, #tpu.memory_space<vmem>>, vector<16x256xbf16>
    %c0_1 = arith.constant 0 : index
    %c0_2 = arith.constant 0 : index
    %1 = vector.load %arg3[%c0_1, %c0_2] : memref<256x512xbf16, #tpu.memory_space<vmem>>, vector<256x512xbf16>
    %cst = arith.constant dense<0.000000e+00> : vector<16x512xf32>
    %2 = tpu.matmul %0, %1, %cst {dimension_numbers = #tpu.dot_dimension_numbers<[1], [0], [0], [1], [0, 0, 1, 1], [], []>} : vector<16x256xbf16>, vector<256x512xbf16>, vector<16x512xf32> -> vector<16x512xf32>
    %c0_3 = arith.constant 0 : index
    %c0_4 = arith.constant 0 : index
    %3 = vector.load %arg4[%c0_3, %c0_4] : memref<1x512xf32, #tpu.memory_space<vmem>>, vector<1x512xf32>
    %4 = vector.broadcast %3 : vector<1x512xf32> to vector<16x512xf32>
    %5 = arith.addf %2, %4 : vector<16x512xf32>
    %cst_5 = arith.constant 0.000000e+00 : f32
    %6 = vector.broadcast %cst_5 : f32 to vector<16x512xf32>
    %7 = arith.cmpf oge, %5, %6 : vector<16x512xf32>
    %cst_6 = arith.constant 0.00999999977 : f32
    %8 = vector.broadcast %cst_6 : f32 to vector<16x512xf32>
    %9 = arith.mulf %8, %5 : vector<16x512xf32>
    %10 = arith.select %7, %5, %9 : vector<16x512xi1>, vector<16x512xf32>
    %11 = arith.truncf %10 : vector<16x512xf32> to vector<16x512xbf16>
    %c0_7 = arith.constant 0 : index
    %c0_8 = arith.constant 0 : index
    %12 = vector.load %arg5[%c0_7, %c0_8] : memref<512x256xbf16, #tpu.memory_space<vmem>>, vector<512x256xbf16>
    %cst_9 = arith.constant dense<0.000000e+00> : vector<16x256xf32>
    %13 = tpu.matmul %11, %12, %cst_9 {dimension_numbers = #tpu.dot_dimension_numbers<[1], [0], [0], [1], [0, 0, 1, 1], [], []>} : vector<16x512xbf16>, vector<512x256xbf16>, vector<16x256xf32> -> vector<16x256xf32>
    %c0_10 = arith.constant 0 : index
    %c0_11 = arith.constant 0 : index
    %14 = vector.load %arg6[%c0_10, %c0_11] : memref<1x256xf32, #tpu.memory_space<vmem>>, vector<1x256xf32>
    %15 = vector.broadcast %14 : vector<1x256xf32> to vector<16x256xf32>
    %16 = arith.addf %13, %15 : vector<16x256xf32>
    %cst_12 = arith.constant 0.000000e+00 : f32
    %17 = vector.broadcast %cst_12 : f32 to vector<16x256xf32>
    %18 = arith.cmpf oge, %16, %17 : vector<16x256xf32>
    %cst_13 = arith.constant 0.00999999977 : f32
    %19 = vector.broadcast %cst_13 : f32 to vector<16x256xf32>
    %20 = arith.mulf %19, %16 : vector<16x256xf32>
    %21 = arith.select %18, %16, %20 : vector<16x256xi1>, vector<16x256xf32>
    %22 = arith.truncf %21 : vector<16x256xf32> to vector<16x256xbf16>
    %c0_14 = arith.constant 0 : index
    %c0_15 = arith.constant 0 : index
    %23 = vector.load %arg7[%c0_14, %c0_15] : memref<256x128xbf16, #tpu.memory_space<vmem>>, vector<256x128xbf16>
    %cst_16 = arith.constant dense<0.000000e+00> : vector<16x128xf32>
    %24 = tpu.matmul %22, %23, %cst_16 {dimension_numbers = #tpu.dot_dimension_numbers<[1], [0], [0], [1], [0, 0, 1, 1], [], []>} : vector<16x256xbf16>, vector<256x128xbf16>, vector<16x128xf32> -> vector<16x128xf32>
    %c0_17 = arith.constant 0 : index
    %c0_18 = arith.constant 0 : index
    %25 = vector.load %arg8[%c0_17, %c0_18] : memref<1x128xf32, #tpu.memory_space<vmem>>, vector<1x128xf32>
    %26 = vector.broadcast %25 : vector<1x128xf32> to vector<16x128xf32>
    %27 = arith.addf %24, %26 : vector<16x128xf32>
    %cst_19 = arith.constant 0.000000e+00 : f32
    %28 = vector.broadcast %cst_19 : f32 to vector<16x128xf32>
    %29 = arith.cmpf oge, %27, %28 : vector<16x128xf32>
    %cst_20 = arith.constant 0.00999999977 : f32
    %30 = vector.broadcast %cst_20 : f32 to vector<16x128xf32>
    %31 = arith.mulf %30, %27 : vector<16x128xf32>
    %32 = arith.select %29, %27, %31 : vector<16x128xi1>, vector<16x128xf32>
    %33 = arith.truncf %32 : vector<16x128xf32> to vector<16x128xbf16>
    %c0_21 = arith.constant 0 : index
    %c0_22 = arith.constant 0 : index
    %34 = vector.load %arg9[%c0_21, %c0_22] : memref<128x128xbf16, #tpu.memory_space<vmem>>, vector<128x128xbf16>
    %cst_23 = arith.constant dense<0.000000e+00> : vector<16x128xf32>
    %35 = tpu.matmul %33, %34, %cst_23 {dimension_numbers = #tpu.dot_dimension_numbers<[1], [0], [0], [1], [0, 0, 1, 1], [], []>} : vector<16x128xbf16>, vector<128x128xbf16>, vector<16x128xf32> -> vector<16x128xf32>
    %c0_24 = arith.constant 0 : index
    %c0_25 = arith.constant 0 : index
    %36 = vector.load %arg19[%c0_24, %c0_25] : memref<16x128xf32, #tpu.memory_space<vmem>>, vector<16x128xf32>
    tpu.vector_store %arg19[%c0_24, %c0_25], %35 {strides = array<i32>} : memref<16x128xf32, #tpu.memory_space<vmem>>, vector<16x128xf32>,
    %c120_i32 = arith.constant 120 : i32
    %37 = tpu.dynamic_rotate %35 by %c120_i32 dim 1 : vector<16x128xf32>, i32 -> vector<16x128xf32>
    %c0_26 = arith.constant 0 : index
    %c0_27 = arith.constant 0 : index
    %38 = vector.load %arg2[%c0_26, %c0_27] : memref<16x128xbf16, #tpu.memory_space<vmem>>, vector<16x128xbf16>
    %39 = arith.extf %38 : vector<16x128xbf16> to vector<16x128xf32>
    %cst_28 = arith.constant 5.000000e-01 : f32
    %40 = vector.broadcast %cst_28 : f32 to vector<16x128xf32>
    %41 = arith.mulf %40, %37 : vector<16x128xf32>
    %42 = math.exp %41 : vector<16x128xf32>
    %43 = arith.mulf %39, %42 : vector<16x128xf32>
    %44 = arith.addf %43, %35 : vector<16x128xf32>
    %45 = arith.truncf %44 : vector<16x128xf32> to vector<16x128xbf16>
    %c0_29 = arith.constant 0 : index
    %c0_30 = arith.constant 0 : index
    %46 = vector.load %arg10[%c0_29, %c0_30] : memref<128x256xbf16, #tpu.memory_space<vmem>>, vector<128x256xbf16>
    %cst_31 = arith.constant dense<0.000000e+00> : vector<16x256xf32>
    %47 = tpu.matmul %45, %46, %cst_31 {dimension_numbers = #tpu.dot_dimension_numbers<[1], [0], [0], [1], [0, 0, 1, 1], [], []>} : vector<16x128xbf16>, vector<128x256xbf16>, vector<16x256xf32> -> vector<16x256xf32>
    %c0_32 = arith.constant 0 : index
    %c0_33 = arith.constant 0 : index
    %48 = vector.load %arg11[%c0_32, %c0_33] : memref<1x256xf32, #tpu.memory_space<vmem>>, vector<1x256xf32>
    %49 = vector.broadcast %48 : vector<1x256xf32> to vector<16x256xf32>
    %50 = arith.addf %47, %49 : vector<16x256xf32>
    %cst_34 = arith.constant 0.000000e+00 : f32
    %51 = vector.broadcast %cst_34 : f32 to vector<16x256xf32>
    %52 = arith.cmpf oge, %50, %51 : vector<16x256xf32>
    %cst_35 = arith.constant 0.00999999977 : f32
    %53 = vector.broadcast %cst_35 : f32 to vector<16x256xf32>
    %54 = arith.mulf %53, %50 : vector<16x256xf32>
    %55 = arith.select %52, %50, %54 : vector<16x256xi1>, vector<16x256xf32>
    %56 = arith.truncf %55 : vector<16x256xf32> to vector<16x256xbf16>
    %c0_36 = arith.constant 0 : index
    %c0_37 = arith.constant 0 : index
    %57 = vector.load %arg12[%c0_36, %c0_37] : memref<256x512xbf16, #tpu.memory_space<vmem>>, vector<256x512xbf16>
    %cst_38 = arith.constant dense<0.000000e+00> : vector<16x512xf32>
    %58 = tpu.matmul %56, %57, %cst_38 {dimension_numbers = #tpu.dot_dimension_numbers<[1], [0], [0], [1], [0, 0, 1, 1], [], []>} : vector<16x256xbf16>, vector<256x512xbf16>, vector<16x512xf32> -> vector<16x512xf32>
    %c0_39 = arith.constant 0 : index
    %c0_40 = arith.constant 0 : index
    %59 = vector.load %arg13[%c0_39, %c0_40] : memref<1x512xf32, #tpu.memory_space<vmem>>, vector<1x512xf32>
    %60 = vector.broadcast %59 : vector<1x512xf32> to vector<16x512xf32>
    %61 = arith.addf %58, %60 : vector<16x512xf32>
    %cst_41 = arith.constant 0.000000e+00 : f32
    %62 = vector.broadcast %cst_41 : f32 to vector<16x512xf32>
    %63 = arith.cmpf oge, %61, %62 : vector<16x512xf32>
    %cst_42 = arith.constant 0.00999999977 : f32
    %64 = vector.broadcast %cst_42 : f32 to vector<16x512xf32>
    %65 = arith.mulf %64, %61 : vector<16x512xf32>
    %66 = arith.select %63, %61, %65 : vector<16x512xi1>, vector<16x512xf32>
    %67 = arith.truncf %66 : vector<16x512xf32> to vector<16x512xbf16>
    %c0_43 = arith.constant 0 : index
    %c0_44 = arith.constant 0 : index
    %68 = vector.load %arg14[%c0_43, %c0_44] : memref<512x2048xbf16, #tpu.memory_space<vmem>>, vector<512x2048xbf16>
    %cst_45 = arith.constant dense<0.000000e+00> : vector<16x2048xf32>
    %69 = tpu.matmul %67, %68, %cst_45 {dimension_numbers = #tpu.dot_dimension_numbers<[1], [0], [0], [1], [0, 0, 1, 1], [], []>} : vector<16x512xbf16>, vector<512x2048xbf16>, vector<16x2048xf32> -> vector<16x2048xf32>
    %c0_46 = arith.constant 0 : index
    %c0_47 = arith.constant 0 : index
    %70 = vector.load %arg15[%c0_46, %c0_47] : memref<1x2048xf32, #tpu.memory_space<vmem>>, vector<1x2048xf32>
    %71 = vector.broadcast %70 : vector<1x2048xf32> to vector<16x2048xf32>
    %72 = arith.addf %69, %71 : vector<16x2048xf32>
    %cst_48 = arith.constant 0.000000e+00 : f32
    %73 = vector.broadcast %cst_48 : f32 to vector<16x2048xf32>
    %74 = arith.cmpf oge, %72, %73 : vector<16x2048xf32>
    %cst_49 = arith.constant 0.00999999977 : f32
    %75 = vector.broadcast %cst_49 : f32 to vector<16x2048xf32>
    %76 = arith.mulf %75, %72 : vector<16x2048xf32>
    %77 = arith.select %74, %72, %76 : vector<16x2048xi1>, vector<16x2048xf32>
    %c0_50 = arith.constant 0 : index
    %c0_51 = arith.constant 0 : index
    %78 = vector.load %arg16[%c0_50, %c0_51] : memref<1x2048xbf16, #tpu.memory_space<vmem>>, vector<1x2048xbf16>
    %79 = arith.extf %78 : vector<1x2048xbf16> to vector<1x2048xf32>
    %80 = vector.broadcast %79 : vector<1x2048xf32> to vector<16x2048xf32>
    %81 = arith.mulf %77, %80 : vector<16x2048xf32>
    %82 = vector.extract_strided_slice %81 {offsets = [0, 0], sizes = [16, 256], strides = [1, 1]} : vector<16x2048xf32> to vector<16x256xf32>
    %83 = vector.extract_strided_slice %81 {offsets = [0, 256], sizes = [16, 256], strides = [1, 1]} : vector<16x2048xf32> to vector<16x256xf32>
    %84 = vector.extract_strided_slice %81 {offsets = [0, 512], sizes = [16, 256], strides = [1, 1]} : vector<16x2048xf32> to vector<16x256xf32>
    %85 = vector.extract_strided_slice %81 {offsets = [0, 768], sizes = [16, 256], strides = [1, 1]} : vector<16x2048xf32> to vector<16x256xf32>
    %86 = vector.extract_strided_slice %81 {offsets = [0, 1024], sizes = [16, 256], strides = [1, 1]} : vector<16x2048xf32> to vector<16x256xf32>
    %87 = vector.extract_strided_slice %81 {offsets = [0, 1280], sizes = [16, 256], strides = [1, 1]} : vector<16x2048xf32> to vector<16x256xf32>
    %88 = vector.extract_strided_slice %81 {offsets = [0, 1536], sizes = [16, 256], strides = [1, 1]} : vector<16x2048xf32> to vector<16x256xf32>
    %89 = vector.extract_strided_slice %81 {offsets = [0, 1792], sizes = [16, 256], strides = [1, 1]} : vector<16x2048xf32> to vector<16x256xf32>
    %90 = arith.addf %82, %83 : vector<16x256xf32>
    %91 = arith.addf %84, %85 : vector<16x256xf32>
    %92 = arith.addf %86, %87 : vector<16x256xf32>
    %93 = arith.addf %88, %89 : vector<16x256xf32>
    %94 = arith.addf %90, %91 : vector<16x256xf32>
    %95 = arith.addf %92, %93 : vector<16x256xf32>
    %96 = arith.addf %94, %95 : vector<16x256xf32>
    %c0_52 = arith.constant 0 : index
    %c0_53 = arith.constant 0 : index
    %97 = vector.load %arg17[%c0_52, %c0_53] : memref<1x256xf32, #tpu.memory_space<vmem>>, vector<1x256xf32>
    %98 = vector.broadcast %97 : vector<1x256xf32> to vector<16x256xf32>
    %99 = arith.addf %96, %98 : vector<16x256xf32>
    %c0_54 = arith.constant 0 : index
    %c0_55 = arith.constant 0 : index
    %100 = vector.load %arg18[%c0_54, %c0_55] : memref<16x256xf32, #tpu.memory_space<vmem>>, vector<16x256xf32>
    tpu.vector_store %arg18[%c0_54, %c0_55], %99 {strides = array<i32>} : memref<16x256xf32, #tpu.memory_space<vmem>>, vector<16x256xf32>,
    return
  }
  func.func @transform_0(%arg0: i32) -> (i32, i32) {
    %c0_i32 = arith.constant 0 : i32
    %c0_i32_0 = arith.constant 0 : i32
    return %arg0, %c0_i32 : i32, i32
  }
  func.func @transform_1(%arg0: i32) -> (i32, i32) {
    %c0_i32 = arith.constant 0 : i32
    %c0_i32_0 = arith.constant 0 : i32
    return %arg0, %c0_i32 : i32, i32
  }
  func.func @transform_2(%arg0: i32) -> (i32, i32) {
    %c0_i32 = arith.constant 0 : i32
    %c0_i32_0 = arith.constant 0 : i32
    %c0_i32_1 = arith.constant 0 : i32
    return %c0_i32, %c0_i32_0 : i32, i32
  }
  func.func @transform_3(%arg0: i32) -> (i32, i32) {
    %c0_i32 = arith.constant 0 : i32
    %c0_i32_0 = arith.constant 0 : i32
    %c0_i32_1 = arith.constant 0 : i32
    return %c0_i32, %c0_i32_0 : i32, i32
  }
  func.func @transform_4(%arg0: i32) -> (i32, i32) {
    %c0_i32 = arith.constant 0 : i32
    %c0_i32_0 = arith.constant 0 : i32
    %c0_i32_1 = arith.constant 0 : i32
    return %c0_i32, %c0_i32_0 : i32, i32
  }
  func.func @transform_5(%arg0: i32) -> (i32, i32) {
    %c0_i32 = arith.constant 0 : i32
    %c0_i32_0 = arith.constant 0 : i32
    %c0_i32_1 = arith.constant 0 : i32
    return %c0_i32, %c0_i32_0 : i32, i32
  }
  func.func @transform_6(%arg0: i32) -> (i32, i32) {
    %c0_i32 = arith.constant 0 : i32
    %c0_i32_0 = arith.constant 0 : i32
    %c0_i32_1 = arith.constant 0 : i32
    return %c0_i32, %c0_i32_0 : i32, i32
  }
  func.func @transform_7(%arg0: i32) -> (i32, i32) {
    %c0_i32 = arith.constant 0 : i32
    %c0_i32_0 = arith.constant 0 : i32
    %c0_i32_1 = arith.constant 0 : i32
    return %c0_i32, %c0_i32_0 : i32, i32
  }
  func.func @transform_8(%arg0: i32) -> (i32, i32) {
    %c0_i32 = arith.constant 0 : i32
    %c0_i32_0 = arith.constant 0 : i32
    %c0_i32_1 = arith.constant 0 : i32
    return %c0_i32, %c0_i32_0 : i32, i32
  }
  func.func @transform_9(%arg0: i32) -> (i32, i32) {
    %c0_i32 = arith.constant 0 : i32
    %c0_i32_0 = arith.constant 0 : i32
    %c0_i32_1 = arith.constant 0 : i32
    return %c0_i32, %c0_i32_0 : i32, i32
  }
  func.func @transform_10(%arg0: i32) -> (i32, i32) {
    %c0_i32 = arith.constant 0 : i32
    %c0_i32_0 = arith.constant 0 : i32
    %c0_i32_1 = arith.constant 0 : i32
    return %c0_i32, %c0_i32_0 : i32, i32
  }
  func.func @transform_11(%arg0: i32) -> (i32, i32) {
    %c0_i32 = arith.constant 0 : i32
    %c0_i32_0 = arith.constant 0 : i32
    %c0_i32_1 = arith.constant 0 : i32
    return %c0_i32, %c0_i32_0 : i32, i32
  }
  func.func @transform_12(%arg0: i32) -> (i32, i32) {
    %c0_i32 = arith.constant 0 : i32
    %c0_i32_0 = arith.constant 0 : i32
    %c0_i32_1 = arith.constant 0 : i32
    return %c0_i32, %c0_i32_0 : i32, i32
  }
  func.func @transform_13(%arg0: i32) -> (i32, i32) {
    %c0_i32 = arith.constant 0 : i32
    %c0_i32_0 = arith.constant 0 : i32
    %c0_i32_1 = arith.constant 0 : i32
    return %c0_i32, %c0_i32_0 : i32, i32
  }
  func.func @transform_14(%arg0: i32) -> (i32, i32) {
    %c0_i32 = arith.constant 0 : i32
    %c0_i32_0 = arith.constant 0 : i32
    %c0_i32_1 = arith.constant 0 : i32
    return %c0_i32, %c0_i32_0 : i32, i32
  }
  func.func @transform_15(%arg0: i32) -> (i32, i32) {
    %c0_i32 = arith.constant 0 : i32
    %c0_i32_0 = arith.constant 0 : i32
    %c0_i32_1 = arith.constant 0 : i32
    return %c0_i32, %c0_i32_0 : i32, i32
  }
  func.func @transform_16(%arg0: i32) -> (i32, i32) {
    %c0_i32 = arith.constant 0 : i32
    %c0_i32_0 = arith.constant 0 : i32
    %c0_i32_1 = arith.constant 0 : i32
    return %c0_i32, %c0_i32_0 : i32, i32
  }
  func.func @transform_17(%arg0: i32) -> (i32, i32) {
    %c0_i32 = arith.constant 0 : i32
    %c0_i32_0 = arith.constant 0 : i32
    return %arg0, %c0_i32 : i32, i32
  }
  func.func @transform_18(%arg0: i32) -> (i32, i32) {
    %c0_i32 = arith.constant 0 : i32
    %c0_i32_0 = arith.constant 0 : i32
    return %arg0, %c0_i32 : i32, i32
  }
}

</mosaic_0001>

<llo_original>
// kernel: vae_forward.1
$region0: #{vae_forward.1}
  #allocation0 [shape = 'u32[]', space=smem, size = 0x4, offset = 0x4, fixed_abs, tag = 'smem constant byte address 0x4 - core index']
  #allocation1 [shape = 'u32[144,128]{1,0:T(1,128)}', space=vmem, size = 0x12000, scoped, tag = 'internal scratch']
  %s0 = inlined_call_operand.vmem [shape: bf16[16,256], index: 0, kind: input, shape index: {}]
  %s1 = inlined_call_operand.vmem [shape: bf16[16,128], index: 1, kind: input, shape index: {}]
  %s2 = inlined_call_operand.hbm [shape: bf16[256,512], index: 2, kind: input, shape index: {}]
  %s3 = inlined_call_operand.hbm [shape: f32[1,512], index: 3, kind: input, shape index: {}]
  %s4 = inlined_call_operand.hbm [shape: bf16[512,256], index: 4, kind: input, shape index: {}]
  %s5 = inlined_call_operand.hbm [shape: f32[1,256], index: 5, kind: input, shape index: {}]
  %s6 = inlined_call_operand.hbm [shape: bf16[256,128], index: 6, kind: input, shape index: {}]
  %s7 = inlined_call_operand.hbm [shape: f32[1,128], index: 7, kind: input, shape index: {}]
  %s8 = inlined_call_operand.hbm [shape: bf16[128,128], index: 8, kind: input, shape index: {}]
  %s9 = inlined_call_operand.hbm [shape: bf16[128,256], index: 9, kind: input, shape index: {}]
  %s10 = inlined_call_operand.hbm [shape: f32[1,256], index: 10, kind: input, shape index: {}]
  %s11 = inlined_call_operand.hbm [shape: bf16[256,512], index: 11, kind: input, shape index: {}]
  %s12 = inlined_call_operand.hbm [shape: f32[1,512], index: 12, kind: input, shape index: {}]
  %s13 = inlined_call_operand.hbm [shape: bf16[512,2048], index: 13, kind: input, shape index: {}]
  %s14 = inlined_call_operand.hbm [shape: f32[1,2048], index: 14, kind: input, shape index: {}]
  %s15 = inlined_call_operand.hbm [shape: bf16[1,2048], index: 15, kind: input, shape index: {}]
  %s16 = inlined_call_operand.hbm [shape: f32[1,256], index: 16, kind: input, shape index: {}]
  %s17 = inlined_call_operand.vmem [shape: f32[16,256], index: 17, kind: output, shape index: {0}]
  %s18 = inlined_call_operand.vmem [shape: f32[16,128], index: 18, kind: output, shape index: {1}]
  %19 = xla_tuple %s17, %s18
  %s20 = sld [smem:[#allocation0]]
  $region146: #{vae_forward.1} parent=0
    _
  %s22 = ssub.s32 1, %s20
  %s23 = scalar_select 0, %s22, %s20
  $region1: #{vae_forward.1} parent=0
    #allocation2 [shape = 'u8[262144]{0}', space=vmem, size = 0x40000, scoped, tag = 'input window, operand 2, single buffered']
    #allocation3 [shape = 's32[1]{0}', space=sflag, size = 0x4, scoped, tag = 'scoped memory for vae_forward.1']
    #allocation4 [shape = 'u8[2048]{0}', space=vmem, size = 0x800, scoped, tag = 'input window, operand 3, single buffered']
    #allocation5 [shape = 's32[1]{0}', space=sflag, size = 0x4, scoped, tag = 'scoped memory for vae_forward.1']
    #allocation6 [shape = 'u8[262144]{0}', space=vmem, size = 0x40000, scoped, tag = 'input window, operand 4, single buffered']
    #allocation7 [shape = 'u8[1024]{0}', space=vmem, size = 0x400, scoped, tag = 'input window, operand 5, single buffered']
    #allocation8 [shape = 's32[1]{0}', space=sflag, size = 0x4, scoped, tag = 'scoped memory for vae_forward.1']
    #allocation9 [shape = 'u8[65536]{0}', space=vmem, size = 0x10000, scoped, tag = 'input window, operand 6, single buffered']
    #allocation10 [shape = 'u8[512]{0}', space=vmem, size = 0x400, scoped, tag = 'input window, operand 7, single buffered']
    #allocation11 [shape = 's32[1]{0}', space=sflag, size = 0x4, scoped, tag = 'scoped memory for vae_forward.1']
    #allocation12 [shape = 'u8[32768]{0}', space=vmem, size = 0x8000, scoped, tag = 'input window, operand 8, single buffered']
    #allocation13 [shape = 'u8[65536]{0}', space=vmem, size = 0x10000, scoped, tag = 'input window, operand 9, single buffered']
    #allocation14 [shape = 's32[1]{0}', space=sflag, size = 0x4, scoped, tag = 'scoped memory for vae_forward.1']
    #allocation15 [shape = 'u8[1024]{0}', space=vmem, size = 0x400, scoped, tag = 'input window, operand 10, single buffered']
    #allocation16 [shape = 'u8[262144]{0}', space=vmem, size = 0x40000, scoped, tag = 'input window, operand 11, single buffered']
    #allocation17 [shape = 's32[1]{0}', space=sflag, size = 0x4, scoped, tag = 'scoped memory for vae_forward.1']
    #allocation18 [shape = 'u8[2048]{0}', space=vmem, size = 0x800, scoped, tag = 'input window, operand 12, single buffered']
    #allocation19 [shape = 'u8[2097152]{0}', space=vmem, size = 0x200000, scoped, tag = 'input window, operand 13, single buffered']
    #allocation20 [shape = 's32[1]{0}', space=sflag, size = 0x4, scoped, tag = 'scoped memory for vae_forward.1']
    #allocation21 [shape = 'u8[8192]{0}', space=vmem, size = 0x2000, scoped, tag = 'input window, operand 14, single buffered']
    #allocation22 [shape = 'u8[8192]{0}', space=vmem, size = 0x2000, scoped, tag = 'input window, operand 15, single buffered']
    #allocation23 [shape = 's32[1]{0}', space=sflag, size = 0x4, scoped, tag = 'scoped memory for vae_forward.1']
    #allocation24 [shape = 'u8[1024]{0}', space=vmem, size = 0x400, scoped, tag = 'input window, operand 16, single buffered']
    %24 = vsyncpa [#allocation3], 0
    %25 = vsyncpa [#allocation5], 0
    %26 = vsyncpa [#allocation8], 0
    %27 = vsyncpa [#allocation11], 0
    %28 = vsyncpa [#allocation14], 0
    %29 = vsyncpa [#allocation17], 0
    %30 = vsyncpa [#allocation20], 0
    %31 = vsyncpa [#allocation23], 0
    // Predicated region
    $region2: #{vae_forward.1} parent=1 // pred_check
      _
    $region3: #{vae_forward.1} parent=1 // pred_check_branch
      %33 = sbr.rel (0) target = $region5
    $region4: #{vae_forward.1} parent=1 // pred_region
      _
    $region5: #{vae_forward.1} parent=1 // pred_fallthru
      _
    // Predicated region
    $region6: #{vae_forward.1} parent=1 // pred_check
      _
    $region7: #{vae_forward.1} parent=1 // pred_check_branch
      %35 = sbr.rel (0) target = $region9
    $region8: #{vae_forward.1} parent=1 // pred_region
      _
    $region9: #{vae_forward.1} parent=1 // pred_fallthru
      _
    // Predicated region
    $region10: #{vae_forward.1} parent=1 // pred_check
      _
    $region11: #{vae_forward.1} parent=1 // pred_check_branch
      %37 = sbr.rel (0) target = $region13
    $region12: #{vae_forward.1} parent=1 // pred_region
      %s39 = ssub.s32 8192, 8192
      %40 = vsyncadd [#allocation3], %s39
      %s41 = sshll.u32 [#allocation2], 4
      %s42 = int_to_ptr.vmem [resolvable:$true] %s41
      %47 = dma.hbm_to_vmem [thread:$0]  %s2, 8192, %s42, [#allocation3], 256, 256, 16
    $region13: #{vae_forward.1} parent=1 // pred_fallthru
      _
    // Predicated region
    $region14: #{vae_forward.1} parent=1 // pred_check
      _
    $region15: #{vae_forward.1} parent=1 // pred_check_branch
      %49 = sbr.rel (0) target = $region17
    $region16: #{vae_forward.1} parent=1 // pred_region
      %s51 = ssub.s32 64, 64
      %52 = vsyncadd [#allocation5], %s51
      %s54 = sshll.u32 [#allocation4], 4
      %s55 = int_to_ptr.vmem [resolvable:$true] %s54
      %57 = dma.hbm_to_vmem [thread:$0]  %s3, 64, %s55, [#allocation5]
    $region17: #{vae_forward.1} parent=1 // pred_fallthru
      _
    // Predicated region
    $region18: #{vae_forward.1} parent=1 // pred_check
      _
    $region19: #{vae_forward.1} parent=1 // pred_check_branch
      %59 = sbr.rel (0) target = $region21
    $region20: #{vae_forward.1} parent=1 // pred_region
      %s61 = ssub.s32 8192, 8192
      %62 = vsyncadd [#allocation5], %s61
      %s63 = sshll.u32 [#allocation6], 4
      %s64 = int_to_ptr.vmem [resolvable:$true] %s63
      %69 = dma.hbm_to_vmem [thread:$0]  %s4, 8192, %s64, [#allocation5], 128, 128, 8
    $region21: #{vae_forward.1} parent=1 // pred_fallthru
      _
    // Predicated region
    $region22: #{vae_forward.1} parent=1 // pred_check
      _
    $region23: #{vae_forward.1} parent=1 // pred_check_branch
      %71 = sbr.rel (0) target = $region25
    $region24: #{vae_forward.1} parent=1 // pred_region
      %s73 = ssub.s32 32, 32
      %74 = vsyncadd [#allocation8], %s73
      %s76 = sshll.u32 [#allocation7], 4
      %s77 = int_to_ptr.vmem [resolvable:$true] %s76
      %79 = dma.hbm_to_vmem [thread:$0]  %s5, 32, %s77, [#allocation8]
    $region25: #{vae_forward.1} parent=1 // pred_fallthru
      _
    // Predicated region
    $region26: #{vae_forward.1} parent=1 // pred_check
      _
    $region27: #{vae_forward.1} parent=1 // pred_check_branch
      %81 = sbr.rel (0) target = $region29
    $region28: #{vae_forward.1} parent=1 // pred_region
      %s83 = ssub.s32 2048, 2048
      %84 = vsyncadd [#allocation8], %s83
      %s85 = sshll.u32 [#allocation9], 4
      %s86 = int_to_ptr.vmem [resolvable:$true] %s85
      %91 = dma.hbm_to_vmem [thread:$0]  %s6, 2048, %s86, [#allocation8], 64, 64, 4
    $region29: #{vae_forward.1} parent=1 // pred_fallthru
      _
    // Predicated region
    $region30: #{vae_forward.1} parent=1 // pred_check
      _
    $region31: #{vae_forward.1} parent=1 // pred_check_branch
      %93 = sbr.rel (0) target = $region33
    $region32: #{vae_forward.1} parent=1 // pred_region
      %s95 = ssub.s32 16, 16
      %96 = vsyncadd [#allocation11], %s95
      %s98 = sshll.u32 [#allocation10], 4
      %s99 = int_to_ptr.vmem [resolvable:$true] %s98
      %101 = dma.hbm_to_vmem [thread:$0]  %s7, 16, %s99, [#allocation11]
    $region33: #{vae_forward.1} parent=1 // pred_fallthru
      _
    // Predicated region
    $region34: #{vae_forward.1} parent=1 // pred_check
      _
    $region35: #{vae_forward.1} parent=1 // pred_check_branch
      %103 = sbr.rel (0) target = $region37
    $region36: #{vae_forward.1} parent=1 // pred_region
      %s105 = ssub.s32 1024, 1024
      %106 = vsyncadd [#allocation11], %s105
      %s107 = sshll.u32 [#allocation12], 4
      %s108 = int_to_ptr.vmem [resolvable:$true] %s107
      %113 = dma.hbm_to_vmem [thread:$0]  %s8, 1024, %s108, [#allocation11], 64, 64, 4
    $region37: #{vae_forward.1} parent=1 // pred_fallthru
      _
    // Predicated region
    $region38: #{vae_forward.1} parent=1 // pred_check
      _
    $region39: #{vae_forward.1} parent=1 // pred_check_branch
      %115 = sbr.rel (0) target = $region41
    $region40: #{vae_forward.1} parent=1 // pred_region
      %s117 = ssub.s32 2048, 2048
      %118 = vsyncadd [#allocation14], %s117
      %s119 = sshll.u32 [#allocation13], 4
      %s120 = int_to_ptr.vmem [resolvable:$true] %s119
      %125 = dma.hbm_to_vmem [thread:$0]  %s9, 2048, %s120, [#allocation14], 128, 128, 8
    $region41: #{vae_forward.1} parent=1 // pred_fallthru
      _
    // Predicated region
    $region42: #{vae_forward.1} parent=1 // pred_check
      _
    $region43: #{vae_forward.1} parent=1 // pred_check_branch
      %127 = sbr.rel (0) target = $region45
    $region44: #{vae_forward.1} parent=1 // pred_region
      %s129 = ssub.s32 32, 32
      %130 = vsyncadd [#allocation14], %s129
      %s132 = sshll.u32 [#allocation15], 4
      %s133 = int_to_ptr.vmem [resolvable:$true] %s132
      %135 = dma.hbm_to_vmem [thread:$0]  %s10, 32, %s133, [#allocation14]
    $region45: #{vae_forward.1} parent=1 // pred_fallthru
      _
    // Predicated region
    $region46: #{vae_forward.1} parent=1 // pred_check
      _
    $region47: #{vae_forward.1} parent=1 // pred_check_branch
      %137 = sbr.rel (0) target = $region49
    $region48: #{vae_forward.1} parent=1 // pred_region
      %s139 = ssub.s32 8192, 8192
      %140 = vsyncadd [#allocation17], %s139
      %s141 = sshll.u32 [#allocation16], 4
      %s142 = int_to_ptr.vmem [resolvable:$true] %s141
      %147 = dma.hbm_to_vmem [thread:$0]  %s11, 8192, %s142, [#allocation17], 256, 256, 16
    $region49: #{vae_forward.1} parent=1 // pred_fallthru
      _
    // Predicated region
    $region50: #{vae_forward.1} parent=1 // pred_check
      _
    $region51: #{vae_forward.1} parent=1 // pred_check_branch
      %149 = sbr.rel (0) target = $region53
    $region52: #{vae_forward.1} parent=1 // pred_region
      %s151 = ssub.s32 64, 64
      %152 = vsyncadd [#allocation17], %s151
      %s154 = sshll.u32 [#allocation18], 4
      %s155 = int_to_ptr.vmem [resolvable:$true] %s154
      %157 = dma.hbm_to_vmem [thread:$0]  %s12, 64, %s155, [#allocation17]
    $region53: #{vae_forward.1} parent=1 // pred_fallthru
      _
    // Predicated region
    $region54: #{vae_forward.1} parent=1 // pred_check
      _
    $region55: #{vae_forward.1} parent=1 // pred_check_branch
      %159 = sbr.rel (0) target = $region57
    $region56: #{vae_forward.1} parent=1 // pred_region
      %s161 = ssub.s32 65536, 65536
      %162 = vsyncadd [#allocation20], %s161
      %s163 = sshll.u32 [#allocation19], 4
      %s164 = int_to_ptr.vmem [resolvable:$true] %s163
      %169 = dma.hbm_to_vmem [thread:$0]  %s13, 65536, %s164, [#allocation20], 1024, 1024, 64
    $region57: #{vae_forward.1} parent=1 // pred_fallthru
      _
    // Predicated region
    $region58: #{vae_forward.1} parent=1 // pred_check
      _
    $region59: #{vae_forward.1} parent=1 // pred_check_branch
      %171 = sbr.rel (0) target = $region61
    $region60: #{vae_forward.1} parent=1 // pred_region
      %s173 = ssub.s32 256, 256
      %174 = vsyncadd [#allocation20], %s173
      %s176 = sshll.u32 [#allocation21], 4
      %s177 = int_to_ptr.vmem [resolvable:$true] %s176
      %179 = dma.hbm_to_vmem [thread:$0]  %s14, 256, %s177, [#allocation20]
    $region61: #{vae_forward.1} parent=1 // pred_fallthru
      _
    // Predicated region
    $region62: #{vae_forward.1} parent=1 // pred_check
      _
    $region63: #{vae_forward.1} parent=1 // pred_check_branch
      %181 = sbr.rel (0) target = $region65
    $region64: #{vae_forward.1} parent=1 // pred_region
      %s183 = ssub.s32 256, 256
      %184 = vsyncadd [#allocation23], %s183
      %s186 = sshll.u32 [#allocation22], 4
      %s187 = int_to_ptr.vmem [resolvable:$true] %s186
      %189 = dma.hbm_to_vmem [thread:$0]  %s15, 256, %s187, [#allocation23]
    $region65: #{vae_forward.1} parent=1 // pred_fallthru
      _
    // Predicated region
    $region66: #{vae_forward.1} parent=1 // pred_check
      _
    $region67: #{vae_forward.1} parent=1 // pred_check_branch
      %191 = sbr.rel (0) target = $region69
    $region68: #{vae_forward.1} parent=1 // pred_region
      %s193 = ssub.s32 32, 32
      %194 = vsyncadd [#allocation23], %s193
      %s196 = sshll.u32 [#allocation24], 4
      %s197 = int_to_ptr.vmem [resolvable:$true] %s196
      %199 = dma.hbm_to_vmem [thread:$0]  %s16, 32, %s197, [#allocation23]
    $region69: #{vae_forward.1} parent=1 // pred_fallthru
      _
    // Predicated region
    $region70: #{vae_forward.1} parent=1 // pred_check
      _
    $region71: #{vae_forward.1} parent=1 // pred_check_branch
      %201 = sbr.rel (0) target = $region73
    $region72: #{vae_forward.1} parent=1 // pred_region
      %202 = dma.done [#allocation3], 8192
    $region73: #{vae_forward.1} parent=1 // pred_fallthru
      _
    // Predicated region
    $region74: #{vae_forward.1} parent=1 // pred_check
      _
    $region75: #{vae_forward.1} parent=1 // pred_check_branch
      %204 = sbr.rel (0) target = $region77
    $region76: #{vae_forward.1} parent=1 // pred_region
      %205 = dma.done [#allocation5], 64
    $region77: #{vae_forward.1} parent=1 // pred_fallthru
      _
    // Predicated region
    $region78: #{vae_forward.1} parent=1 // pred_check
      _
    $region79: #{vae_forward.1} parent=1 // pred_check_branch
      %207 = sbr.rel (0) target = $region81
    $region80: #{vae_forward.1} parent=1 // pred_region
      %208 = dma.done [#allocation5], 8192
    $region81: #{vae_forward.1} parent=1 // pred_fallthru
      _
    // Predicated region
    $region82: #{vae_forward.1} parent=1 // pred_check
      _
    $region83: #{vae_forward.1} parent=1 // pred_check_branch
      %210 = sbr.rel (0) target = $region85
    $region84: #{vae_forward.1} parent=1 // pred_region
      %211 = dma.done [#allocation8], 32
    $region85: #{vae_forward.1} parent=1 // pred_fallthru
      _
    // Predicated region
    $region86: #{vae_forward.1} parent=1 // pred_check
      _
    $region87: #{vae_forward.1} parent=1 // pred_check_branch
      %213 = sbr.rel (0) target = $region89
    $region88: #{vae_forward.1} parent=1 // pred_region
      %214 = dma.done [#allocation8], 2048
    $region89: #{vae_forward.1} parent=1 // pred_fallthru
      _
    // Predicated region
    $region90: #{vae_forward.1} parent=1 // pred_check
      _
    $region91: #{vae_forward.1} parent=1 // pred_check_branch
      %216 = sbr.rel (0) target = $region93
    $region92: #{vae_forward.1} parent=1 // pred_region
      %217 = dma.done [#allocation11], 16
    $region93: #{vae_forward.1} parent=1 // pred_fallthru
      _
    // Predicated region
    $region94: #{vae_forward.1} parent=1 // pred_check
      _
    $region95: #{vae_forward.1} parent=1 // pred_check_branch
      %219 = sbr.rel (0) target = $region97
    $region96: #{vae_forward.1} parent=1 // pred_region
      %220 = dma.done [#allocation11], 1024
    $region97: #{vae_forward.1} parent=1 // pred_fallthru
      _
    // Predicated region
    $region98: #{vae_forward.1} parent=1 // pred_check
      _
    $region99: #{vae_forward.1} parent=1 // pred_check_branch
      %222 = sbr.rel (0) target = $region101
    $region100: #{vae_forward.1} parent=1 // pred_region
      %223 = dma.done [#allocation14], 2048
    $region101: #{vae_forward.1} parent=1 // pred_fallthru
      _
    // Predicated region
    $region102: #{vae_forward.1} parent=1 // pred_check
      _
    $region103: #{vae_forward.1} parent=1 // pred_check_branch
      %225 = sbr.rel (0) target = $region105
    $region104: #{vae_forward.1} parent=1 // pred_region
      %226 = dma.done [#allocation14], 32
    $region105: #{vae_forward.1} parent=1 // pred_fallthru
      _
    // Predicated region
    $region106: #{vae_forward.1} parent=1 // pred_check
      _
    $region107: #{vae_forward.1} parent=1 // pred_check_branch
      %228 = sbr.rel (0) target = $region109
    $region108: #{vae_forward.1} parent=1 // pred_region
      %229 = dma.done [#allocation17], 8192
    $region109: #{vae_forward.1} parent=1 // pred_fallthru
      _
    // Predicated region
    $region110: #{vae_forward.1} parent=1 // pred_check
      _
    $region111: #{vae_forward.1} parent=1 // pred_check_branch
      %231 = sbr.rel (0) target = $region113
    $region112: #{vae_forward.1} parent=1 // pred_region
      %232 = dma.done [#allocation17], 64
    $region113: #{vae_forward.1} parent=1 // pred_fallthru
      _
    // Predicated region
    $region114: #{vae_forward.1} parent=1 // pred_check
      _
    $region115: #{vae_forward.1} parent=1 // pred_check_branch
      %234 = sbr.rel (0) target = $region117
    $region116: #{vae_forward.1} parent=1 // pred_region
      %235 = dma.done [#allocation20], 65536
    $region117: #{vae_forward.1} parent=1 // pred_fallthru
      _
    // Predicated region
    $region118: #{vae_forward.1} parent=1 // pred_check
      _
    $region119: #{vae_forward.1} parent=1 // pred_check_branch
      %237 = sbr.rel (0) target = $region121
    $region120: #{vae_forward.1} parent=1 // pred_region
      %238 = dma.done [#allocation20], 256
    $region121: #{vae_forward.1} parent=1 // pred_fallthru
      _
    // Predicated region
    $region122: #{vae_forward.1} parent=1 // pred_check
      _
    $region123: #{vae_forward.1} parent=1 // pred_check_branch
      %240 = sbr.rel (0) target = $region125
    $region124: #{vae_forward.1} parent=1 // pred_region
      %241 = dma.done [#allocation23], 256
    $region125: #{vae_forward.1} parent=1 // pred_fallthru
      _
    // Predicated region
    $region126: #{vae_forward.1} parent=1 // pred_check
      _
    $region127: #{vae_forward.1} parent=1 // pred_check_branch
      %243 = sbr.rel (0) target = $region129
    $region128: #{vae_forward.1} parent=1 // pred_region
      %244 = dma.done [#allocation23], 32
    $region129: #{vae_forward.1} parent=1 // pred_fallthru
      _
    %v246 = vld [vmem:[%s0] sm:$0xff]
    %v247 = vld [vmem:[%s0 + $0x8] sm:$0xff]
    %v248 = vld [vmem:[#allocation2] sm:$0xff]
    %v249 = vld [vmem:[#allocation2 + $0x8] sm:$0xff]
    %v250 = vld [vmem:[#allocation2 + $0x10] sm:$0xff]
    %v251 = vld [vmem:[#allocation2 + $0x18] sm:$0xff]
    %v252 = vld [vmem:[#allocation2 + $0x20] sm:$0xff]
    %v253 = vld [vmem:[#allocation2 + $0x28] sm:$0xff]
    %v254 = vld [vmem:[#allocation2 + $0x30] sm:$0xff]
    %v255 = vld [vmem:[#allocation2 + $0x38] sm:$0xff]
    %v256 = vld [vmem:[#allocation2 + $0x40] sm:$0xff]
    %v257 = vld [vmem:[#allocation2 + $0x48] sm:$0xff]
    %v258 = vld [vmem:[#allocation2 + $0x50] sm:$0xff]
    %v259 = vld [vmem:[#allocation2 + $0x58] sm:$0xff]
    %v260 = vld [vmem:[#allocation2 + $0x60] sm:$0xff]
    %v261 = vld [vmem:[#allocation2 + $0x68] sm:$0xff]
    %v262 = vld [vmem:[#allocation2 + $0x70] sm:$0xff]
    %v263 = vld [vmem:[#allocation2 + $0x78] sm:$0xff]
    %v264 = vld [vmem:[#allocation2 + $0x80] sm:$0xff]
    %v265 = vld [vmem:[#allocation2 + $0x88] sm:$0xff]
    %v266 = vld [vmem:[#allocation2 + $0x90] sm:$0xff]
    %v267 = vld [vmem:[#allocation2 + $0x98] sm:$0xff]
    %v268 = vld [vmem:[#allocation2 + $0xa0] sm:$0xff]
    %v269 = vld [vmem:[#allocation2 + $0xa8] sm:$0xff]
    %v270 = vld [vmem:[#allocation2 + $0xb0] sm:$0xff]
    %v271 = vld [vmem:[#allocation2 + $0xb8] sm:$0xff]
    %v272 = vld [vmem:[#allocation2 + $0xc0] sm:$0xff]
    %v273 = vld [vmem:[#allocation2 + $0xc8] sm:$0xff]
    %v274 = vld [vmem:[#allocation2 + $0xd0] sm:$0xff]
    %v275 = vld [vmem:[#allocation2 + $0xd8] sm:$0xff]
    %v276 = vld [vmem:[#allocation2 + $0xe0] sm:$0xff]
    %v277 = vld [vmem:[#allocation2 + $0xe8] sm:$0xff]
    %v278 = vld [vmem:[#allocation2 + $0xf0] sm:$0xff]
    %v279 = vld [vmem:[#allocation2 + $0xf8] sm:$0xff]
    %v280 = vld [vmem:[#allocation2 + $0x100] sm:$0xff]
    %v281 = vld [vmem:[#allocation2 + $0x108] sm:$0xff]
    %v282 = vld [vmem:[#allocation2 + $0x110] sm:$0xff]
    %v283 = vld [vmem:[#allocation2 + $0x118] sm:$0xff]
    %v284 = vld [vmem:[#allocation2 + $0x120] sm:$0xff]
    %v285 = vld [vmem:[#allocation2 + $0x128] sm:$0xff]
    %v286 = vld [vmem:[#allocation2 + $0x130] sm:$0xff]
    %v287 = vld [vmem:[#allocation2 + $0x138] sm:$0xff]
    %v288 = vld [vmem:[#allocation2 + $0x140] sm:$0xff]
    %v289 = vld [vmem:[#allocation2 + $0x148] sm:$0xff]
    %v290 = vld [vmem:[#allocation2 + $0x150] sm:$0xff]
    %v291 = vld [vmem:[#allocation2 + $0x158] sm:$0xff]
    %v292 = vld [vmem:[#allocation2 + $0x160] sm:$0xff]
    %v293 = vld [vmem:[#allocation2 + $0x168] sm:$0xff]
    %v294 = vld [vmem:[#allocation2 + $0x170] sm:$0xff]
    %v295 = vld [vmem:[#allocation2 + $0x178] sm:$0xff]
    %v296 = vld [vmem:[#allocation2 + $0x180] sm:$0xff]
    %v297 = vld [vmem:[#allocation2 + $0x188] sm:$0xff]
    %v298 = vld [vmem:[#allocation2 + $0x190] sm:$0xff]
    %v299 = vld [vmem:[#allocation2 + $0x198] sm:$0xff]
    %v300 = vld [vmem:[#allocation2 + $0x1a0] sm:$0xff]
    %v301 = vld [vmem:[#allocation2 + $0x1a8] sm:$0xff]
    %v302 = vld [vmem:[#allocation2 + $0x1b0] sm:$0xff]
    %v303 = vld [vmem:[#allocation2 + $0x1b8] sm:$0xff]
    %v304 = vld [vmem:[#allocation2 + $0x1c0] sm:$0xff]
    %v305 = vld [vmem:[#allocation2 + $0x1c8] sm:$0xff]
    %v306 = vld [vmem:[#allocation2 + $0x1d0] sm:$0xff]
    %v307 = vld [vmem:[#allocation2 + $0x1d8] sm:$0xff]
    %v308 = vld [vmem:[#allocation2 + $0x1e0] sm:$0xff]
    %v309 = vld [vmem:[#allocation2 + $0x1e8] sm:$0xff]
    %v310 = vld [vmem:[#allocation2 + $0x1f0] sm:$0xff]
    %v311 = vld [vmem:[#allocation2 + $0x1f8] sm:$0xff]
    %v312 = vld [vmem:[#allocation4] sm:$0xf]
    %v314 = vlaneseq
    %v315 = vshrl.u32 %v314, 7
    %v316 = vsub.s32 0, %v315
    %v317 = vrot.slane %v312, %v316
    %v318 = vlaneseq
    %v319 = vshrl.u32 %v318, 7
    %v320 = vsub.s32 1, %v319
    %v321 = vrot.slane %v312, %v320
    %v322 = vlaneseq
    %v323 = vshrl.u32 %v322, 7
    %v324 = vsub.s32 2, %v323
    %v325 = vrot.slane %v312, %v324
    %v326 = vlaneseq
    %v327 = vshrl.u32 %v326, 7
    %v328 = vsub.s32 3, %v327
    %v329 = vrot.slane %v312, %v328
    %v336 = vunpack.c.l.b16 %v246
    %v337 = vunpack.c.h.b16 %v246
    %v338 = vunpack.c.l.b16 %v247
    %v339 = vunpack.c.h.b16 %v247
    %v340 = vpack.c.b16 %v338, %v336
    %v341 = vpack.c.b16 %v339, %v337
    %v408 = vunpack.c.l.b16 %v248
    %v409 = vunpack.c.h.b16 %v248
    %v410 = vunpack.c.l.b16 %v249
    %v411 = vunpack.c.h.b16 %v249
    %v412 = vunpack.c.l.b16 %v250
    %v413 = vunpack.c.h.b16 %v250
    %v414 = vunpack.c.l.b16 %v251
    %v415 = vunpack.c.h.b16 %v251
    %v416 = vunpack.c.l.b16 %v252
    %v417 = vunpack.c.h.b16 %v252
    %v418 = vunpack.c.l.b16 %v253
    %v419 = vunpack.c.h.b16 %v253
    %v420 = vunpack.c.l.b16 %v254
    %v421 = vunpack.c.h.b16 %v254
    %v422 = vunpack.c.l.b16 %v255
    %v423 = vunpack.c.h.b16 %v255
    %v424 = vunpack.c.l.b16 %v256
    %v425 = vunpack.c.h.b16 %v256
    %v426 = vunpack.c.l.b16 %v257
    %v427 = vunpack.c.h.b16 %v257
    %v428 = vunpack.c.l.b16 %v258
    %v429 = vunpack.c.h.b16 %v258
    %v430 = vunpack.c.l.b16 %v259
    %v431 = vunpack.c.h.b16 %v259
    %v432 = vunpack.c.l.b16 %v260
    %v433 = vunpack.c.h.b16 %v260
    %v434 = vunpack.c.l.b16 %v261
    %v435 = vunpack.c.h.b16 %v261
    %v436 = vunpack.c.l.b16 %v262
    %v437 = vunpack.c.h.b16 %v262
    %v438 = vunpack.c.l.b16 %v263
    %v439 = vunpack.c.h.b16 %v263
    %v440 = vunpack.c.l.b16 %v264
    %v441 = vunpack.c.h.b16 %v264
    %v442 = vunpack.c.l.b16 %v265
    %v443 = vunpack.c.h.b16 %v265
    %v444 = vunpack.c.l.b16 %v266
    %v445 = vunpack.c.h.b16 %v266
    %v446 = vunpack.c.l.b16 %v267
    %v447 = vunpack.c.h.b16 %v267
    %v448 = vunpack.c.l.b16 %v268
    %v449 = vunpack.c.h.b16 %v268
    %v450 = vunpack.c.l.b16 %v269
    %v451 = vunpack.c.h.b16 %v269
    %v452 = vunpack.c.l.b16 %v270
    %v453 = vunpack.c.h.b16 %v270
    %v454 = vunpack.c.l.b16 %v271
    %v455 = vunpack.c.h.b16 %v271
    %v456 = vunpack.c.l.b16 %v272
    %v457 = vunpack.c.h.b16 %v272
    %v458 = vunpack.c.l.b16 %v273
    %v459 = vunpack.c.h.b16 %v273
    %v460 = vunpack.c.l.b16 %v274
    %v461 = vunpack.c.h.b16 %v274
    %v462 = vunpack.c.l.b16 %v275
    %v463 = vunpack.c.h.b16 %v275
    %v464 = vunpack.c.l.b16 %v276
    %v465 = vunpack.c.h.b16 %v276
    %v466 = vunpack.c.l.b16 %v277
    %v467 = vunpack.c.h.b16 %v277
    %v468 = vunpack.c.l.b16 %v278
    %v469 = vunpack.c.h.b16 %v278
    %v470 = vunpack.c.l.b16 %v279
    %v471 = vunpack.c.h.b16 %v279
    %v472 = vunpack.c.l.b16 %v280
    %v473 = vunpack.c.h.b16 %v280
    %v474 = vunpack.c.l.b16 %v281
    %v475 = vunpack.c.h.b16 %v281
    %v476 = vunpack.c.l.b16 %v282
    %v477 = vunpack.c.h.b16 %v282
    %v478 = vunpack.c.l.b16 %v283
    %v479 = vunpack.c.h.b16 %v283
    %v480 = vunpack.c.l.b16 %v284
    %v481 = vunpack.c.h.b16 %v284
    %v482 = vunpack.c.l.b16 %v285
    %v483 = vunpack.c.h.b16 %v285
    %v484 = vunpack.c.l.b16 %v286
    %v485 = vunpack.c.h.b16 %v286
    %v486 = vunpack.c.l.b16 %v287
    %v487 = vunpack.c.h.b16 %v287
    %v488 = vunpack.c.l.b16 %v288
    %v489 = vunpack.c.h.b16 %v288
    %v490 = vunpack.c.l.b16 %v289
    %v491 = vunpack.c.h.b16 %v289
    %v492 = vunpack.c.l.b16 %v290
    %v493 = vunpack.c.h.b16 %v290
    %v494 = vunpack.c.l.b16 %v291
    %v495 = vunpack.c.h.b16 %v291
    %v496 = vunpack.c.l.b16 %v292
    %v497 = vunpack.c.h.b16 %v292
    %v498 = vunpack.c.l.b16 %v293
    %v499 = vunpack.c.h.b16 %v293
    %v500 = vunpack.c.l.b16 %v294
    %v501 = vunpack.c.h.b16 %v294
    %v502 = vunpack.c.l.b16 %v295
    %v503 = vunpack.c.h.b16 %v295
    %v504 = vunpack.c.l.b16 %v296
    %v505 = vunpack.c.h.b16 %v296
    %v506 = vunpack.c.l.b16 %v297
    %v507 = vunpack.c.h.b16 %v297
    %v508 = vunpack.c.l.b16 %v298
    %v509 = vunpack.c.h.b16 %v298
    %v510 = vunpack.c.l.b16 %v299
    %v511 = vunpack.c.h.b16 %v299
    %v512 = vunpack.c.l.b16 %v300
    %v513 = vunpack.c.h.b16 %v300
    %v514 = vunpack.c.l.b16 %v301
    %v515 = vunpack.c.h.b16 %v301
    %v516 = vunpack.c.l.b16 %v302
    %v517 = vunpack.c.h.b16 %v302
    %v518 = vunpack.c.l.b16 %v303
    %v519 = vunpack.c.h.b16 %v303
    %v520 = vunpack.c.l.b16 %v304
    %v521 = vunpack.c.h.b16 %v304
    %v522 = vunpack.c.l.b16 %v305
    %v523 = vunpack.c.h.b16 %v305
    %v524 = vunpack.c.l.b16 %v306
    %v525 = vunpack.c.h.b16 %v306
    %v526 = vunpack.c.l.b16 %v307
    %v527 = vunpack.c.h.b16 %v307
    %v528 = vunpack.c.l.b16 %v308
    %v529 = vunpack.c.h.b16 %v308
    %v530 = vunpack.c.l.b16 %v309
    %v531 = vunpack.c.h.b16 %v309
    %v532 = vunpack.c.l.b16 %v310
    %v533 = vunpack.c.h.b16 %v310
    %v534 = vunpack.c.l.b16 %v311
    %v535 = vunpack.c.h.b16 %v311
    %v536 = vpack.c.b16 %v412, %v408
    %v537 = vpack.c.b16 %v413, %v409
    %v538 = vpack.c.b16 %v414, %v410
    %v539 = vpack.c.b16 %v415, %v411
    %v540 = vpack.c.b16 %v420, %v416
    %v541 = vpack.c.b16 %v421, %v417
    %v542 = vpack.c.b16 %v422, %v418
    %v543 = vpack.c.b16 %v423, %v419
    %v544 = vpack.c.b16 %v428, %v424
    %v545 = vpack.c.b16 %v429, %v425
    %v546 = vpack.c.b16 %v430, %v426
    %v547 = vpack.c.b16 %v431, %v427
    %v548 = vpack.c.b16 %v436, %v432
    %v549 = vpack.c.b16 %v437, %v433
    %v550 = vpack.c.b16 %v438, %v434
    %v551 = vpack.c.b16 %v439, %v435
    %v552 = vpack.c.b16 %v444, %v440
    %v553 = vpack.c.b16 %v445, %v441
    %v554 = vpack.c.b16 %v446, %v442
    %v555 = vpack.c.b16 %v447, %v443
    %v556 = vpack.c.b16 %v452, %v448
    %v557 = vpack.c.b16 %v453, %v449
    %v558 = vpack.c.b16 %v454, %v450
    %v559 = vpack.c.b16 %v455, %v451
    %v560 = vpack.c.b16 %v460, %v456
    %v561 = vpack.c.b16 %v461, %v457
    %v562 = vpack.c.b16 %v462, %v458
    %v563 = vpack.c.b16 %v463, %v459
    %v564 = vpack.c.b16 %v468, %v464
    %v565 = vpack.c.b16 %v469, %v465
    %v566 = vpack.c.b16 %v470, %v466
    %v567 = vpack.c.b16 %v471, %v467
    %v568 = vpack.c.b16 %v476, %v472
    %v569 = vpack.c.b16 %v477, %v473
    %v570 = vpack.c.b16 %v478, %v474
    %v571 = vpack.c.b16 %v479, %v475
    %v572 = vpack.c.b16 %v484, %v480
    %v573 = vpack.c.b16 %v485, %v481
    %v574 = vpack.c.b16 %v486, %v482
    %v575 = vpack.c.b16 %v487, %v483
    %v576 = vpack.c.b16 %v492, %v488
    %v577 = vpack.c.b16 %v493, %v489
    %v578 = vpack.c.b16 %v494, %v490
    %v579 = vpack.c.b16 %v495, %v491
    %v580 = vpack.c.b16 %v500, %v496
    %v581 = vpack.c.b16 %v501, %v497
    %v582 = vpack.c.b16 %v502, %v498
    %v583 = vpack.c.b16 %v503, %v499
    %v584 = vpack.c.b16 %v508, %v504
    %v585 = vpack.c.b16 %v509, %v505
    %v586 = vpack.c.b16 %v510, %v506
    %v587 = vpack.c.b16 %v511, %v507
    %v588 = vpack.c.b16 %v516, %v512
    %v589 = vpack.c.b16 %v517, %v513
    %v590 = vpack.c.b16 %v518, %v514
    %v591 = vpack.c.b16 %v519, %v515
    %v592 = vpack.c.b16 %v524, %v520
    %v593 = vpack.c.b16 %v525, %v521
    %v594 = vpack.c.b16 %v526, %v522
    %v595 = vpack.c.b16 %v527, %v523
    %v596 = vpack.c.b16 %v532, %v528
    %v597 = vpack.c.b16 %v533, %v529
    %v598 = vpack.c.b16 %v534, %v530
    %v599 = vpack.c.b16 %v535, %v531
    %664 = vmatprep.subr.bf16.mxu0 %v537
    %665 = vmatpush1.bf16.msra.mxu0 %v536
    %666 = vmatprep.subr.bf16.mxu0 %v541
    %667 = vmatpush1.bf16.msra.mxu0 %v540
    %668 = vmatprep.subr.bf16.mxu0 %v545
    %669 = vmatpush1.bf16.msra.mxu0 %v544
    %670 = vmatprep.subr.bf16.mxu0 %v549
    %671 = vmatpush1.bf16.msra.mxu0 %v548
    %672 = vmatprep.subr.bf16.mxu0 %v553
    %673 = vmatpush1.bf16.msra.mxu0 %v552
    %674 = vmatprep.subr.bf16.mxu0 %v557
    %675 = vmatpush1.bf16.msra.mxu0 %v556
    %676 = vmatprep.subr.bf16.mxu0 %v561
    %677 = vmatpush1.bf16.msra.mxu0 %v560
    %678 = vmatprep.subr.bf16.mxu0 %v565
    %679 = vmatpush1.bf16.msra.mxu0 %v564
    %680 = vmatprep.subr.bf16.mxu0 %v569
    %681 = vmatpush1.bf16.msra.mxu0 %v568
    %682 = vmatprep.subr.bf16.mxu0 %v573
    %683 = vmatpush1.bf16.msra.mxu0 %v572
    %684 = vmatprep.subr.bf16.mxu0 %v577
    %685 = vmatpush1.bf16.msra.mxu0 %v576
    %686 = vmatprep.subr.bf16.mxu0 %v581
    %687 = vmatpush1.bf16.msra.mxu0 %v580
    %688 = vmatprep.subr.bf16.mxu0 %v585
    %689 = vmatpush1.bf16.msra.mxu0 %v584
    %690 = vmatprep.subr.bf16.mxu0 %v589
    %691 = vmatpush1.bf16.msra.mxu0 %v588
    %692 = vmatprep.subr.bf16.mxu0 %v593
    %693 = vmatpush1.bf16.msra.mxu0 %v592
    %694 = vmatprep.subr.bf16.mxu0 %v597
    %695 = vmatpush1.bf16.msra.mxu0 %v596
    %696 = vmatprep.mubr.bf16.mxu0 %v341
    %697 = vmatmul.mubr.bf16.gmra.mrb[0].mxu0 %v340
    %v698 = vpop.f32.mrb[0].mxu0
    %v699 = vadd.f32 %v317, %v698
    %v700 = vpop.f32.mrb[0].mxu0
    %v701 = vadd.f32 %v321, %v700
    %v702 = vpop.f32.mrb[0].mxu0
    %v703 = vadd.f32 %v317, %v702
    %v704 = vpop.f32.mrb[0].mxu0
    %v705 = vadd.f32 %v321, %v704
    %706 = vdwg.mxu0
    %707 = vmatprep.subr.bf16.mxu0 %v539
    %708 = vmatpush1.bf16.msra.mxu0 %v538
    %709 = vmatprep.subr.bf16.mxu0 %v543
    %710 = vmatpush1.bf16.msra.mxu0 %v542
    %711 = vmatprep.subr.bf16.mxu0 %v547
    %712 = vmatpush1.bf16.msra.mxu0 %v546
    %713 = vmatprep.subr.bf16.mxu0 %v551
    %714 = vmatpush1.bf16.msra.mxu0 %v550
    %715 = vmatprep.subr.bf16.mxu0 %v555
    %716 = vmatpush1.bf16.msra.mxu0 %v554
    %717 = vmatprep.subr.bf16.mxu0 %v559
    %718 = vmatpush1.bf16.msra.mxu0 %v558
    %719 = vmatprep.subr.bf16.mxu0 %v563
    %720 = vmatpush1.bf16.msra.mxu0 %v562
    %721 = vmatprep.subr.bf16.mxu0 %v567
    %722 = vmatpush1.bf16.msra.mxu0 %v566
    %723 = vmatprep.subr.bf16.mxu0 %v571
    %724 = vmatpush1.bf16.msra.mxu0 %v570
    %725 = vmatprep.subr.bf16.mxu0 %v575
    %726 = vmatpush1.bf16.msra.mxu0 %v574
    %727 = vmatprep.subr.bf16.mxu0 %v579
    %728 = vmatpush1.bf16.msra.mxu0 %v578
    %729 = vmatprep.subr.bf16.mxu0 %v583
    %730 = vmatpush1.bf16.msra.mxu0 %v582
    %731 = vmatprep.subr.bf16.mxu0 %v587
    %732 = vmatpush1.bf16.msra.mxu0 %v586
    %733 = vmatprep.subr.bf16.mxu0 %v591
    %734 = vmatpush1.bf16.msra.mxu0 %v590
    %735 = vmatprep.subr.bf16.mxu0 %v595
    %736 = vmatpush1.bf16.msra.mxu0 %v594
    %737 = vmatprep.subr.bf16.mxu0 %v599
    %738 = vmatpush1.bf16.msra.mxu0 %v598
    %739 = vmatprep.mubr.bf16.mxu0 %v341
    %740 = vmatmul.mubr.bf16.gmra.mrb[0].mxu0 %v340
    %v741 = vpop.f32.mrb[0].mxu0
    %v742 = vadd.f32 %v325, %v741
    %v743 = vpop.f32.mrb[0].mxu0
    %v744 = vadd.f32 %v329, %v743
    %v745 = vpop.f32.mrb[0].mxu0
    %v746 = vadd.f32 %v325, %v745
    %v747 = vpop.f32.mrb[0].mxu0
    %v748 = vadd.f32 %v329, %v747
    %749 = vdwg.mxu0
    %vm750 = vcmp.ge.f32.partialorder %v699, 0.0
    %vm751 = vcmp.ge.f32.partialorder %v701, 0.0
    %vm752 = vcmp.ge.f32.partialorder %v742, 0.0
    %vm753 = vcmp.ge.f32.partialorder %v744, 0.0
    %vm754 = vcmp.ge.f32.partialorder %v703, 0.0
    %vm755 = vcmp.ge.f32.partialorder %v705, 0.0
    %vm756 = vcmp.ge.f32.partialorder %v746, 0.0
    %vm757 = vcmp.ge.f32.partialorder %v748, 0.0
    %v758 = vmul.f32 %v699, 0.01
    %v759 = vmul.f32 %v701, 0.01
    %v760 = vmul.f32 %v742, 0.01
    %v761 = vmul.f32 %v744, 0.01
    %v762 = vmul.f32 %v703, 0.01
    %v763 = vmul.f32 %v705, 0.01
    %v764 = vmul.f32 %v746, 0.01
    %v765 = vmul.f32 %v748, 0.01
    %v766 = vsel %vm750, %v699, %v758
    %v767 = vsel %vm751, %v701, %v759
    %v768 = vsel %vm752, %v742, %v760
    %v769 = vsel %vm753, %v744, %v761
    %v770 = vsel %vm754, %v703, %v762
    %v771 = vsel %vm755, %v705, %v763
    %v772 = vsel %vm756, %v746, %v764
    %v773 = vsel %vm757, %v748, %v765
    %v774 = vpack.c.bf16 %v770, %v766
    %v775 = vpack.c.bf16 %v771, %v767
    %v776 = vpack.c.bf16 %v772, %v768
    %v777 = vpack.c.bf16 %v773, %v769
    %v778 = vld [vmem:[#allocation6] sm:$0xff]
    %v779 = vld [vmem:[#allocation6 + $0x8] sm:$0xff]
    %v780 = vld [vmem:[#allocation6 + $0x10] sm:$0xff]
    %v781 = vld [vmem:[#allocation6 + $0x18] sm:$0xff]
    %v782 = vld [vmem:[#allocation6 + $0x20] sm:$0xff]
    %v783 = vld [vmem:[#allocation6 + $0x28] sm:$0xff]
    %v784 = vld [vmem:[#allocation6 + $0x30] sm:$0xff]
    %v785 = vld [vmem:[#allocation6 + $0x38] sm:$0xff]
    %v786 = vld [vmem:[#allocation6 + $0x40] sm:$0xff]
    %v787 = vld [vmem:[#allocation6 + $0x48] sm:$0xff]
    %v788 = vld [vmem:[#allocation6 + $0x50] sm:$0xff]
    %v789 = vld [vmem:[#allocation6 + $0x58] sm:$0xff]
    %v790 = vld [vmem:[#allocation6 + $0x60] sm:$0xff]
    %v791 = vld [vmem:[#allocation6 + $0x68] sm:$0xff]
    %v792 = vld [vmem:[#allocation6 + $0x70] sm:$0xff]
    %v793 = vld [vmem:[#allocation6 + $0x78] sm:$0xff]
    %v794 = vld [vmem:[#allocation6 + $0x80] sm:$0xff]
    %v795 = vld [vmem:[#allocation6 + $0x88] sm:$0xff]
    %v796 = vld [vmem:[#allocation6 + $0x90] sm:$0xff]
    %v797 = vld [vmem:[#allocation6 + $0x98] sm:$0xff]
    %v798 = vld [vmem:[#allocation6 + $0xa0] sm:$0xff]
    %v799 = vld [vmem:[#allocation6 + $0xa8] sm:$0xff]
    %v800 = vld [vmem:[#allocation6 + $0xb0] sm:$0xff]
    %v801 = vld [vmem:[#allocation6 + $0xb8] sm:$0xff]
    %v802 = vld [vmem:[#allocation6 + $0xc0] sm:$0xff]
    %v803 = vld [vmem:[#allocation6 + $0xc8] sm:$0xff]
    %v804 = vld [vmem:[#allocation6 + $0xd0] sm:$0xff]
    %v805 = vld [vmem:[#allocation6 + $0xd8] sm:$0xff]
    %v806 = vld [vmem:[#allocation6 + $0xe0] sm:$0xff]
    %v807 = vld [vmem:[#allocation6 + $0xe8] sm:$0xff]
    %v808 = vld [vmem:[#allocation6 + $0xf0] sm:$0xff]
    %v809 = vld [vmem:[#allocation6 + $0xf8] sm:$0xff]
    %v810 = vld [vmem:[#allocation6 + $0x100] sm:$0xff]
    %v811 = vld [vmem:[#allocation6 + $0x108] sm:$0xff]
    %v812 = vld [vmem:[#allocation6 + $0x110] sm:$0xff]
    %v813 = vld [vmem:[#allocation6 + $0x118] sm:$0xff]
    %v814 = vld [vmem:[#allocation6 + $0x120] sm:$0xff]
    %v815 = vld [vmem:[#allocation6 + $0x128] sm:$0xff]
    %v816 = vld [vmem:[#allocation6 + $0x130] sm:$0xff]
    %v817 = vld [vmem:[#allocation6 + $0x138] sm:$0xff]
    %v818 = vld [vmem:[#allocation6 + $0x140] sm:$0xff]
    %v819 = vld [vmem:[#allocation6 + $0x148] sm:$0xff]
    %v820 = vld [vmem:[#allocation6 + $0x150] sm:$0xff]
    %v821 = vld [vmem:[#allocation6 + $0x158] sm:$0xff]
    %v822 = vld [vmem:[#allocation6 + $0x160] sm:$0xff]
    %v823 = vld [vmem:[#allocation6 + $0x168] sm:$0xff]
    %v824 = vld [vmem:[#allocation6 + $0x170] sm:$0xff]
    %v825 = vld [vmem:[#allocation6 + $0x178] sm:$0xff]
    %v826 = vld [vmem:[#allocation6 + $0x180] sm:$0xff]
    %v827 = vld [vmem:[#allocation6 + $0x188] sm:$0xff]
    %v828 = vld [vmem:[#allocation6 + $0x190] sm:$0xff]
    %v829 = vld [vmem:[#allocation6 + $0x198] sm:$0xff]
    %v830 = vld [vmem:[#allocation6 + $0x1a0] sm:$0xff]
    %v831 = vld [vmem:[#allocation6 + $0x1a8] sm:$0xff]
    %v832 = vld [vmem:[#allocation6 + $0x1b0] sm:$0xff]
    %v833 = vld [vmem:[#allocation6 + $0x1b8] sm:$0xff]
    %v834 = vld [vmem:[#allocation6 + $0x1c0] sm:$0xff]
    %v835 = vld [vmem:[#allocation6 + $0x1c8] sm:$0xff]
    %v836 = vld [vmem:[#allocation6 + $0x1d0] sm:$0xff]
    %v837 = vld [vmem:[#allocation6 + $0x1d8] sm:$0xff]
    %v838 = vld [vmem:[#allocation6 + $0x1e0] sm:$0xff]
    %v839 = vld [vmem:[#allocation6 + $0x1e8] sm:$0xff]
    %v840 = vld [vmem:[#allocation6 + $0x1f0] sm:$0xff]
    %v841 = vld [vmem:[#allocation6 + $0x1f8] sm:$0xff]
    %v842 = vld [vmem:[#allocation7] sm:$0x3]
    %v844 = vlaneseq
    %v845 = vshrl.u32 %v844, 7
    %v846 = vsub.s32 0, %v845
    %v847 = vrot.slane %v842, %v846
    %v848 = vlaneseq
    %v849 = vshrl.u32 %v848, 7
    %v850 = vsub.s32 1, %v849
    %v851 = vrot.slane %v842, %v850
    %v918 = vunpack.c.l.b16 %v778
    %v919 = vunpack.c.h.b16 %v778
    %v920 = vunpack.c.l.b16 %v779
    %v921 = vunpack.c.h.b16 %v779
    %v922 = vunpack.c.l.b16 %v780
    %v923 = vunpack.c.h.b16 %v780
    %v924 = vunpack.c.l.b16 %v781
    %v925 = vunpack.c.h.b16 %v781
    %v926 = vunpack.c.l.b16 %v782
    %v927 = vunpack.c.h.b16 %v782
    %v928 = vunpack.c.l.b16 %v783
    %v929 = vunpack.c.h.b16 %v783
    %v930 = vunpack.c.l.b16 %v784
    %v931 = vunpack.c.h.b16 %v784
    %v932 = vunpack.c.l.b16 %v785
    %v933 = vunpack.c.h.b16 %v785
    %v934 = vunpack.c.l.b16 %v786
    %v935 = vunpack.c.h.b16 %v786
    %v936 = vunpack.c.l.b16 %v787
    %v937 = vunpack.c.h.b16 %v787
    %v938 = vunpack.c.l.b16 %v788
    %v939 = vunpack.c.h.b16 %v788
    %v940 = vunpack.c.l.b16 %v789
    %v941 = vunpack.c.h.b16 %v789
    %v942 = vunpack.c.l.b16 %v790
    %v943 = vunpack.c.h.b16 %v790
    %v944 = vunpack.c.l.b16 %v791
    %v945 = vunpack.c.h.b16 %v791
    %v946 = vunpack.c.l.b16 %v792
    %v947 = vunpack.c.h.b16 %v792
    %v948 = vunpack.c.l.b16 %v793
    %v949 = vunpack.c.h.b16 %v793
    %v950 = vunpack.c.l.b16 %v794
    %v951 = vunpack.c.h.b16 %v794
    %v952 = vunpack.c.l.b16 %v795
    %v953 = vunpack.c.h.b16 %v795
    %v954 = vunpack.c.l.b16 %v796
    %v955 = vunpack.c.h.b16 %v796
    %v956 = vunpack.c.l.b16 %v797
    %v957 = vunpack.c.h.b16 %v797
    %v958 = vunpack.c.l.b16 %v798
    %v959 = vunpack.c.h.b16 %v798
    %v960 = vunpack.c.l.b16 %v799
    %v961 = vunpack.c.h.b16 %v799
    %v962 = vunpack.c.l.b16 %v800
    %v963 = vunpack.c.h.b16 %v800
    %v964 = vunpack.c.l.b16 %v801
    %v965 = vunpack.c.h.b16 %v801
    %v966 = vunpack.c.l.b16 %v802
    %v967 = vunpack.c.h.b16 %v802
    %v968 = vunpack.c.l.b16 %v803
    %v969 = vunpack.c.h.b16 %v803
    %v970 = vunpack.c.l.b16 %v804
    %v971 = vunpack.c.h.b16 %v804
    %v972 = vunpack.c.l.b16 %v805
    %v973 = vunpack.c.h.b16 %v805
    %v974 = vunpack.c.l.b16 %v806
    %v975 = vunpack.c.h.b16 %v806
    %v976 = vunpack.c.l.b16 %v807
    %v977 = vunpack.c.h.b16 %v807
    %v978 = vunpack.c.l.b16 %v808
    %v979 = vunpack.c.h.b16 %v808
    %v980 = vunpack.c.l.b16 %v809
    %v981 = vunpack.c.h.b16 %v809
    %v982 = vunpack.c.l.b16 %v810
    %v983 = vunpack.c.h.b16 %v810
    %v984 = vunpack.c.l.b16 %v811
    %v985 = vunpack.c.h.b16 %v811
    %v986 = vunpack.c.l.b16 %v812
    %v987 = vunpack.c.h.b16 %v812
    %v988 = vunpack.c.l.b16 %v813
    %v989 = vunpack.c.h.b16 %v813
    %v990 = vunpack.c.l.b16 %v814
    %v991 = vunpack.c.h.b16 %v814
    %v992 = vunpack.c.l.b16 %v815
    %v993 = vunpack.c.h.b16 %v815
    %v994 = vunpack.c.l.b16 %v816
    %v995 = vunpack.c.h.b16 %v816
    %v996 = vunpack.c.l.b16 %v817
    %v997 = vunpack.c.h.b16 %v817
    %v998 = vunpack.c.l.b16 %v818
    %v999 = vunpack.c.h.b16 %v818
    %v1000 = vunpack.c.l.b16 %v819
    %v1001 = vunpack.c.h.b16 %v819
    %v1002 = vunpack.c.l.b16 %v820
    %v1003 = vunpack.c.h.b16 %v820
    %v1004 = vunpack.c.l.b16 %v821
    %v1005 = vunpack.c.h.b16 %v821
    %v1006 = vunpack.c.l.b16 %v822
    %v1007 = vunpack.c.h.b16 %v822
    %v1008 = vunpack.c.l.b16 %v823
    %v1009 = vunpack.c.h.b16 %v823
    %v1010 = vunpack.c.l.b16 %v824
    %v1011 = vunpack.c.h.b16 %v824
    %v1012 = vunpack.c.l.b16 %v825
    %v1013 = vunpack.c.h.b16 %v825
    %v1014 = vunpack.c.l.b16 %v826
    %v1015 = vunpack.c.h.b16 %v826
    %v1016 = vunpack.c.l.b16 %v827
    %v1017 = vunpack.c.h.b16 %v827
    %v1018 = vunpack.c.l.b16 %v828
    %v1019 = vunpack.c.h.b16 %v828
    %v1020 = vunpack.c.l.b16 %v829
    %v1021 = vunpack.c.h.b16 %v829
    %v1022 = vunpack.c.l.b16 %v830
    %v1023 = vunpack.c.h.b16 %v830
    %v1024 = vunpack.c.l.b16 %v831
    %v1025 = vunpack.c.h.b16 %v831
    %v1026 = vunpack.c.l.b16 %v832
    %v1027 = vunpack.c.h.b16 %v832
    %v1028 = vunpack.c.l.b16 %v833
    %v1029 = vunpack.c.h.b16 %v833
    %v1030 = vunpack.c.l.b16 %v834
    %v1031 = vunpack.c.h.b16 %v834
    %v1032 = vunpack.c.l.b16 %v835
    %v1033 = vunpack.c.h.b16 %v835
    %v1034 = vunpack.c.l.b16 %v836
    %v1035 = vunpack.c.h.b16 %v836
    %v1036 = vunpack.c.l.b16 %v837
    %v1037 = vunpack.c.h.b16 %v837
    %v1038 = vunpack.c.l.b16 %v838
    %v1039 = vunpack.c.h.b16 %v838
    %v1040 = vunpack.c.l.b16 %v839
    %v1041 = vunpack.c.h.b16 %v839
    %v1042 = vunpack.c.l.b16 %v840
    %v1043 = vunpack.c.h.b16 %v840
    %v1044 = vunpack.c.l.b16 %v841
    %v1045 = vunpack.c.h.b16 %v841
    %v1046 = vpack.c.b16 %v920, %v918
    %v1047 = vpack.c.b16 %v921, %v919
    %v1048 = vpack.c.b16 %v924, %v922
    %v1049 = vpack.c.b16 %v925, %v923
    %v1050 = vpack.c.b16 %v928, %v926
    %v1051 = vpack.c.b16 %v929, %v927
    %v1052 = vpack.c.b16 %v932, %v930
    %v1053 = vpack.c.b16 %v933, %v931
    %v1054 = vpack.c.b16 %v936, %v934
    %v1055 = vpack.c.b16 %v937, %v935
    %v1056 = vpack.c.b16 %v940, %v938
    %v1057 = vpack.c.b16 %v941, %v939
    %v1058 = vpack.c.b16 %v944, %v942
    %v1059 = vpack.c.b16 %v945, %v943
    %v1060 = vpack.c.b16 %v948, %v946
    %v1061 = vpack.c.b16 %v949, %v947
    %v1062 = vpack.c.b16 %v952, %v950
    %v1063 = vpack.c.b16 %v953, %v951
    %v1064 = vpack.c.b16 %v956, %v954
    %v1065 = vpack.c.b16 %v957, %v955
    %v1066 = vpack.c.b16 %v960, %v958
    %v1067 = vpack.c.b16 %v961, %v959
    %v1068 = vpack.c.b16 %v964, %v962
    %v1069 = vpack.c.b16 %v965, %v963
    %v1070 = vpack.c.b16 %v968, %v966
    %v1071 = vpack.c.b16 %v969, %v967
    %v1072 = vpack.c.b16 %v972, %v970
    %v1073 = vpack.c.b16 %v973, %v971
    %v1074 = vpack.c.b16 %v976, %v974
    %v1075 = vpack.c.b16 %v977, %v975
    %v1076 = vpack.c.b16 %v980, %v978
    %v1077 = vpack.c.b16 %v981, %v979
    %v1078 = vpack.c.b16 %v984, %v982
    %v1079 = vpack.c.b16 %v985, %v983
    %v1080 = vpack.c.b16 %v988, %v986
    %v1081 = vpack.c.b16 %v989, %v987
    %v1082 = vpack.c.b16 %v992, %v990
    %v1083 = vpack.c.b16 %v993, %v991
    %v1084 = vpack.c.b16 %v996, %v994
    %v1085 = vpack.c.b16 %v997, %v995
    %v1086 = vpack.c.b16 %v1000, %v998
    %v1087 = vpack.c.b16 %v1001, %v999
    %v1088 = vpack.c.b16 %v1004, %v1002
    %v1089 = vpack.c.b16 %v1005, %v1003
    %v1090 = vpack.c.b16 %v1008, %v1006
    %v1091 = vpack.c.b16 %v1009, %v1007
    %v1092 = vpack.c.b16 %v1012, %v1010
    %v1093 = vpack.c.b16 %v1013, %v1011
    %v1094 = vpack.c.b16 %v1016, %v1014
    %v1095 = vpack.c.b16 %v1017, %v1015
    %v1096 = vpack.c.b16 %v1020, %v1018
    %v1097 = vpack.c.b16 %v1021, %v1019
    %v1098 = vpack.c.b16 %v1024, %v1022
    %v1099 = vpack.c.b16 %v1025, %v1023
    %v1100 = vpack.c.b16 %v1028, %v1026
    %v1101 = vpack.c.b16 %v1029, %v1027
    %v1102 = vpack.c.b16 %v1032, %v1030
    %v1103 = vpack.c.b16 %v1033, %v1031
    %v1104 = vpack.c.b16 %v1036, %v1034
    %v1105 = vpack.c.b16 %v1037, %v1035
    %v1106 = vpack.c.b16 %v1040, %v1038
    %v1107 = vpack.c.b16 %v1041, %v1039
    %v1108 = vpack.c.b16 %v1044, %v1042
    %v1109 = vpack.c.b16 %v1045, %v1043
    %1174 = vmatprep.subr.bf16.mxu0 %v1047
    %1175 = vmatpush1.bf16.msra.mxu0 %v1046
    %1176 = vmatprep.subr.bf16.mxu0 %v1049
    %1177 = vmatpush1.bf16.msra.mxu0 %v1048
    %1178 = vmatprep.subr.bf16.mxu0 %v1051
    %1179 = vmatpush1.bf16.msra.mxu0 %v1050
    %1180 = vmatprep.subr.bf16.mxu0 %v1053
    %1181 = vmatpush1.bf16.msra.mxu0 %v1052
    %1182 = vmatprep.subr.bf16.mxu0 %v1055
    %1183 = vmatpush1.bf16.msra.mxu0 %v1054
    %1184 = vmatprep.subr.bf16.mxu0 %v1057
    %1185 = vmatpush1.bf16.msra.mxu0 %v1056
    %1186 = vmatprep.subr.bf16.mxu0 %v1059
    %1187 = vmatpush1.bf16.msra.mxu0 %v1058
    %1188 = vmatprep.subr.bf16.mxu0 %v1061
    %1189 = vmatpush1.bf16.msra.mxu0 %v1060
    %1190 = vmatprep.subr.bf16.mxu0 %v1063
    %1191 = vmatpush1.bf16.msra.mxu0 %v1062
    %1192 = vmatprep.subr.bf16.mxu0 %v1065
    %1193 = vmatpush1.bf16.msra.mxu0 %v1064
    %1194 = vmatprep.subr.bf16.mxu0 %v1067
    %1195 = vmatpush1.bf16.msra.mxu0 %v1066
    %1196 = vmatprep.subr.bf16.mxu0 %v1069
    %1197 = vmatpush1.bf16.msra.mxu0 %v1068
    %1198 = vmatprep.subr.bf16.mxu0 %v1071
    %1199 = vmatpush1.bf16.msra.mxu0 %v1070
    %1200 = vmatprep.subr.bf16.mxu0 %v1073
    %1201 = vmatpush1.bf16.msra.mxu0 %v1072
    %1202 = vmatprep.subr.bf16.mxu0 %v1075
    %1203 = vmatpush1.bf16.msra.mxu0 %v1074
    %1204 = vmatprep.subr.bf16.mxu0 %v1077
    %1205 = vmatpush1.bf16.msra.mxu0 %v1076
    %1206 = vmatprep.mubr.bf16.mxu0 %v775
    %1207 = vmatmul.mubr.bf16.gmra.mrb[0].mxu0 %v774
    %v1208 = vpop.f32.mrb[0].mxu0
    %v1209 = vadd.f32 %v847, %v1208
    %v1210 = vpop.f32.mrb[0].mxu0
    %v1211 = vadd.f32 %v851, %v1210
    %v1212 = vpop.f32.mrb[0].mxu0
    %v1213 = vadd.f32 %v847, %v1212
    %v1214 = vpop.f32.mrb[0].mxu0
    %v1215 = vadd.f32 %v851, %v1214
    %1216 = vdwg.mxu0
    %1217 = vmatprep.subr.bf16.mxu0 %v1079
    %1218 = vmatpush1.bf16.msra.mxu0 %v1078
    %1219 = vmatprep.subr.bf16.mxu0 %v1081
    %1220 = vmatpush1.bf16.msra.mxu0 %v1080
    %1221 = vmatprep.subr.bf16.mxu0 %v1083
    %1222 = vmatpush1.bf16.msra.mxu0 %v1082
    %1223 = vmatprep.subr.bf16.mxu0 %v1085
    %1224 = vmatpush1.bf16.msra.mxu0 %v1084
    %1225 = vmatprep.subr.bf16.mxu0 %v1087
    %1226 = vmatpush1.bf16.msra.mxu0 %v1086
    %1227 = vmatprep.subr.bf16.mxu0 %v1089
    %1228 = vmatpush1.bf16.msra.mxu0 %v1088
    %1229 = vmatprep.subr.bf16.mxu0 %v1091
    %1230 = vmatpush1.bf16.msra.mxu0 %v1090
    %1231 = vmatprep.subr.bf16.mxu0 %v1093
    %1232 = vmatpush1.bf16.msra.mxu0 %v1092
    %1233 = vmatprep.subr.bf16.mxu0 %v1095
    %1234 = vmatpush1.bf16.msra.mxu0 %v1094
    %1235 = vmatprep.subr.bf16.mxu0 %v1097
    %1236 = vmatpush1.bf16.msra.mxu0 %v1096
    %1237 = vmatprep.subr.bf16.mxu0 %v1099
    %1238 = vmatpush1.bf16.msra.mxu0 %v1098
    %1239 = vmatprep.subr.bf16.mxu0 %v1101
    %1240 = vmatpush1.bf16.msra.mxu0 %v1100
    %1241 = vmatprep.subr.bf16.mxu0 %v1103
    %1242 = vmatpush1.bf16.msra.mxu0 %v1102
    %1243 = vmatprep.subr.bf16.mxu0 %v1105
    %1244 = vmatpush1.bf16.msra.mxu0 %v1104
    %1245 = vmatprep.subr.bf16.mxu0 %v1107
    %1246 = vmatpush1.bf16.msra.mxu0 %v1106
    %1247 = vmatprep.subr.bf16.mxu0 %v1109
    %1248 = vmatpush1.bf16.msra.mxu0 %v1108
    %1249 = vmatprep.mubr.bf16.mxu0 %v777
    %1250 = vmatmul.mubr.bf16.gmra.mrb[0].mxu0 %v776
    %v1251 = vpop.f32.mrb[0].mxu0
    %v1252 = vadd.f32 %v1209, %v1251
    %v1253 = vpop.f32.mrb[0].mxu0
    %v1254 = vadd.f32 %v1211, %v1253
    %v1255 = vpop.f32.mrb[0].mxu0
    %v1256 = vadd.f32 %v1213, %v1255
    %v1257 = vpop.f32.mrb[0].mxu0
    %v1258 = vadd.f32 %v1215, %v1257
    %1259 = vdwg.mxu0
    %vm1260 = vcmp.ge.f32.partialorder %v1252, 0.0
    %vm1261 = vcmp.ge.f32.partialorder %v1254, 0.0
    %vm1262 = vcmp.ge.f32.partialorder %v1256, 0.0
    %vm1263 = vcmp.ge.f32.partialorder %v1258, 0.0
    %v1264 = vmul.f32 %v1252, 0.01
    %v1265 = vmul.f32 %v1254, 0.01
    %v1266 = vmul.f32 %v1256, 0.01
    %v1267 = vmul.f32 %v1258, 0.01
    %v1268 = vsel %vm1260, %v1252, %v1264
    %v1269 = vsel %vm1261, %v1254, %v1265
    %v1270 = vsel %vm1262, %v1256, %v1266
    %v1271 = vsel %vm1263, %v1258, %v1267
    %v1272 = vpack.c.bf16 %v1270, %v1268
    %v1273 = vpack.c.bf16 %v1271, %v1269
    %v1274 = vld [vmem:[#allocation9] sm:$0xf]
    %v1275 = vld [vmem:[#allocation9 + $0x4] sm:$0xf]
    %v1276 = vld [vmem:[#allocation9 + $0x8] sm:$0xf]
    %v1277 = vld [vmem:[#allocation9 + $0xc] sm:$0xf]
    %v1278 = vld [vmem:[#allocation9 + $0x10] sm:$0xf]
    %v1279 = vld [vmem:[#allocation9 + $0x14] sm:$0xf]
    %v1280 = vld [vmem:[#allocation9 + $0x18] sm:$0xf]
    %v1281 = vld [vmem:[#allocation9 + $0x1c] sm:$0xf]
    %v1282 = vld [vmem:[#allocation9 + $0x20] sm:$0xf]
    %v1283 = vld [vmem:[#allocation9 + $0x24] sm:$0xf]
    %v1284 = vld [vmem:[#allocation9 + $0x28] sm:$0xf]
    %v1285 = vld [vmem:[#allocation9 + $0x2c] sm:$0xf]
    %v1286 = vld [vmem:[#allocation9 + $0x30] sm:$0xf]
    %v1287 = vld [vmem:[#allocation9 + $0x34] sm:$0xf]
    %v1288 = vld [vmem:[#allocation9 + $0x38] sm:$0xf]
    %v1289 = vld [vmem:[#allocation9 + $0x3c] sm:$0xf]
    %v1290 = vld [vmem:[#allocation9 + $0x40] sm:$0xf]
    %v1291 = vld [vmem:[#allocation9 + $0x44] sm:$0xf]
    %v1292 = vld [vmem:[#allocation9 + $0x48] sm:$0xf]
    %v1293 = vld [vmem:[#allocation9 + $0x4c] sm:$0xf]
    %v1294 = vld [vmem:[#allocation9 + $0x50] sm:$0xf]
    %v1295 = vld [vmem:[#allocation9 + $0x54] sm:$0xf]
    %v1296 = vld [vmem:[#allocation9 + $0x58] sm:$0xf]
    %v1297 = vld [vmem:[#allocation9 + $0x5c] sm:$0xf]
    %v1298 = vld [vmem:[#allocation9 + $0x60] sm:$0xf]
    %v1299 = vld [vmem:[#allocation9 + $0x64] sm:$0xf]
    %v1300 = vld [vmem:[#allocation9 + $0x68] sm:$0xf]
    %v1301 = vld [vmem:[#allocation9 + $0x6c] sm:$0xf]
    %v1302 = vld [vmem:[#allocation9 + $0x70] sm:$0xf]
    %v1303 = vld [vmem:[#allocation9 + $0x74] sm:$0xf]
    %v1304 = vld [vmem:[#allocation9 + $0x78] sm:$0xf]
    %v1305 = vld [vmem:[#allocation9 + $0x7c] sm:$0xf]
    %v1306 = vld [vmem:[#allocation10] sm:$0x1]
    %v1308 = vlaneseq
    %v1309 = vshrl.u32 %v1308, 7
    %v1310 = vsub.s32 0, %v1309
    %v1311 = vrot.slane %v1306, %v1310
    %v1345 = vunpack.c.l.b16 %v1274
    %v1346 = vunpack.c.l.b16 %v1275
    %v1347 = vunpack.c.l.b16 %v1276
    %v1348 = vunpack.c.l.b16 %v1277
    %v1349 = vunpack.c.l.b16 %v1278
    %v1350 = vunpack.c.l.b16 %v1279
    %v1351 = vunpack.c.l.b16 %v1280
    %v1352 = vunpack.c.l.b16 %v1281
    %v1353 = vunpack.c.l.b16 %v1282
    %v1354 = vunpack.c.l.b16 %v1283
    %v1355 = vunpack.c.l.b16 %v1284
    %v1356 = vunpack.c.l.b16 %v1285
    %v1357 = vunpack.c.l.b16 %v1286
    %v1358 = vunpack.c.l.b16 %v1287
    %v1359 = vunpack.c.l.b16 %v1288
    %v1360 = vunpack.c.l.b16 %v1289
    %v1361 = vunpack.c.l.b16 %v1290
    %v1362 = vunpack.c.l.b16 %v1291
    %v1363 = vunpack.c.l.b16 %v1292
    %v1364 = vunpack.c.l.b16 %v1293
    %v1365 = vunpack.c.l.b16 %v1294
    %v1366 = vunpack.c.l.b16 %v1295
    %v1367 = vunpack.c.l.b16 %v1296
    %v1368 = vunpack.c.l.b16 %v1297
    %v1369 = vunpack.c.l.b16 %v1298
    %v1370 = vunpack.c.l.b16 %v1299
    %v1371 = vunpack.c.l.b16 %v1300
    %v1372 = vunpack.c.l.b16 %v1301
    %v1373 = vunpack.c.l.b16 %v1302
    %v1374 = vunpack.c.l.b16 %v1303
    %v1375 = vunpack.c.l.b16 %v1304
    %v1376 = vunpack.c.l.b16 %v1305
    %v1377 = vpack.c.b16 %v1346, %v1345
    %v1378 = vpack.c.b16 %v1348, %v1347
    %v1379 = vpack.c.b16 %v1350, %v1349
    %v1380 = vpack.c.b16 %v1352, %v1351
    %v1381 = vpack.c.b16 %v1354, %v1353
    %v1382 = vpack.c.b16 %v1356, %v1355
    %v1383 = vpack.c.b16 %v1358, %v1357
    %v1384 = vpack.c.b16 %v1360, %v1359
    %v1385 = vpack.c.b16 %v1362, %v1361
    %v1386 = vpack.c.b16 %v1364, %v1363
    %v1387 = vpack.c.b16 %v1366, %v1365
    %v1388 = vpack.c.b16 %v1368, %v1367
    %v1389 = vpack.c.b16 %v1370, %v1369
    %v1390 = vpack.c.b16 %v1372, %v1371
    %v1391 = vpack.c.b16 %v1374, %v1373
    %v1392 = vpack.c.b16 %v1376, %v1375
    %1409 = vmatprep.subr.bf16.mxu0 0
    %1410 = vmatpush1.bf16.msra.mxu0 %v1377
    %1411 = vmatprep.subr.bf16.mxu0 0
    %1412 = vmatpush1.bf16.msra.mxu0 %v1378
    %1413 = vmatprep.subr.bf16.mxu0 0
    %1414 = vmatpush1.bf16.msra.mxu0 %v1379
    %1415 = vmatprep.subr.bf16.mxu0 0
    %1416 = vmatpush1.bf16.msra.mxu0 %v1380
    %1417 = vmatprep.subr.bf16.mxu0 0
    %1418 = vmatpush1.bf16.msra.mxu0 %v1381
    %1419 = vmatprep.subr.bf16.mxu0 0
    %1420 = vmatpush1.bf16.msra.mxu0 %v1382
    %1421 = vmatprep.subr.bf16.mxu0 0
    %1422 = vmatpush1.bf16.msra.mxu0 %v1383
    %1423 = vmatprep.subr.bf16.mxu0 0
    %1424 = vmatpush1.bf16.msra.mxu0 %v1384
    %1425 = vmatprep.subr.bf16.mxu0 0
    %1426 = vmatpush1.bf16.msra.mxu0 %v1385
    %1427 = vmatprep.subr.bf16.mxu0 0
    %1428 = vmatpush1.bf16.msra.mxu0 %v1386
    %1429 = vmatprep.subr.bf16.mxu0 0
    %1430 = vmatpush1.bf16.msra.mxu0 %v1387
    %1431 = vmatprep.subr.bf16.mxu0 0
    %1432 = vmatpush1.bf16.msra.mxu0 %v1388
    %1433 = vmatprep.subr.bf16.mxu0 0
    %1434 = vmatpush1.bf16.msra.mxu0 %v1389
    %1435 = vmatprep.subr.bf16.mxu0 0
    %1436 = vmatpush1.bf16.msra.mxu0 %v1390
    %1437 = vmatprep.subr.bf16.mxu0 0
    %1438 = vmatpush1.bf16.msra.mxu0 %v1391
    %1439 = vmatprep.subr.bf16.mxu0 0
    %1440 = vmatpush1.bf16.msra.mxu0 %v1392
    %1441 = vmatprep.mubr.bf16.mxu0 %v1273
    %1442 = vmatmul.mubr.bf16.gmra.mrb[0].mxu0 %v1272
    %v1443 = vpop.f32.mrb[0].mxu0
    %v1444 = vadd.f32 %v1311, %v1443
    %v1445 = vpop.f32.mrb[0].mxu0
    %v1446 = vpop.f32.mrb[0].mxu0
    %v1447 = vadd.f32 %v1311, %v1446
    %v1448 = vpop.f32.mrb[0].mxu0
    %1449 = vdwg.mxu0
    %vm1450 = vcmp.ge.f32.partialorder %v1444, 0.0
    %vm1451 = vcmp.ge.f32.partialorder %v1447, 0.0
    %v1452 = vmul.f32 %v1444, 0.01
    %v1453 = vmul.f32 %v1447, 0.01
    %v1454 = vsel %vm1450, %v1444, %v1452
    %v1455 = vsel %vm1451, %v1447, %v1453
    %v1456 = vpack.c.bf16 %v1455, %v1454
    %v1457 = vld [vmem:[#allocation12] sm:$0xf]
    %v1458 = vld [vmem:[#allocation12 + $0x4] sm:$0xf]
    %v1459 = vld [vmem:[#allocation12 + $0x8] sm:$0xf]
    %v1460 = vld [vmem:[#allocation12 + $0xc] sm:$0xf]
    %v1461 = vld [vmem:[#allocation12 + $0x10] sm:$0xf]
    %v1462 = vld [vmem:[#allocation12 + $0x14] sm:$0xf]
    %v1463 = vld [vmem:[#allocation12 + $0x18] sm:$0xf]
    %v1464 = vld [vmem:[#allocation12 + $0x1c] sm:$0xf]
    %v1465 = vld [vmem:[#allocation12 + $0x20] sm:$0xf]
    %v1466 = vld [vmem:[#allocation12 + $0x24] sm:$0xf]
    %v1467 = vld [vmem:[#allocation12 + $0x28] sm:$0xf]
    %v1468 = vld [vmem:[#allocation12 + $0x2c] sm:$0xf]
    %v1469 = vld [vmem:[#allocation12 + $0x30] sm:$0xf]
    %v1470 = vld [vmem:[#allocation12 + $0x34] sm:$0xf]
    %v1471 = vld [vmem:[#allocation12 + $0x38] sm:$0xf]
    %v1472 = vld [vmem:[#allocation12 + $0x3c] sm:$0xf]
    %v1489 = vunpack.c.l.b16 %v1457
    %v1490 = vunpack.c.l.b16 %v1458
    %v1491 = vunpack.c.l.b16 %v1459
    %v1492 = vunpack.c.l.b16 %v1460
    %v1493 = vunpack.c.l.b16 %v1461
    %v1494 = vunpack.c.l.b16 %v1462
    %v1495 = vunpack.c.l.b16 %v1463
    %v1496 = vunpack.c.l.b16 %v1464
    %v1497 = vunpack.c.l.b16 %v1465
    %v1498 = vunpack.c.l.b16 %v1466
    %v1499 = vunpack.c.l.b16 %v1467
    %v1500 = vunpack.c.l.b16 %v1468
    %v1501 = vunpack.c.l.b16 %v1469
    %v1502 = vunpack.c.l.b16 %v1470
    %v1503 = vunpack.c.l.b16 %v1471
    %v1504 = vunpack.c.l.b16 %v1472
    %v1505 = vpack.c.b16 %v1490, %v1489
    %v1506 = vpack.c.b16 %v1492, %v1491
    %v1507 = vpack.c.b16 %v1494, %v1493
    %v1508 = vpack.c.b16 %v1496, %v1495
    %v1509 = vpack.c.b16 %v1498, %v1497
    %v1510 = vpack.c.b16 %v1500, %v1499
    %v1511 = vpack.c.b16 %v1502, %v1501
    %v1512 = vpack.c.b16 %v1504, %v1503
    %1521 = vmatprep.subr.bf16.mxu0 0
    %1522 = vmatpush1.bf16.msra.mxu0 %v1505
    %1523 = vmatprep.subr.bf16.mxu0 0
    %1524 = vmatpush1.bf16.msra.mxu0 %v1506
    %1525 = vmatprep.subr.bf16.mxu0 0
    %1526 = vmatpush1.bf16.msra.mxu0 %v1507
    %1527 = vmatprep.subr.bf16.mxu0 0
    %1528 = vmatpush1.bf16.msra.mxu0 %v1508
    %1529 = vmatprep.subr.bf16.mxu0 0
    %1530 = vmatpush1.bf16.msra.mxu0 %v1509
    %1531 = vmatprep.subr.bf16.mxu0 0
    %1532 = vmatpush1.bf16.msra.mxu0 %v1510
    %1533 = vmatprep.subr.bf16.mxu0 0
    %1534 = vmatpush1.bf16.msra.mxu0 %v1511
    %1535 = vmatprep.subr.bf16.mxu0 0
    %1536 = vmatpush1.bf16.msra.mxu0 %v1512
    %1537 = vmatprep.subr.bf16.mxu0 0
    %1538 = vmatpush1.bf16.msra.mxu0 0
    %1539 = vmatprep.subr.bf16.mxu0 0
    %1540 = vmatpush1.bf16.msra.mxu0 0
    %1541 = vmatprep.subr.bf16.mxu0 0
    %1542 = vmatpush1.bf16.msra.mxu0 0
    %1543 = vmatprep.subr.bf16.mxu0 0
    %1544 = vmatpush1.bf16.msra.mxu0 0
    %1545 = vmatprep.subr.bf16.mxu0 0
    %1546 = vmatpush1.bf16.msra.mxu0 0
    %1547 = vmatprep.subr.bf16.mxu0 0
    %1548 = vmatpush1.bf16.msra.mxu0 0
    %1549 = vmatprep.subr.bf16.mxu0 0
    %1550 = vmatpush1.bf16.msra.mxu0 0
    %1551 = vmatprep.subr.bf16.mxu0 0
    %1552 = vmatpush1.bf16.msra.mxu0 0
    %1553 = vmatprep.mubr.bf16.mxu0 0
    %1554 = vmatmul.mubr.bf16.gmra.mrb[0].mxu0 %v1456
    %v1555 = vpop.f32.mrb[0].mxu0
    %v1556 = vadd.f32 0.0, %v1555
    %v1557 = vpop.f32.mrb[0].mxu0
    %v1558 = vpop.f32.mrb[0].mxu0
    %v1559 = vadd.f32 0.0, %v1558
    %v1560 = vpop.f32.mrb[0].mxu0
    %1561 = vdwg.mxu0
    %1562 = vst [vmem:[%s18] sm:$0xff] %v1556
    %1563 = vst [vmem:[%s18 + $0x8] sm:$0xff] %v1559
    %1564 = vrot.lane.b32.xlu0 %v1556, 120
    %v1565 = vpop.permute.xlu0 %1564
    %1566 = vrot.lane.b32.xlu0 %v1559, 120
    %v1567 = vpop.permute.xlu0 %1566
    %v1568 = vld [vmem:[%s1] sm:$0xf]
    %v1569 = vld [vmem:[%s1 + $0x4] sm:$0xf]
    %v1570 = vunpack.c.l.bf16 %v1568
    %v1571 = vunpack.c.l.bf16 %v1569
    %v1572 = vmul.f32 %v1565, 0.5
    %v1573 = vmul.f32 %v1567, 0.5
    %v1574 = vmul.f32 %v1572, 1.442695
    %v1575 = vpow.pop %v1574
    %v1576 = vmul.f32 %v1573, 1.442695
    %v1577 = vpow.pop %v1576
    %v1578 = vmul.f32 %v1570, %v1575
    %v1579 = vmul.f32 %v1571, %v1577
    %v1580 = vadd.f32 %v1578, %v1556
    %v1581 = vadd.f32 %v1579, %v1559
    %v1582 = vpack.c.bf16 %v1581, %v1580
    %v1583 = vld [vmem:[#allocation13] sm:$0xff]
    %v1584 = vld [vmem:[#allocation13 + $0x8] sm:$0xff]
    %v1585 = vld [vmem:[#allocation13 + $0x10] sm:$0xff]
    %v1586 = vld [vmem:[#allocation13 + $0x18] sm:$0xff]
    %v1587 = vld [vmem:[#allocation13 + $0x20] sm:$0xff]
    %v1588 = vld [vmem:[#allocation13 + $0x28] sm:$0xff]
    %v1589 = vld [vmem:[#allocation13 + $0x30] sm:$0xff]
    %v1590 = vld [vmem:[#allocation13 + $0x38] sm:$0xff]
    %v1591 = vld [vmem:[#allocation13 + $0x40] sm:$0xff]
    %v1592 = vld [vmem:[#allocation13 + $0x48] sm:$0xff]
    %v1593 = vld [vmem:[#allocation13 + $0x50] sm:$0xff]
    %v1594 = vld [vmem:[#allocation13 + $0x58] sm:$0xff]
    %v1595 = vld [vmem:[#allocation13 + $0x60] sm:$0xff]
    %v1596 = vld [vmem:[#allocation13 + $0x68] sm:$0xff]
    %v1597 = vld [vmem:[#allocation13 + $0x70] sm:$0xff]
    %v1598 = vld [vmem:[#allocation13 + $0x78] sm:$0xff]
    %v1599 = vld [vmem:[#allocation15] sm:$0x3]
    %v1601 = vlaneseq
    %v1602 = vshrl.u32 %v1601, 7
    %v1603 = vsub.s32 0, %v1602
    %v1604 = vrot.slane %v1599, %v1603
    %v1605 = vlaneseq
    %v1606 = vshrl.u32 %v1605, 7
    %v1607 = vsub.s32 1, %v1606
    %v1608 = vrot.slane %v1599, %v1607
    %v1627 = vunpack.c.l.b16 %v1583
    %v1628 = vunpack.c.h.b16 %v1583
    %v1629 = vunpack.c.l.b16 %v1584
    %v1630 = vunpack.c.h.b16 %v1584
    %v1631 = vunpack.c.l.b16 %v1585
    %v1632 = vunpack.c.h.b16 %v1585
    %v1633 = vunpack.c.l.b16 %v1586
    %v1634 = vunpack.c.h.b16 %v1586
    %v1635 = vunpack.c.l.b16 %v1587
    %v1636 = vunpack.c.h.b16 %v1587
    %v1637 = vunpack.c.l.b16 %v1588
    %v1638 = vunpack.c.h.b16 %v1588
    %v1639 = vunpack.c.l.b16 %v1589
    %v1640 = vunpack.c.h.b16 %v1589
    %v1641 = vunpack.c.l.b16 %v1590
    %v1642 = vunpack.c.h.b16 %v1590
    %v1643 = vunpack.c.l.b16 %v1591
    %v1644 = vunpack.c.h.b16 %v1591
    %v1645 = vunpack.c.l.b16 %v1592
    %v1646 = vunpack.c.h.b16 %v1592
    %v1647 = vunpack.c.l.b16 %v1593
    %v1648 = vunpack.c.h.b16 %v1593
    %v1649 = vunpack.c.l.b16 %v1594
    %v1650 = vunpack.c.h.b16 %v1594
    %v1651 = vunpack.c.l.b16 %v1595
    %v1652 = vunpack.c.h.b16 %v1595
    %v1653 = vunpack.c.l.b16 %v1596
    %v1654 = vunpack.c.h.b16 %v1596
    %v1655 = vunpack.c.l.b16 %v1597
    %v1656 = vunpack.c.h.b16 %v1597
    %v1657 = vunpack.c.l.b16 %v1598
    %v1658 = vunpack.c.h.b16 %v1598
    %v1659 = vpack.c.b16 %v1629, %v1627
    %v1660 = vpack.c.b16 %v1630, %v1628
    %v1661 = vpack.c.b16 %v1633, %v1631
    %v1662 = vpack.c.b16 %v1634, %v1632
    %v1663 = vpack.c.b16 %v1637, %v1635
    %v1664 = vpack.c.b16 %v1638, %v1636
    %v1665 = vpack.c.b16 %v1641, %v1639
    %v1666 = vpack.c.b16 %v1642, %v1640
    %v1667 = vpack.c.b16 %v1645, %v1643
    %v1668 = vpack.c.b16 %v1646, %v1644
    %v1669 = vpack.c.b16 %v1649, %v1647
    %v1670 = vpack.c.b16 %v1650, %v1648
    %v1671 = vpack.c.b16 %v1653, %v1651
    %v1672 = vpack.c.b16 %v1654, %v1652
    %v1673 = vpack.c.b16 %v1657, %v1655
    %v1674 = vpack.c.b16 %v1658, %v1656
    %1691 = vmatprep.subr.bf16.mxu0 %v1660
    %1692 = vmatpush1.bf16.msra.mxu0 %v1659
    %1693 = vmatprep.subr.bf16.mxu0 %v1662
    %1694 = vmatpush1.bf16.msra.mxu0 %v1661
    %1695 = vmatprep.subr.bf16.mxu0 %v1664
    %1696 = vmatpush1.bf16.msra.mxu0 %v1663
    %1697 = vmatprep.subr.bf16.mxu0 %v1666
    %1698 = vmatpush1.bf16.msra.mxu0 %v1665
    %1699 = vmatprep.subr.bf16.mxu0 %v1668
    %1700 = vmatpush1.bf16.msra.mxu0 %v1667
    %1701 = vmatprep.subr.bf16.mxu0 %v1670
    %1702 = vmatpush1.bf16.msra.mxu0 %v1669
    %1703 = vmatprep.subr.bf16.mxu0 %v1672
    %1704 = vmatpush1.bf16.msra.mxu0 %v1671
    %1705 = vmatprep.subr.bf16.mxu0 %v1674
    %1706 = vmatpush1.bf16.msra.mxu0 %v1673
    %1707 = vmatprep.subr.bf16.mxu0 0
    %1708 = vmatpush1.bf16.msra.mxu0 0
    %1709 = vmatprep.subr.bf16.mxu0 0
    %1710 = vmatpush1.bf16.msra.mxu0 0
    %1711 = vmatprep.subr.bf16.mxu0 0
    %1712 = vmatpush1.bf16.msra.mxu0 0
    %1713 = vmatprep.subr.bf16.mxu0 0
    %1714 = vmatpush1.bf16.msra.mxu0 0
    %1715 = vmatprep.subr.bf16.mxu0 0
    %1716 = vmatpush1.bf16.msra.mxu0 0
    %1717 = vmatprep.subr.bf16.mxu0 0
    %1718 = vmatpush1.bf16.msra.mxu0 0
    %1719 = vmatprep.subr.bf16.mxu0 0
    %1720 = vmatpush1.bf16.msra.mxu0 0
    %1721 = vmatprep.subr.bf16.mxu0 0
    %1722 = vmatpush1.bf16.msra.mxu0 0
    %1723 = vmatprep.mubr.bf16.mxu0 0
    %1724 = vmatmul.mubr.bf16.gmra.mrb[0].mxu0 %v1582
    %v1725 = vpop.f32.mrb[0].mxu0
    %v1726 = vadd.f32 %v1604, %v1725
    %v1727 = vpop.f32.mrb[0].mxu0
    %v1728 = vadd.f32 %v1608, %v1727
    %v1729 = vpop.f32.mrb[0].mxu0
    %v1730 = vadd.f32 %v1604, %v1729
    %v1731 = vpop.f32.mrb[0].mxu0
    %v1732 = vadd.f32 %v1608, %v1731
    %1733 = vdwg.mxu0
    %vm1734 = vcmp.ge.f32.partialorder %v1726, 0.0
    %vm1735 = vcmp.ge.f32.partialorder %v1728, 0.0
    %vm1736 = vcmp.ge.f32.partialorder %v1730, 0.0
    %vm1737 = vcmp.ge.f32.partialorder %v1732, 0.0
    %v1738 = vmul.f32 %v1726, 0.01
    %v1739 = vmul.f32 %v1728, 0.01
    %v1740 = vmul.f32 %v1730, 0.01
    %v1741 = vmul.f32 %v1732, 0.01
    %v1742 = vsel %vm1734, %v1726, %v1738
    %v1743 = vsel %vm1735, %v1728, %v1739
    %v1744 = vsel %vm1736, %v1730, %v1740
    %v1745 = vsel %vm1737, %v1732, %v1741
    %v1746 = vpack.c.bf16 %v1744, %v1742
    %v1747 = vpack.c.bf16 %v1745, %v1743
    %v1748 = vld [vmem:[#allocation16] sm:$0xff]
    %v1749 = vld [vmem:[#allocation16 + $0x8] sm:$0xff]
    %v1750 = vld [vmem:[#allocation16 + $0x10] sm:$0xff]
    %v1751 = vld [vmem:[#allocation16 + $0x18] sm:$0xff]
    %v1752 = vld [vmem:[#allocation16 + $0x20] sm:$0xff]
    %v1753 = vld [vmem:[#allocation16 + $0x28] sm:$0xff]
    %v1754 = vld [vmem:[#allocation16 + $0x30] sm:$0xff]
    %v1755 = vld [vmem:[#allocation16 + $0x38] sm:$0xff]
    %v1756 = vld [vmem:[#allocation16 + $0x40] sm:$0xff]
    %v1757 = vld [vmem:[#allocation16 + $0x48] sm:$0xff]
    %v1758 = vld [vmem:[#allocation16 + $0x50] sm:$0xff]
    %v1759 = vld [vmem:[#allocation16 + $0x58] sm:$0xff]
    %v1760 = vld [vmem:[#allocation16 + $0x60] sm:$0xff]
    %v1761 = vld [vmem:[#allocation16 + $0x68] sm:$0xff]
    %v1762 = vld [vmem:[#allocation16 + $0x70] sm:$0xff]
    %v1763 = vld [vmem:[#allocation16 + $0x78] sm:$0xff]
    %v1764 = vld [vmem:[#allocation16 + $0x80] sm:$0xff]
    %v1765 = vld [vmem:[#allocation16 + $0x88] sm:$0xff]
    %v1766 = vld [vmem:[#allocation16 + $0x90] sm:$0xff]
    %v1767 = vld [vmem:[#allocation16 + $0x98] sm:$0xff]
    %v1768 = vld [vmem:[#allocation16 + $0xa0] sm:$0xff]
    %v1769 = vld [vmem:[#allocation16 + $0xa8] sm:$0xff]
    %v1770 = vld [vmem:[#allocation16 + $0xb0] sm:$0xff]
    %v1771 = vld [vmem:[#allocation16 + $0xb8] sm:$0xff]
    %v1772 = vld [vmem:[#allocation16 + $0xc0] sm:$0xff]
    %v1773 = vld [vmem:[#allocation16 + $0xc8] sm:$0xff]
    %v1774 = vld [vmem:[#allocation16 + $0xd0] sm:$0xff]
    %v1775 = vld [vmem:[#allocation16 + $0xd8] sm:$0xff]
    %v1776 = vld [vmem:[#allocation16 + $0xe0] sm:$0xff]
    %v1777 = vld [vmem:[#allocation16 + $0xe8] sm:$0xff]
    %v1778 = vld [vmem:[#allocation16 + $0xf0] sm:$0xff]
    %v1779 = vld [vmem:[#allocation16 + $0xf8] sm:$0xff]
    %v1780 = vld [vmem:[#allocation16 + $0x100] sm:$0xff]
    %v1781 = vld [vmem:[#allocation16 + $0x108] sm:$0xff]
    %v1782 = vld [vmem:[#allocation16 + $0x110] sm:$0xff]
    %v1783 = vld [vmem:[#allocation16 + $0x118] sm:$0xff]
    %v1784 = vld [vmem:[#allocation16 + $0x120] sm:$0xff]
    %v1785 = vld [vmem:[#allocation16 + $0x128] sm:$0xff]
    %v1786 = vld [vmem:[#allocation16 + $0x130] sm:$0xff]
    %v1787 = vld [vmem:[#allocation16 + $0x138] sm:$0xff]
    %v1788 = vld [vmem:[#allocation16 + $0x140] sm:$0xff]
    %v1789 = vld [vmem:[#allocation16 + $0x148] sm:$0xff]
    %v1790 = vld [vmem:[#allocation16 + $0x150] sm:$0xff]
    %v1791 = vld [vmem:[#allocation16 + $0x158] sm:$0xff]
    %v1792 = vld [vmem:[#allocation16 + $0x160] sm:$0xff]
    %v1793 = vld [vmem:[#allocation16 + $0x168] sm:$0xff]
    %v1794 = vld [vmem:[#allocation16 + $0x170] sm:$0xff]
    %v1795 = vld [vmem:[#allocation16 + $0x178] sm:$0xff]
    %v1796 = vld [vmem:[#allocation16 + $0x180] sm:$0xff]
    %v1797 = vld [vmem:[#allocation16 + $0x188] sm:$0xff]
    %v1798 = vld [vmem:[#allocation16 + $0x190] sm:$0xff]
    %v1799 = vld [vmem:[#allocation16 + $0x198] sm:$0xff]
    %v1800 = vld [vmem:[#allocation16 + $0x1a0] sm:$0xff]
    %v1801 = vld [vmem:[#allocation16 + $0x1a8] sm:$0xff]
    %v1802 = vld [vmem:[#allocation16 + $0x1b0] sm:$0xff]
    %v1803 = vld [vmem:[#allocation16 + $0x1b8] sm:$0xff]
    %v1804 = vld [vmem:[#allocation16 + $0x1c0] sm:$0xff]
    %v1805 = vld [vmem:[#allocation16 + $0x1c8] sm:$0xff]
    %v1806 = vld [vmem:[#allocation16 + $0x1d0] sm:$0xff]
    %v1807 = vld [vmem:[#allocation16 + $0x1d8] sm:$0xff]
    %v1808 = vld [vmem:[#allocation16 + $0x1e0] sm:$0xff]
    %v1809 = vld [vmem:[#allocation16 + $0x1e8] sm:$0xff]
    %v1810 = vld [vmem:[#allocation16 + $0x1f0] sm:$0xff]
    %v1811 = vld [vmem:[#allocation16 + $0x1f8] sm:$0xff]
    %v1812 = vld [vmem:[#allocation18] sm:$0xf]
    %v1814 = vlaneseq
    %v1815 = vshrl.u32 %v1814, 7
    %v1816 = vsub.s32 0, %v1815
    %v1817 = vrot.slane %v1812, %v1816
    %v1818 = vlaneseq
    %v1819 = vshrl.u32 %v1818, 7
    %v1820 = vsub.s32 1, %v1819
    %v1821 = vrot.slane %v1812, %v1820
    %v1822 = vlaneseq
    %v1823 = vshrl.u32 %v1822, 7
    %v1824 = vsub.s32 2, %v1823
    %v1825 = vrot.slane %v1812, %v1824
    %v1826 = vlaneseq
    %v1827 = vshrl.u32 %v1826, 7
    %v1828 = vsub.s32 3, %v1827
    %v1829 = vrot.slane %v1812, %v1828
    %v1898 = vunpack.c.l.b16 %v1748
    %v1899 = vunpack.c.h.b16 %v1748
    %v1900 = vunpack.c.l.b16 %v1749
    %v1901 = vunpack.c.h.b16 %v1749
    %v1902 = vunpack.c.l.b16 %v1750
    %v1903 = vunpack.c.h.b16 %v1750
    %v1904 = vunpack.c.l.b16 %v1751
    %v1905 = vunpack.c.h.b16 %v1751
    %v1906 = vunpack.c.l.b16 %v1752
    %v1907 = vunpack.c.h.b16 %v1752
    %v1908 = vunpack.c.l.b16 %v1753
    %v1909 = vunpack.c.h.b16 %v1753
    %v1910 = vunpack.c.l.b16 %v1754
    %v1911 = vunpack.c.h.b16 %v1754
    %v1912 = vunpack.c.l.b16 %v1755
    %v1913 = vunpack.c.h.b16 %v1755
    %v1914 = vunpack.c.l.b16 %v1756
    %v1915 = vunpack.c.h.b16 %v1756
    %v1916 = vunpack.c.l.b16 %v1757
    %v1917 = vunpack.c.h.b16 %v1757
    %v1918 = vunpack.c.l.b16 %v1758
    %v1919 = vunpack.c.h.b16 %v1758
    %v1920 = vunpack.c.l.b16 %v1759
    %v1921 = vunpack.c.h.b16 %v1759
    %v1922 = vunpack.c.l.b16 %v1760
    %v1923 = vunpack.c.h.b16 %v1760
    %v1924 = vunpack.c.l.b16 %v1761
    %v1925 = vunpack.c.h.b16 %v1761
    %v1926 = vunpack.c.l.b16 %v1762
    %v1927 = vunpack.c.h.b16 %v1762
    %v1928 = vunpack.c.l.b16 %v1763
    %v1929 = vunpack.c.h.b16 %v1763
    %v1930 = vunpack.c.l.b16 %v1764
    %v1931 = vunpack.c.h.b16 %v1764
    %v1932 = vunpack.c.l.b16 %v1765
    %v1933 = vunpack.c.h.b16 %v1765
    %v1934 = vunpack.c.l.b16 %v1766
    %v1935 = vunpack.c.h.b16 %v1766
    %v1936 = vunpack.c.l.b16 %v1767
    %v1937 = vunpack.c.h.b16 %v1767
    %v1938 = vunpack.c.l.b16 %v1768
    %v1939 = vunpack.c.h.b16 %v1768
    %v1940 = vunpack.c.l.b16 %v1769
    %v1941 = vunpack.c.h.b16 %v1769
    %v1942 = vunpack.c.l.b16 %v1770
    %v1943 = vunpack.c.h.b16 %v1770
    %v1944 = vunpack.c.l.b16 %v1771
    %v1945 = vunpack.c.h.b16 %v1771
    %v1946 = vunpack.c.l.b16 %v1772
    %v1947 = vunpack.c.h.b16 %v1772
    %v1948 = vunpack.c.l.b16 %v1773
    %v1949 = vunpack.c.h.b16 %v1773
    %v1950 = vunpack.c.l.b16 %v1774
    %v1951 = vunpack.c.h.b16 %v1774
    %v1952 = vunpack.c.l.b16 %v1775
    %v1953 = vunpack.c.h.b16 %v1775
    %v1954 = vunpack.c.l.b16 %v1776
    %v1955 = vunpack.c.h.b16 %v1776
    %v1956 = vunpack.c.l.b16 %v1777
    %v1957 = vunpack.c.h.b16 %v1777
    %v1958 = vunpack.c.l.b16 %v1778
    %v1959 = vunpack.c.h.b16 %v1778
    %v1960 = vunpack.c.l.b16 %v1779
    %v1961 = vunpack.c.h.b16 %v1779
    %v1962 = vunpack.c.l.b16 %v1780
    %v1963 = vunpack.c.h.b16 %v1780
    %v1964 = vunpack.c.l.b16 %v1781
    %v1965 = vunpack.c.h.b16 %v1781
    %v1966 = vunpack.c.l.b16 %v1782
    %v1967 = vunpack.c.h.b16 %v1782
    %v1968 = vunpack.c.l.b16 %v1783
    %v1969 = vunpack.c.h.b16 %v1783
    %v1970 = vunpack.c.l.b16 %v1784
    %v1971 = vunpack.c.h.b16 %v1784
    %v1972 = vunpack.c.l.b16 %v1785
    %v1973 = vunpack.c.h.b16 %v1785
    %v1974 = vunpack.c.l.b16 %v1786
    %v1975 = vunpack.c.h.b16 %v1786
    %v1976 = vunpack.c.l.b16 %v1787
    %v1977 = vunpack.c.h.b16 %v1787
    %v1978 = vunpack.c.l.b16 %v1788
    %v1979 = vunpack.c.h.b16 %v1788
    %v1980 = vunpack.c.l.b16 %v1789
    %v1981 = vunpack.c.h.b16 %v1789
    %v1982 = vunpack.c.l.b16 %v1790
    %v1983 = vunpack.c.h.b16 %v1790
    %v1984 = vunpack.c.l.b16 %v1791
    %v1985 = vunpack.c.h.b16 %v1791
    %v1986 = vunpack.c.l.b16 %v1792
    %v1987 = vunpack.c.h.b16 %v1792
    %v1988 = vunpack.c.l.b16 %v1793
    %v1989 = vunpack.c.h.b16 %v1793
    %v1990 = vunpack.c.l.b16 %v1794
    %v1991 = vunpack.c.h.b16 %v1794
    %v1992 = vunpack.c.l.b16 %v1795
    %v1993 = vunpack.c.h.b16 %v1795
    %v1994 = vunpack.c.l.b16 %v1796
    %v1995 = vunpack.c.h.b16 %v1796
    %v1996 = vunpack.c.l.b16 %v1797
    %v1997 = vunpack.c.h.b16 %v1797
    %v1998 = vunpack.c.l.b16 %v1798
    %v1999 = vunpack.c.h.b16 %v1798
    %v2000 = vunpack.c.l.b16 %v1799
    %v2001 = vunpack.c.h.b16 %v1799
    %v2002 = vunpack.c.l.b16 %v1800
    %v2003 = vunpack.c.h.b16 %v1800
    %v2004 = vunpack.c.l.b16 %v1801
    %v2005 = vunpack.c.h.b16 %v1801
    %v2006 = vunpack.c.l.b16 %v1802
    %v2007 = vunpack.c.h.b16 %v1802
    %v2008 = vunpack.c.l.b16 %v1803
    %v2009 = vunpack.c.h.b16 %v1803
    %v2010 = vunpack.c.l.b16 %v1804
    %v2011 = vunpack.c.h.b16 %v1804
    %v2012 = vunpack.c.l.b16 %v1805
    %v2013 = vunpack.c.h.b16 %v1805
    %v2014 = vunpack.c.l.b16 %v1806
    %v2015 = vunpack.c.h.b16 %v1806
    %v2016 = vunpack.c.l.b16 %v1807
    %v2017 = vunpack.c.h.b16 %v1807
    %v2018 = vunpack.c.l.b16 %v1808
    %v2019 = vunpack.c.h.b16 %v1808
    %v2020 = vunpack.c.l.b16 %v1809
    %v2021 = vunpack.c.h.b16 %v1809
    %v2022 = vunpack.c.l.b16 %v1810
    %v2023 = vunpack.c.h.b16 %v1810
    %v2024 = vunpack.c.l.b16 %v1811
    %v2025 = vunpack.c.h.b16 %v1811
    %v2026 = vpack.c.b16 %v1902, %v1898
    %v2027 = vpack.c.b16 %v1903, %v1899
    %v2028 = vpack.c.b16 %v1904, %v1900
    %v2029 = vpack.c.b16 %v1905, %v1901
    %v2030 = vpack.c.b16 %v1910, %v1906
    %v2031 = vpack.c.b16 %v1911, %v1907
    %v2032 = vpack.c.b16 %v1912, %v1908
    %v2033 = vpack.c.b16 %v1913, %v1909
    %v2034 = vpack.c.b16 %v1918, %v1914
    %v2035 = vpack.c.b16 %v1919, %v1915
    %v2036 = vpack.c.b16 %v1920, %v1916
    %v2037 = vpack.c.b16 %v1921, %v1917
    %v2038 = vpack.c.b16 %v1926, %v1922
    %v2039 = vpack.c.b16 %v1927, %v1923
    %v2040 = vpack.c.b16 %v1928, %v1924
    %v2041 = vpack.c.b16 %v1929, %v1925
    %v2042 = vpack.c.b16 %v1934, %v1930
    %v2043 = vpack.c.b16 %v1935, %v1931
    %v2044 = vpack.c.b16 %v1936, %v1932
    %v2045 = vpack.c.b16 %v1937, %v1933
    %v2046 = vpack.c.b16 %v1942, %v1938
    %v2047 = vpack.c.b16 %v1943, %v1939
    %v2048 = vpack.c.b16 %v1944, %v1940
    %v2049 = vpack.c.b16 %v1945, %v1941
    %v2050 = vpack.c.b16 %v1950, %v1946
    %v2051 = vpack.c.b16 %v1951, %v1947
    %v2052 = vpack.c.b16 %v1952, %v1948
    %v2053 = vpack.c.b16 %v1953, %v1949
    %v2054 = vpack.c.b16 %v1958, %v1954
    %v2055 = vpack.c.b16 %v1959, %v1955
    %v2056 = vpack.c.b16 %v1960, %v1956
    %v2057 = vpack.c.b16 %v1961, %v1957
    %v2058 = vpack.c.b16 %v1966, %v1962
    %v2059 = vpack.c.b16 %v1967, %v1963
    %v2060 = vpack.c.b16 %v1968, %v1964
    %v2061 = vpack.c.b16 %v1969, %v1965
    %v2062 = vpack.c.b16 %v1974, %v1970
    %v2063 = vpack.c.b16 %v1975, %v1971
    %v2064 = vpack.c.b16 %v1976, %v1972
    %v2065 = vpack.c.b16 %v1977, %v1973
    %v2066 = vpack.c.b16 %v1982, %v1978
    %v2067 = vpack.c.b16 %v1983, %v1979
    %v2068 = vpack.c.b16 %v1984, %v1980
    %v2069 = vpack.c.b16 %v1985, %v1981
    %v2070 = vpack.c.b16 %v1990, %v1986
    %v2071 = vpack.c.b16 %v1991, %v1987
    %v2072 = vpack.c.b16 %v1992, %v1988
    %v2073 = vpack.c.b16 %v1993, %v1989
    %v2074 = vpack.c.b16 %v1998, %v1994
    %v2075 = vpack.c.b16 %v1999, %v1995
    %v2076 = vpack.c.b16 %v2000, %v1996
    %v2077 = vpack.c.b16 %v2001, %v1997
    %v2078 = vpack.c.b16 %v2006, %v2002
    %v2079 = vpack.c.b16 %v2007, %v2003
    %v2080 = vpack.c.b16 %v2008, %v2004
    %v2081 = vpack.c.b16 %v2009, %v2005
    %v2082 = vpack.c.b16 %v2014, %v2010
    %v2083 = vpack.c.b16 %v2015, %v2011
    %v2084 = vpack.c.b16 %v2016, %v2012
    %v2085 = vpack.c.b16 %v2017, %v2013
    %v2086 = vpack.c.b16 %v2022, %v2018
    %v2087 = vpack.c.b16 %v2023, %v2019
    %v2088 = vpack.c.b16 %v2024, %v2020
    %v2089 = vpack.c.b16 %v2025, %v2021
    %2154 = vmatprep.subr.bf16.mxu0 %v2027
    %2155 = vmatpush1.bf16.msra.mxu0 %v2026
    %2156 = vmatprep.subr.bf16.mxu0 %v2031
    %2157 = vmatpush1.bf16.msra.mxu0 %v2030
    %2158 = vmatprep.subr.bf16.mxu0 %v2035
    %2159 = vmatpush1.bf16.msra.mxu0 %v2034
    %2160 = vmatprep.subr.bf16.mxu0 %v2039
    %2161 = vmatpush1.bf16.msra.mxu0 %v2038
    %2162 = vmatprep.subr.bf16.mxu0 %v2043
    %2163 = vmatpush1.bf16.msra.mxu0 %v2042
    %2164 = vmatprep.subr.bf16.mxu0 %v2047
    %2165 = vmatpush1.bf16.msra.mxu0 %v2046
    %2166 = vmatprep.subr.bf16.mxu0 %v2051
    %2167 = vmatpush1.bf16.msra.mxu0 %v2050
    %2168 = vmatprep.subr.bf16.mxu0 %v2055
    %2169 = vmatpush1.bf16.msra.mxu0 %v2054
    %2170 = vmatprep.subr.bf16.mxu0 %v2059
    %2171 = vmatpush1.bf16.msra.mxu0 %v2058
    %2172 = vmatprep.subr.bf16.mxu0 %v2063
    %2173 = vmatpush1.bf16.msra.mxu0 %v2062
    %2174 = vmatprep.subr.bf16.mxu0 %v2067
    %2175 = vmatpush1.bf16.msra.mxu0 %v2066
    %2176 = vmatprep.subr.bf16.mxu0 %v2071
    %2177 = vmatpush1.bf16.msra.mxu0 %v2070
    %2178 = vmatprep.subr.bf16.mxu0 %v2075
    %2179 = vmatpush1.bf16.msra.mxu0 %v2074
    %2180 = vmatprep.subr.bf16.mxu0 %v2079
    %2181 = vmatpush1.bf16.msra.mxu0 %v2078
    %2182 = vmatprep.subr.bf16.mxu0 %v2083
    %2183 = vmatpush1.bf16.msra.mxu0 %v2082
    %2184 = vmatprep.subr.bf16.mxu0 %v2087
    %2185 = vmatpush1.bf16.msra.mxu0 %v2086
    %2186 = vmatprep.mubr.bf16.mxu0 %v1747
    %2187 = vmatmul.mubr.bf16.gmra.mrb[0].mxu0 %v1746
    %v2188 = vpop.f32.mrb[0].mxu0
    %v2189 = vadd.f32 %v1817, %v2188
    %v2190 = vpop.f32.mrb[0].mxu0
    %v2191 = vadd.f32 %v1821, %v2190
    %v2192 = vpop.f32.mrb[0].mxu0
    %v2193 = vadd.f32 %v1817, %v2192
    %v2194 = vpop.f32.mrb[0].mxu0
    %v2195 = vadd.f32 %v1821, %v2194
    %2196 = vdwg.mxu0
    %2197 = vmatprep.subr.bf16.mxu0 %v2029
    %2198 = vmatpush1.bf16.msra.mxu0 %v2028
    %2199 = vmatprep.subr.bf16.mxu0 %v2033
    %2200 = vmatpush1.bf16.msra.mxu0 %v2032
    %2201 = vmatprep.subr.bf16.mxu0 %v2037
    %2202 = vmatpush1.bf16.msra.mxu0 %v2036
    %2203 = vmatprep.subr.bf16.mxu0 %v2041
    %2204 = vmatpush1.bf16.msra.mxu0 %v2040
    %2205 = vmatprep.subr.bf16.mxu0 %v2045
    %2206 = vmatpush1.bf16.msra.mxu0 %v2044
    %2207 = vmatprep.subr.bf16.mxu0 %v2049
    %2208 = vmatpush1.bf16.msra.mxu0 %v2048
    %2209 = vmatprep.subr.bf16.mxu0 %v2053
    %2210 = vmatpush1.bf16.msra.mxu0 %v2052
    %2211 = vmatprep.subr.bf16.mxu0 %v2057
    %2212 = vmatpush1.bf16.msra.mxu0 %v2056
    %2213 = vmatprep.subr.bf16.mxu0 %v2061
    %2214 = vmatpush1.bf16.msra.mxu0 %v2060
    %2215 = vmatprep.subr.bf16.mxu0 %v2065
    %2216 = vmatpush1.bf16.msra.mxu0 %v2064
    %2217 = vmatprep.subr.bf16.mxu0 %v2069
    %2218 = vmatpush1.bf16.msra.mxu0 %v2068
    %2219 = vmatprep.subr.bf16.mxu0 %v2073
    %2220 = vmatpush1.bf16.msra.mxu0 %v2072
    %2221 = vmatprep.subr.bf16.mxu0 %v2077
    %2222 = vmatpush1.bf16.msra.mxu0 %v2076
    %2223 = vmatprep.subr.bf16.mxu0 %v2081
    %2224 = vmatpush1.bf16.msra.mxu0 %v2080
    %2225 = vmatprep.subr.bf16.mxu0 %v2085
    %2226 = vmatpush1.bf16.msra.mxu0 %v2084
    %2227 = vmatprep.subr.bf16.mxu0 %v2089
    %2228 = vmatpush1.bf16.msra.mxu0 %v2088
    %2229 = vmatprep.mubr.bf16.mxu0 %v1747
    %2230 = vmatmul.mubr.bf16.gmra.mrb[0].mxu0 %v1746
    %v2231 = vpop.f32.mrb[0].mxu0
    %v2232 = vadd.f32 %v1825, %v2231
    %v2233 = vpop.f32.mrb[0].mxu0
    %v2234 = vadd.f32 %v1829, %v2233
    %v2235 = vpop.f32.mrb[0].mxu0
    %v2236 = vadd.f32 %v1825, %v2235
    %v2237 = vpop.f32.mrb[0].mxu0
    %v2238 = vadd.f32 %v1829, %v2237
    %2239 = vdwg.mxu0
    %vm2240 = vcmp.ge.f32.partialorder %v2189, 0.0
    %vm2241 = vcmp.ge.f32.partialorder %v2191, 0.0
    %vm2242 = vcmp.ge.f32.partialorder %v2232, 0.0
    %vm2243 = vcmp.ge.f32.partialorder %v2234, 0.0
    %vm2244 = vcmp.ge.f32.partialorder %v2193, 0.0
    %vm2245 = vcmp.ge.f32.partialorder %v2195, 0.0
    %vm2246 = vcmp.ge.f32.partialorder %v2236, 0.0
    %vm2247 = vcmp.ge.f32.partialorder %v2238, 0.0
    %v2248 = vmul.f32 %v2189, 0.01
    %v2249 = vmul.f32 %v2191, 0.01
    %v2250 = vmul.f32 %v2232, 0.01
    %v2251 = vmul.f32 %v2234, 0.01
    %v2252 = vmul.f32 %v2193, 0.01
    %v2253 = vmul.f32 %v2195, 0.01
    %v2254 = vmul.f32 %v2236, 0.01
    %v2255 = vmul.f32 %v2238, 0.01
    %v2256 = vsel %vm2240, %v2189, %v2248
    %v2257 = vsel %vm2241, %v2191, %v2249
    %v2258 = vsel %vm2242, %v2232, %v2250
    %v2259 = vsel %vm2243, %v2234, %v2251
    %v2260 = vsel %vm2244, %v2193, %v2252
    %v2261 = vsel %vm2245, %v2195, %v2253
    %v2262 = vsel %vm2246, %v2236, %v2254
    %v2263 = vsel %vm2247, %v2238, %v2255
    %v2264 = vpack.c.bf16 %v2260, %v2256
    %v2265 = vpack.c.bf16 %v2261, %v2257
    %v2266 = vpack.c.bf16 %v2262, %v2258
    %v2267 = vpack.c.bf16 %v2263, %v2259
    %v2268 = vld [vmem:[#allocation19] sm:$0xff]
    %v2269 = vld [vmem:[#allocation19 + $0x8] sm:$0xff]
    %v2270 = vld [vmem:[#allocation19 + $0x10] sm:$0xff]
    %v2271 = vld [vmem:[#allocation19 + $0x18] sm:$0xff]
    %v2272 = vld [vmem:[#allocation19 + $0x20] sm:$0xff]
    %v2273 = vld [vmem:[#allocation19 + $0x28] sm:$0xff]
    %v2274 = vld [vmem:[#allocation19 + $0x30] sm:$0xff]
    %v2275 = vld [vmem:[#allocation19 + $0x38] sm:$0xff]
    %v2276 = vld [vmem:[#allocation19 + $0x40] sm:$0xff]
    %v2277 = vld [vmem:[#allocation19 + $0x48] sm:$0xff]
    %v2278 = vld [vmem:[#allocation19 + $0x50] sm:$0xff]
    %v2279 = vld [vmem:[#allocation19 + $0x58] sm:$0xff]
    %v2280 = vld [vmem:[#allocation19 + $0x60] sm:$0xff]
    %v2281 = vld [vmem:[#allocation19 + $0x68] sm:$0xff]
    %v2282 = vld [vmem:[#allocation19 + $0x70] sm:$0xff]
    %v2283 = vld [vmem:[#allocation19 + $0x78] sm:$0xff]
    %v2284 = vld [vmem:[#allocation19 + $0x80] sm:$0xff]
    %v2285 = vld [vmem:[#allocation19 + $0x88] sm:$0xff]
    %v2286 = vld [vmem:[#allocation19 + $0x90] sm:$0xff]
    %v2287 = vld [vmem:[#allocation19 + $0x98] sm:$0xff]
    %v2288 = vld [vmem:[#allocation19 + $0xa0] sm:$0xff]
    %v2289 = vld [vmem:[#allocation19 + $0xa8] sm:$0xff]
    %v2290 = vld [vmem:[#allocation19 + $0xb0] sm:$0xff]
    %v2291 = vld [vmem:[#allocation19 + $0xb8] sm:$0xff]
    %v2292 = vld [vmem:[#allocation19 + $0xc0] sm:$0xff]
    %v2293 = vld [vmem:[#allocation19 + $0xc8] sm:$0xff]
    %v2294 = vld [vmem:[#allocation19 + $0xd0] sm:$0xff]
    %v2295 = vld [vmem:[#allocation19 + $0xd8] sm:$0xff]
    %v2296 = vld [vmem:[#allocation19 + $0xe0] sm:$0xff]
    %v2297 = vld [vmem:[#allocation19 + $0xe8] sm:$0xff]
    %v2298 = vld [vmem:[#allocation19 + $0xf0] sm:$0xff]
    %v2299 = vld [vmem:[#allocation19 + $0xf8] sm:$0xff]
    %v2300 = vld [vmem:[#allocation19 + $0x100] sm:$0xff]
    %v2301 = vld [vmem:[#allocation19 + $0x108] sm:$0xff]
    %v2302 = vld [vmem:[#allocation19 + $0x110] sm:$0xff]
    %v2303 = vld [vmem:[#allocation19 + $0x118] sm:$0xff]
    %v2304 = vld [vmem:[#allocation19 + $0x120] sm:$0xff]
    %v2305 = vld [vmem:[#allocation19 + $0x128] sm:$0xff]
    %v2306 = vld [vmem:[#allocation19 + $0x130] sm:$0xff]
    %v2307 = vld [vmem:[#allocation19 + $0x138] sm:$0xff]
    %v2308 = vld [vmem:[#allocation19 + $0x140] sm:$0xff]
    %v2309 = vld [vmem:[#allocation19 + $0x148] sm:$0xff]
    %v2310 = vld [vmem:[#allocation19 + $0x150] sm:$0xff]
    %v2311 = vld [vmem:[#allocation19 + $0x158] sm:$0xff]
    %v2312 = vld [vmem:[#allocation19 + $0x160] sm:$0xff]
    %v2313 = vld [vmem:[#allocation19 + $0x168] sm:$0xff]
    %v2314 = vld [vmem:[#allocation19 + $0x170] sm:$0xff]
    %v2315 = vld [vmem:[#allocation19 + $0x178] sm:$0xff]
    %v2316 = vld [vmem:[#allocation19 + $0x180] sm:$0xff]
    %v2317 = vld [vmem:[#allocation19 + $0x188] sm:$0xff]
    %v2318 = vld [vmem:[#allocation19 + $0x190] sm:$0xff]
    %v2319 = vld [vmem:[#allocation19 + $0x198] sm:$0xff]
    %v2320 = vld [vmem:[#allocation19 + $0x1a0] sm:$0xff]
    %v2321 = vld [vmem:[#allocation19 + $0x1a8] sm:$0xff]
    %v2322 = vld [vmem:[#allocation19 + $0x1b0] sm:$0xff]
    %v2323 = vld [vmem:[#allocation19 + $0x1b8] sm:$0xff]
    %v2324 = vld [vmem:[#allocation19 + $0x1c0] sm:$0xff]
    %v2325 = vld [vmem:[#allocation19 + $0x1c8] sm:$0xff]
    %v2326 = vld [vmem:[#allocation19 + $0x1d0] sm:$0xff]
    %v2327 = vld [vmem:[#allocation19 + $0x1d8] sm:$0xff]
    %v2328 = vld [vmem:[#allocation19 + $0x1e0] sm:$0xff]
    %v2329 = vld [vmem:[#allocation19 + $0x1e8] sm:$0xff]
    %v2330 = vld [vmem:[#allocation19 + $0x1f0] sm:$0xff]
    %v2331 = vld [vmem:[#allocation19 + $0x1f8] sm:$0xff]
    %v2332 = vld [vmem:[#allocation19 + $0x200] sm:$0xff]
    %v2333 = vld [vmem:[#allocation19 + $0x208] sm:$0xff]
    %v2334 = vld [vmem:[#allocation19 + $0x210] sm:$0xff]
    %v2335 = vld [vmem:[#allocation19 + $0x218] sm:$0xff]
    %v2336 = vld [vmem:[#allocation19 + $0x220] sm:$0xff]
    %v2337 = vld [vmem:[#allocation19 + $0x228] sm:$0xff]
    %v2338 = vld [vmem:[#allocation19 + $0x230] sm:$0xff]
    %v2339 = vld [vmem:[#allocation19 + $0x238] sm:$0xff]
    %v2340 = vld [vmem:[#allocation19 + $0x240] sm:$0xff]
    %v2341 = vld [vmem:[#allocation19 + $0x248] sm:$0xff]
    %v2342 = vld [vmem:[#allocation19 + $0x250] sm:$0xff]
    %v2343 = vld [vmem:[#allocation19 + $0x258] sm:$0xff]
    %v2344 = vld [vmem:[#allocation19 + $0x260] sm:$0xff]
    %v2345 = vld [vmem:[#allocation19 + $0x268] sm:$0xff]
    %v2346 = vld [vmem:[#allocation19 + $0x270] sm:$0xff]
    %v2347 = vld [vmem:[#allocation19 + $0x278] sm:$0xff]
    %v2348 = vld [vmem:[#allocation19 + $0x280] sm:$0xff]
    %v2349 = vld [vmem:[#allocation19 + $0x288] sm:$0xff]
    %v2350 = vld [vmem:[#allocation19 + $0x290] sm:$0xff]
    %v2351 = vld [vmem:[#allocation19 + $0x298] sm:$0xff]
    %v2352 = vld [vmem:[#allocation19 + $0x2a0] sm:$0xff]
    %v2353 = vld [vmem:[#allocation19 + $0x2a8] sm:$0xff]
    %v2354 = vld [vmem:[#allocation19 + $0x2b0] sm:$0xff]
    %v2355 = vld [vmem:[#allocation19 + $0x2b8] sm:$0xff]
    %v2356 = vld [vmem:[#allocation19 + $0x2c0] sm:$0xff]
    %v2357 = vld [vmem:[#allocation19 + $0x2c8] sm:$0xff]
    %v2358 = vld [vmem:[#allocation19 + $0x2d0] sm:$0xff]
    %v2359 = vld [vmem:[#allocation19 + $0x2d8] sm:$0xff]
    %v2360 = vld [vmem:[#allocation19 + $0x2e0] sm:$0xff]
    %v2361 = vld [vmem:[#allocation19 + $0x2e8] sm:$0xff]
    %v2362 = vld [vmem:[#allocation19 + $0x2f0] sm:$0xff]
    %v2363 = vld [vmem:[#allocation19 + $0x2f8] sm:$0xff]
    %v2364 = vld [vmem:[#allocation19 + $0x300] sm:$0xff]
    %v2365 = vld [vmem:[#allocation19 + $0x308] sm:$0xff]
    %v2366 = vld [vmem:[#allocation19 + $0x310] sm:$0xff]
    %v2367 = vld [vmem:[#allocation19 + $0x318] sm:$0xff]
    %v2368 = vld [vmem:[#allocation19 + $0x320] sm:$0xff]
    %v2369 = vld [vmem:[#allocation19 + $0x328] sm:$0xff]
    %v2370 = vld [vmem:[#allocation19 + $0x330] sm:$0xff]
    %v2371 = vld [vmem:[#allocation19 + $0x338] sm:$0xff]
    %v2372 = vld [vmem:[#allocation19 + $0x340] sm:$0xff]
    %v2373 = vld [vmem:[#allocation19 + $0x348] sm:$0xff]
    %v2374 = vld [vmem:[#allocation19 + $0x350] sm:$0xff]
    %v2375 = vld [vmem:[#allocation19 + $0x358] sm:$0xff]
    %v2376 = vld [vmem:[#allocation19 + $0x360] sm:$0xff]
    %v2377 = vld [vmem:[#allocation19 + $0x368] sm:$0xff]
    %v2378 = vld [vmem:[#allocation19 + $0x370] sm:$0xff]
    %v2379 = vld [vmem:[#allocation19 + $0x378] sm:$0xff]
    %v2380 = vld [vmem:[#allocation19 + $0x380] sm:$0xff]
    %v2381 = vld [vmem:[#allocation19 + $0x388] sm:$0xff]
    %v2382 = vld [vmem:[#allocation19 + $0x390] sm:$0xff]
    %v2383 = vld [vmem:[#allocation19 + $0x398] sm:$0xff]
    %v2384 = vld [vmem:[#allocation19 + $0x3a0] sm:$0xff]
    %v2385 = vld [vmem:[#allocation19 + $0x3a8] sm:$0xff]
    %v2386 = vld [vmem:[#allocation19 + $0x3b0] sm:$0xff]
    %v2387 = vld [vmem:[#allocation19 + $0x3b8] sm:$0xff]
    %v2388 = vld [vmem:[#allocation19 + $0x3c0] sm:$0xff]
    %v2389 = vld [vmem:[#allocation19 + $0x3c8] sm:$0xff]
    %v2390 = vld [vmem:[#allocation19 + $0x3d0] sm:$0xff]
    %v2391 = vld [vmem:[#allocation19 + $0x3d8] sm:$0xff]
    %v2392 = vld [vmem:[#allocation19 + $0x3e0] sm:$0xff]
    %v2393 = vld [vmem:[#allocation19 + $0x3e8] sm:$0xff]
    %v2394 = vld [vmem:[#allocation19 + $0x3f0] sm:$0xff]
    %v2395 = vld [vmem:[#allocation19 + $0x3f8] sm:$0xff]
    %v2396 = vld [vmem:[#allocation19 + $0x400] sm:$0xff]
    %v2397 = vld [vmem:[#allocation19 + $0x408] sm:$0xff]
    %v2398 = vld [vmem:[#allocation19 + $0x410] sm:$0xff]
    %v2399 = vld [vmem:[#allocation19 + $0x418] sm:$0xff]
    %v2400 = vld [vmem:[#allocation19 + $0x420] sm:$0xff]
    %v2401 = vld [vmem:[#allocation19 + $0x428] sm:$0xff]
    %v2402 = vld [vmem:[#allocation19 + $0x430] sm:$0xff]
    %v2403 = vld [vmem:[#allocation19 + $0x438] sm:$0xff]
    %v2404 = vld [vmem:[#allocation19 + $0x440] sm:$0xff]
    %v2405 = vld [vmem:[#allocation19 + $0x448] sm:$0xff]
    %v2406 = vld [vmem:[#allocation19 + $0x450] sm:$0xff]
    %v2407 = vld [vmem:[#allocation19 + $0x458] sm:$0xff]
    %v2408 = vld [vmem:[#allocation19 + $0x460] sm:$0xff]
    %v2409 = vld [vmem:[#allocation19 + $0x468] sm:$0xff]
    %v2410 = vld [vmem:[#allocation19 + $0x470] sm:$0xff]
    %v2411 = vld [vmem:[#allocation19 + $0x478] sm:$0xff]
    %v2412 = vld [vmem:[#allocation19 + $0x480] sm:$0xff]
    %v2413 = vld [vmem:[#allocation19 + $0x488] sm:$0xff]
    %v2414 = vld [vmem:[#allocation19 + $0x490] sm:$0xff]
    %v2415 = vld [vmem:[#allocation19 + $0x498] sm:$0xff]
    %v2416 = vld [vmem:[#allocation19 + $0x4a0] sm:$0xff]
    %v2417 = vld [vmem:[#allocation19 + $0x4a8] sm:$0xff]
    %v2418 = vld [vmem:[#allocation19 + $0x4b0] sm:$0xff]
    %v2419 = vld [vmem:[#allocation19 + $0x4b8] sm:$0xff]
    %v2420 = vld [vmem:[#allocation19 + $0x4c0] sm:$0xff]
    %v2421 = vld [vmem:[#allocation19 + $0x4c8] sm:$0xff]
    %v2422 = vld [vmem:[#allocation19 + $0x4d0] sm:$0xff]
    %v2423 = vld [vmem:[#allocation19 + $0x4d8] sm:$0xff]
    %v2424 = vld [vmem:[#allocation19 + $0x4e0] sm:$0xff]
    %v2425 = vld [vmem:[#allocation19 + $0x4e8] sm:$0xff]
    %v2426 = vld [vmem:[#allocation19 + $0x4f0] sm:$0xff]
    %v2427 = vld [vmem:[#allocation19 + $0x4f8] sm:$0xff]
    %v2428 = vld [vmem:[#allocation19 + $0x500] sm:$0xff]
    %v2429 = vld [vmem:[#allocation19 + $0x508] sm:$0xff]
    %v2430 = vld [vmem:[#allocation19 + $0x510] sm:$0xff]
    %v2431 = vld [vmem:[#allocation19 + $0x518] sm:$0xff]
    %v2432 = vld [vmem:[#allocation19 + $0x520] sm:$0xff]
    %v2433 = vld [vmem:[#allocation19 + $0x528] sm:$0xff]
    %v2434 = vld [vmem:[#allocation19 + $0x530] sm:$0xff]
    %v2435 = vld [vmem:[#allocation19 + $0x538] sm:$0xff]
    %v2436 = vld [vmem:[#allocation19 + $0x540] sm:$0xff]
    %v2437 = vld [vmem:[#allocation19 + $0x548] sm:$0xff]
    %v2438 = vld [vmem:[#allocation19 + $0x550] sm:$0xff]
    %v2439 = vld [vmem:[#allocation19 + $0x558] sm:$0xff]
    %v2440 = vld [vmem:[#allocation19 + $0x560] sm:$0xff]
    %v2441 = vld [vmem:[#allocation19 + $0x568] sm:$0xff]
    %v2442 = vld [vmem:[#allocation19 + $0x570] sm:$0xff]
    %v2443 = vld [vmem:[#allocation19 + $0x578] sm:$0xff]
    %v2444 = vld [vmem:[#allocation19 + $0x580] sm:$0xff]
    %v2445 = vld [vmem:[#allocation19 + $0x588] sm:$0xff]
    %v2446 = vld [vmem:[#allocation19 + $0x590] sm:$0xff]
    %v2447 = vld [vmem:[#allocation19 + $0x598] sm:$0xff]
    %v2448 = vld [vmem:[#allocation19 + $0x5a0] sm:$0xff]
    %v2449 = vld [vmem:[#allocation19 + $0x5a8] sm:$0xff]
    %v2450 = vld [vmem:[#allocation19 + $0x5b0] sm:$0xff]
    %v2451 = vld [vmem:[#allocation19 + $0x5b8] sm:$0xff]
    %v2452 = vld [vmem:[#allocation19 + $0x5c0] sm:$0xff]
    %v2453 = vld [vmem:[#allocation19 + $0x5c8] sm:$0xff]
    %v2454 = vld [vmem:[#allocation19 + $0x5d0] sm:$0xff]
    %v2455 = vld [vmem:[#allocation19 + $0x5d8] sm:$0xff]
    %v2456 = vld [vmem:[#allocation19 + $0x5e0] sm:$0xff]
    %v2457 = vld [vmem:[#allocation19 + $0x5e8] sm:$0xff]
    %v2458 = vld [vmem:[#allocation19 + $0x5f0] sm:$0xff]
    %v2459 = vld [vmem:[#allocation19 + $0x5f8] sm:$0xff]
    %v2460 = vld [vmem:[#allocation19 + $0x600] sm:$0xff]
    %v2461 = vld [vmem:[#allocation19 + $0x608] sm:$0xff]
    %v2462 = vld [vmem:[#allocation19 + $0x610] sm:$0xff]
    %v2463 = vld [vmem:[#allocation19 + $0x618] sm:$0xff]
    %v2464 = vld [vmem:[#allocation19 + $0x620] sm:$0xff]
    %v2465 = vld [vmem:[#allocation19 + $0x628] sm:$0xff]
    %v2466 = vld [vmem:[#allocation19 + $0x630] sm:$0xff]
    %v2467 = vld [vmem:[#allocation19 + $0x638] sm:$0xff]
    %v2468 = vld [vmem:[#allocation19 + $0x640] sm:$0xff]
    %v2469 = vld [vmem:[#allocation19 + $0x648] sm:$0xff]
    %v2470 = vld [vmem:[#allocation19 + $0x650] sm:$0xff]
    %v2471 = vld [vmem:[#allocation19 + $0x658] sm:$0xff]
    %v2472 = vld [vmem:[#allocation19 + $0x660] sm:$0xff]
    %v2473 = vld [vmem:[#allocation19 + $0x668] sm:$0xff]
    %v2474 = vld [vmem:[#allocation19 + $0x670] sm:$0xff]
    %v2475 = vld [vmem:[#allocation19 + $0x678] sm:$0xff]
    %v2476 = vld [vmem:[#allocation19 + $0x680] sm:$0xff]
    %v2477 = vld [vmem:[#allocation19 + $0x688] sm:$0xff]
    %v2478 = vld [vmem:[#allocation19 + $0x690] sm:$0xff]
    %v2479 = vld [vmem:[#allocation19 + $0x698] sm:$0xff]
    %v2480 = vld [vmem:[#allocation19 + $0x6a0] sm:$0xff]
    %v2481 = vld [vmem:[#allocation19 + $0x6a8] sm:$0xff]
    %v2482 = vld [vmem:[#allocation19 + $0x6b0] sm:$0xff]
    %v2483 = vld [vmem:[#allocation19 + $0x6b8] sm:$0xff]
    %v2484 = vld [vmem:[#allocation19 + $0x6c0] sm:$0xff]
    %v2485 = vld [vmem:[#allocation19 + $0x6c8] sm:$0xff]
    %v2486 = vld [vmem:[#allocation19 + $0x6d0] sm:$0xff]
    %v2487 = vld [vmem:[#allocation19 + $0x6d8] sm:$0xff]
    %v2488 = vld [vmem:[#allocation19 + $0x6e0] sm:$0xff]
    %v2489 = vld [vmem:[#allocation19 + $0x6e8] sm:$0xff]
    %v2490 = vld [vmem:[#allocation19 + $0x6f0] sm:$0xff]
    %v2491 = vld [vmem:[#allocation19 + $0x6f8] sm:$0xff]
    %v2492 = vld [vmem:[#allocation19 + $0x700] sm:$0xff]
    %v2493 = vld [vmem:[#allocation19 + $0x708] sm:$0xff]
    %v2494 = vld [vmem:[#allocation19 + $0x710] sm:$0xff]
    %v2495 = vld [vmem:[#allocation19 + $0x718] sm:$0xff]
    %v2496 = vld [vmem:[#allocation19 + $0x720] sm:$0xff]
    %v2497 = vld [vmem:[#allocation19 + $0x728] sm:$0xff]
    %v2498 = vld [vmem:[#allocation19 + $0x730] sm:$0xff]
    %v2499 = vld [vmem:[#allocation19 + $0x738] sm:$0xff]
    %v2500 = vld [vmem:[#allocation19 + $0x740] sm:$0xff]
    %v2501 = vld [vmem:[#allocation19 + $0x748] sm:$0xff]
    %v2502 = vld [vmem:[#allocation19 + $0x750] sm:$0xff]
    %v2503 = vld [vmem:[#allocation19 + $0x758] sm:$0xff]
    %v2504 = vld [vmem:[#allocation19 + $0x760] sm:$0xff]
    %v2505 = vld [vmem:[#allocation19 + $0x768] sm:$0xff]
    %v2506 = vld [vmem:[#allocation19 + $0x770] sm:$0xff]
    %v2507 = vld [vmem:[#allocation19 + $0x778] sm:$0xff]
    %v2508 = vld [vmem:[#allocation19 + $0x780] sm:$0xff]
    %v2509 = vld [vmem:[#allocation19 + $0x788] sm:$0xff]
    %v2510 = vld [vmem:[#allocation19 + $0x790] sm:$0xff]
    %v2511 = vld [vmem:[#allocation19 + $0x798] sm:$0xff]
    %v2512 = vld [vmem:[#allocation19 + $0x7a0] sm:$0xff]
    %v2513 = vld [vmem:[#allocation19 + $0x7a8] sm:$0xff]
    %v2514 = vld [vmem:[#allocation19 + $0x7b0] sm:$0xff]
    %v2515 = vld [vmem:[#allocation19 + $0x7b8] sm:$0xff]
    %v2516 = vld [vmem:[#allocation19 + $0x7c0] sm:$0xff]
    %v2517 = vld [vmem:[#allocation19 + $0x7c8] sm:$0xff]
    %v2518 = vld [vmem:[#allocation19 + $0x7d0] sm:$0xff]
    %v2519 = vld [vmem:[#allocation19 + $0x7d8] sm:$0xff]
    %v2520 = vld [vmem:[#allocation19 + $0x7e0] sm:$0xff]
    %v2521 = vld [vmem:[#allocation19 + $0x7e8] sm:$0xff]
    %v2522 = vld [vmem:[#allocation19 + $0x7f0] sm:$0xff]
    %v2523 = vld [vmem:[#allocation19 + $0x7f8] sm:$0xff]
    %v2524 = vld [vmem:[#allocation19 + $0x800] sm:$0xff]
    %v2525 = vld [vmem:[#allocation19 + $0x808] sm:$0xff]
    %v2526 = vld [vmem:[#allocation19 + $0x810] sm:$0xff]
    %v2527 = vld [vmem:[#allocation19 + $0x818] sm:$0xff]
    %v2528 = vld [vmem:[#allocation19 + $0x820] sm:$0xff]
    %v2529 = vld [vmem:[#allocation19 + $0x828] sm:$0xff]
    %v2530 = vld [vmem:[#allocation19 + $0x830] sm:$0xff]
    %v2531 = vld [vmem:[#allocation19 + $0x838] sm:$0xff]
    %v2532 = vld [vmem:[#allocation19 + $0x840] sm:$0xff]
    %v2533 = vld [vmem:[#allocation19 + $0x848] sm:$0xff]
    %v2534 = vld [vmem:[#allocation19 + $0x850] sm:$0xff]
    %v2535 = vld [vmem:[#allocation19 + $0x858] sm:$0xff]
    %v2536 = vld [vmem:[#allocation19 + $0x860] sm:$0xff]
    %v2537 = vld [vmem:[#allocation19 + $0x868] sm:$0xff]
    %v2538 = vld [vmem:[#allocation19 + $0x870] sm:$0xff]
    %v2539 = vld [vmem:[#allocation19 + $0x878] sm:$0xff]
    %v2540 = vld [vmem:[#allocation19 + $0x880] sm:$0xff]
    %v2541 = vld [vmem:[#allocation19 + $0x888] sm:$0xff]
    %v2542 = vld [vmem:[#allocation19 + $0x890] sm:$0xff]
    %v2543 = vld [vmem:[#allocation19 + $0x898] sm:$0xff]
    %v2544 = vld [vmem:[#allocation19 + $0x8a0] sm:$0xff]
    %v2545 = vld [vmem:[#allocation19 + $0x8a8] sm:$0xff]
    %v2546 = vld [vmem:[#allocation19 + $0x8b0] sm:$0xff]
    %v2547 = vld [vmem:[#allocation19 + $0x8b8] sm:$0xff]
    %v2548 = vld [vmem:[#allocation19 + $0x8c0] sm:$0xff]
    %v2549 = vld [vmem:[#allocation19 + $0x8c8] sm:$0xff]
    %v2550 = vld [vmem:[#allocation19 + $0x8d0] sm:$0xff]
    %v2551 = vld [vmem:[#allocation19 + $0x8d8] sm:$0xff]
    %v2552 = vld [vmem:[#allocation19 + $0x8e0] sm:$0xff]
    %v2553 = vld [vmem:[#allocation19 + $0x8e8] sm:$0xff]
    %v2554 = vld [vmem:[#allocation19 + $0x8f0] sm:$0xff]
    %v2555 = vld [vmem:[#allocation19 + $0x8f8] sm:$0xff]
    %v2556 = vld [vmem:[#allocation19 + $0x900] sm:$0xff]
    %v2557 = vld [vmem:[#allocation19 + $0x908] sm:$0xff]
    %v2558 = vld [vmem:[#allocation19 + $0x910] sm:$0xff]
    %v2559 = vld [vmem:[#allocation19 + $0x918] sm:$0xff]
    %v2560 = vld [vmem:[#allocation19 + $0x920] sm:$0xff]
    %v2561 = vld [vmem:[#allocation19 + $0x928] sm:$0xff]
    %v2562 = vld [vmem:[#allocation19 + $0x930] sm:$0xff]
    %v2563 = vld [vmem:[#allocation19 + $0x938] sm:$0xff]
    %v2564 = vld [vmem:[#allocation19 + $0x940] sm:$0xff]
    %v2565 = vld [vmem:[#allocation19 + $0x948] sm:$0xff]
    %v2566 = vld [vmem:[#allocation19 + $0x950] sm:$0xff]
    %v2567 = vld [vmem:[#allocation19 + $0x958] sm:$0xff]
    %v2568 = vld [vmem:[#allocation19 + $0x960] sm:$0xff]
    %v2569 = vld [vmem:[#allocation19 + $0x968] sm:$0xff]
    %v2570 = vld [vmem:[#allocation19 + $0x970] sm:$0xff]
    %v2571 = vld [vmem:[#allocation19 + $0x978] sm:$0xff]
    %v2572 = vld [vmem:[#allocation19 + $0x980] sm:$0xff]
    %v2573 = vld [vmem:[#allocation19 + $0x988] sm:$0xff]
    %v2574 = vld [vmem:[#allocation19 + $0x990] sm:$0xff]
    %v2575 = vld [vmem:[#allocation19 + $0x998] sm:$0xff]
    %v2576 = vld [vmem:[#allocation19 + $0x9a0] sm:$0xff]
    %v2577 = vld [vmem:[#allocation19 + $0x9a8] sm:$0xff]
    %v2578 = vld [vmem:[#allocation19 + $0x9b0] sm:$0xff]
    %v2579 = vld [vmem:[#allocation19 + $0x9b8] sm:$0xff]
    %v2580 = vld [vmem:[#allocation19 + $0x9c0] sm:$0xff]
    %v2581 = vld [vmem:[#allocation19 + $0x9c8] sm:$0xff]
    %v2582 = vld [vmem:[#allocation19 + $0x9d0] sm:$0xff]
    %v2583 = vld [vmem:[#allocation19 + $0x9d8] sm:$0xff]
    %v2584 = vld [vmem:[#allocation19 + $0x9e0] sm:$0xff]
    %v2585 = vld [vmem:[#allocation19 + $0x9e8] sm:$0xff]
    %v2586 = vld [vmem:[#allocation19 + $0x9f0] sm:$0xff]
    %v2587 = vld [vmem:[#allocation19 + $0x9f8] sm:$0xff]
    %v2588 = vld [vmem:[#allocation19 + $0xa00] sm:$0xff]
    %v2589 = vld [vmem:[#allocation19 + $0xa08] sm:$0xff]
    %v2590 = vld [vmem:[#allocation19 + $0xa10] sm:$0xff]
    %v2591 = vld [vmem:[#allocation19 + $0xa18] sm:$0xff]
    %v2592 = vld [vmem:[#allocation19 + $0xa20] sm:$0xff]
    %v2593 = vld [vmem:[#allocation19 + $0xa28] sm:$0xff]
    %v2594 = vld [vmem:[#allocation19 + $0xa30] sm:$0xff]
    %v2595 = vld [vmem:[#allocation19 + $0xa38] sm:$0xff]
    %v2596 = vld [vmem:[#allocation19 + $0xa40] sm:$0xff]
    %v2597 = vld [vmem:[#allocation19 + $0xa48] sm:$0xff]
    %v2598 = vld [vmem:[#allocation19 + $0xa50] sm:$0xff]
    %v2599 = vld [vmem:[#allocation19 + $0xa58] sm:$0xff]
    %v2600 = vld [vmem:[#allocation19 + $0xa60] sm:$0xff]
    %v2601 = vld [vmem:[#allocation19 + $0xa68] sm:$0xff]
    %v2602 = vld [vmem:[#allocation19 + $0xa70] sm:$0xff]
    %v2603 = vld [vmem:[#allocation19 + $0xa78] sm:$0xff]
    %v2604 = vld [vmem:[#allocation19 + $0xa80] sm:$0xff]
    %v2605 = vld [vmem:[#allocation19 + $0xa88] sm:$0xff]
    %v2606 = vld [vmem:[#allocation19 + $0xa90] sm:$0xff]
    %v2607 = vld [vmem:[#allocation19 + $0xa98] sm:$0xff]
    %v2608 = vld [vmem:[#allocation19 + $0xaa0] sm:$0xff]
    %v2609 = vld [vmem:[#allocation19 + $0xaa8] sm:$0xff]
    %v2610 = vld [vmem:[#allocation19 + $0xab0] sm:$0xff]
    %v2611 = vld [vmem:[#allocation19 + $0xab8] sm:$0xff]
    %v2612 = vld [vmem:[#allocation19 + $0xac0] sm:$0xff]
    %v2613 = vld [vmem:[#allocation19 + $0xac8] sm:$0xff]
    %v2614 = vld [vmem:[#allocation19 + $0xad0] sm:$0xff]
    %v2615 = vld [vmem:[#allocation19 + $0xad8] sm:$0xff]
    %v2616 = vld [vmem:[#allocation19 + $0xae0] sm:$0xff]
    %v2617 = vld [vmem:[#allocation19 + $0xae8] sm:$0xff]
    %v2618 = vld [vmem:[#allocation19 + $0xaf0] sm:$0xff]
    %v2619 = vld [vmem:[#allocation19 + $0xaf8] sm:$0xff]
    %v2620 = vld [vmem:[#allocation19 + $0xb00] sm:$0xff]
    %v2621 = vld [vmem:[#allocation19 + $0xb08] sm:$0xff]
    %v2622 = vld [vmem:[#allocation19 + $0xb10] sm:$0xff]
    %v2623 = vld [vmem:[#allocation19 + $0xb18] sm:$0xff]
    %v2624 = vld [vmem:[#allocation19 + $0xb20] sm:$0xff]
    %v2625 = vld [vmem:[#allocation19 + $0xb28] sm:$0xff]
    %v2626 = vld [vmem:[#allocation19 + $0xb30] sm:$0xff]
    %v2627 = vld [vmem:[#allocation19 + $0xb38] sm:$0xff]
    %v2628 = vld [vmem:[#allocation19 + $0xb40] sm:$0xff]
    %v2629 = vld [vmem:[#allocation19 + $0xb48] sm:$0xff]
    %v2630 = vld [vmem:[#allocation19 + $0xb50] sm:$0xff]
    %v2631 = vld [vmem:[#allocation19 + $0xb58] sm:$0xff]
    %v2632 = vld [vmem:[#allocation19 + $0xb60] sm:$0xff]
    %v2633 = vld [vmem:[#allocation19 + $0xb68] sm:$0xff]
    %v2634 = vld [vmem:[#allocation19 + $0xb70] sm:$0xff]
    %v2635 = vld [vmem:[#allocation19 + $0xb78] sm:$0xff]
    %v2636 = vld [vmem:[#allocation19 + $0xb80] sm:$0xff]
    %v2637 = vld [vmem:[#allocation19 + $0xb88] sm:$0xff]
    %v2638 = vld [vmem:[#allocation19 + $0xb90] sm:$0xff]
    %v2639 = vld [vmem:[#allocation19 + $0xb98] sm:$0xff]
    %v2640 = vld [vmem:[#allocation19 + $0xba0] sm:$0xff]
    %v2641 = vld [vmem:[#allocation19 + $0xba8] sm:$0xff]
    %v2642 = vld [vmem:[#allocation19 + $0xbb0] sm:$0xff]
    %v2643 = vld [vmem:[#allocation19 + $0xbb8] sm:$0xff]
    %v2644 = vld [vmem:[#allocation19 + $0xbc0] sm:$0xff]
    %v2645 = vld [vmem:[#allocation19 + $0xbc8] sm:$0xff]
    %v2646 = vld [vmem:[#allocation19 + $0xbd0] sm:$0xff]
    %v2647 = vld [vmem:[#allocation19 + $0xbd8] sm:$0xff]
    %v2648 = vld [vmem:[#allocation19 + $0xbe0] sm:$0xff]
    %v2649 = vld [vmem:[#allocation19 + $0xbe8] sm:$0xff]
    %v2650 = vld [vmem:[#allocation19 + $0xbf0] sm:$0xff]
    %v2651 = vld [vmem:[#allocation19 + $0xbf8] sm:$0xff]
    %v2652 = vld [vmem:[#allocation19 + $0xc00] sm:$0xff]
    %v2653 = vld [vmem:[#allocation19 + $0xc08] sm:$0xff]
    %v2654 = vld [vmem:[#allocation19 + $0xc10] sm:$0xff]
    %v2655 = vld [vmem:[#allocation19 + $0xc18] sm:$0xff]
    %v2656 = vld [vmem:[#allocation19 + $0xc20] sm:$0xff]
    %v2657 = vld [vmem:[#allocation19 + $0xc28] sm:$0xff]
    %v2658 = vld [vmem:[#allocation19 + $0xc30] sm:$0xff]
    %v2659 = vld [vmem:[#allocation19 + $0xc38] sm:$0xff]
    %v2660 = vld [vmem:[#allocation19 + $0xc40] sm:$0xff]
    %v2661 = vld [vmem:[#allocation19 + $0xc48] sm:$0xff]
    %v2662 = vld [vmem:[#allocation19 + $0xc50] sm:$0xff]
    %v2663 = vld [vmem:[#allocation19 + $0xc58] sm:$0xff]
    %v2664 = vld [vmem:[#allocation19 + $0xc60] sm:$0xff]
    %v2665 = vld [vmem:[#allocation19 + $0xc68] sm:$0xff]
    %v2666 = vld [vmem:[#allocation19 + $0xc70] sm:$0xff]
    %v2667 = vld [vmem:[#allocation19 + $0xc78] sm:$0xff]
    %v2668 = vld [vmem:[#allocation19 + $0xc80] sm:$0xff]
    %v2669 = vld [vmem:[#allocation19 + $0xc88] sm:$0xff]
    %v2670 = vld [vmem:[#allocation19 + $0xc90] sm:$0xff]
    %v2671 = vld [vmem:[#allocation19 + $0xc98] sm:$0xff]
    %v2672 = vld [vmem:[#allocation19 + $0xca0] sm:$0xff]
    %v2673 = vld [vmem:[#allocation19 + $0xca8] sm:$0xff]
    %v2674 = vld [vmem:[#allocation19 + $0xcb0] sm:$0xff]
    %v2675 = vld [vmem:[#allocation19 + $0xcb8] sm:$0xff]
    %v2676 = vld [vmem:[#allocation19 + $0xcc0] sm:$0xff]
    %v2677 = vld [vmem:[#allocation19 + $0xcc8] sm:$0xff]
    %v2678 = vld [vmem:[#allocation19 + $0xcd0] sm:$0xff]
    %v2679 = vld [vmem:[#allocation19 + $0xcd8] sm:$0xff]
    %v2680 = vld [vmem:[#allocation19 + $0xce0] sm:$0xff]
    %v2681 = vld [vmem:[#allocation19 + $0xce8] sm:$0xff]
    %v2682 = vld [vmem:[#allocation19 + $0xcf0] sm:$0xff]
    %v2683 = vld [vmem:[#allocation19 + $0xcf8] sm:$0xff]
    %v2684 = vld [vmem:[#allocation19 + $0xd00] sm:$0xff]
    %v2685 = vld [vmem:[#allocation19 + $0xd08] sm:$0xff]
    %v2686 = vld [vmem:[#allocation19 + $0xd10] sm:$0xff]
    %v2687 = vld [vmem:[#allocation19 + $0xd18] sm:$0xff]
    %v2688 = vld [vmem:[#allocation19 + $0xd20] sm:$0xff]
    %v2689 = vld [vmem:[#allocation19 + $0xd28] sm:$0xff]
    %v2690 = vld [vmem:[#allocation19 + $0xd30] sm:$0xff]
    %v2691 = vld [vmem:[#allocation19 + $0xd38] sm:$0xff]
    %v2692 = vld [vmem:[#allocation19 + $0xd40] sm:$0xff]
    %v2693 = vld [vmem:[#allocation19 + $0xd48] sm:$0xff]
    %v2694 = vld [vmem:[#allocation19 + $0xd50] sm:$0xff]
    %v2695 = vld [vmem:[#allocation19 + $0xd58] sm:$0xff]
    %v2696 = vld [vmem:[#allocation19 + $0xd60] sm:$0xff]
    %v2697 = vld [vmem:[#allocation19 + $0xd68] sm:$0xff]
    %v2698 = vld [vmem:[#allocation19 + $0xd70] sm:$0xff]
    %v2699 = vld [vmem:[#allocation19 + $0xd78] sm:$0xff]
    %v2700 = vld [vmem:[#allocation19 + $0xd80] sm:$0xff]
    %v2701 = vld [vmem:[#allocation19 + $0xd88] sm:$0xff]
    %v2702 = vld [vmem:[#allocation19 + $0xd90] sm:$0xff]
    %v2703 = vld [vmem:[#allocation19 + $0xd98] sm:$0xff]
    %v2704 = vld [vmem:[#allocation19 + $0xda0] sm:$0xff]
    %v2705 = vld [vmem:[#allocation19 + $0xda8] sm:$0xff]
    %v2706 = vld [vmem:[#allocation19 + $0xdb0] sm:$0xff]
    %v2707 = vld [vmem:[#allocation19 + $0xdb8] sm:$0xff]
    %v2708 = vld [vmem:[#allocation19 + $0xdc0] sm:$0xff]
    %v2709 = vld [vmem:[#allocation19 + $0xdc8] sm:$0xff]
    %v2710 = vld [vmem:[#allocation19 + $0xdd0] sm:$0xff]
    %v2711 = vld [vmem:[#allocation19 + $0xdd8] sm:$0xff]
    %v2712 = vld [vmem:[#allocation19 + $0xde0] sm:$0xff]
    %v2713 = vld [vmem:[#allocation19 + $0xde8] sm:$0xff]
    %v2714 = vld [vmem:[#allocation19 + $0xdf0] sm:$0xff]
    %v2715 = vld [vmem:[#allocation19 + $0xdf8] sm:$0xff]
    %v2716 = vld [vmem:[#allocation19 + $0xe00] sm:$0xff]
    %v2717 = vld [vmem:[#allocation19 + $0xe08] sm:$0xff]
    %v2718 = vld [vmem:[#allocation19 + $0xe10] sm:$0xff]
    %v2719 = vld [vmem:[#allocation19 + $0xe18] sm:$0xff]
    %v2720 = vld [vmem:[#allocation19 + $0xe20] sm:$0xff]
    %v2721 = vld [vmem:[#allocation19 + $0xe28] sm:$0xff]
    %v2722 = vld [vmem:[#allocation19 + $0xe30] sm:$0xff]
    %v2723 = vld [vmem:[#allocation19 + $0xe38] sm:$0xff]
    %v2724 = vld [vmem:[#allocation19 + $0xe40] sm:$0xff]
    %v2725 = vld [vmem:[#allocation19 + $0xe48] sm:$0xff]
    %v2726 = vld [vmem:[#allocation19 + $0xe50] sm:$0xff]
    %v2727 = vld [vmem:[#allocation19 + $0xe58] sm:$0xff]
    %v2728 = vld [vmem:[#allocation19 + $0xe60] sm:$0xff]
    %v2729 = vld [vmem:[#allocation19 + $0xe68] sm:$0xff]
    %v2730 = vld [vmem:[#allocation19 + $0xe70] sm:$0xff]
    %v2731 = vld [vmem:[#allocation19 + $0xe78] sm:$0xff]
    %v2732 = vld [vmem:[#allocation19 + $0xe80] sm:$0xff]
    %v2733 = vld [vmem:[#allocation19 + $0xe88] sm:$0xff]
    %v2734 = vld [vmem:[#allocation19 + $0xe90] sm:$0xff]
    %v2735 = vld [vmem:[#allocation19 + $0xe98] sm:$0xff]
    %v2736 = vld [vmem:[#allocation19 + $0xea0] sm:$0xff]
    %v2737 = vld [vmem:[#allocation19 + $0xea8] sm:$0xff]
    %v2738 = vld [vmem:[#allocation19 + $0xeb0] sm:$0xff]
    %v2739 = vld [vmem:[#allocation19 + $0xeb8] sm:$0xff]
    %v2740 = vld [vmem:[#allocation19 + $0xec0] sm:$0xff]
    %v2741 = vld [vmem:[#allocation19 + $0xec8] sm:$0xff]
    %v2742 = vld [vmem:[#allocation19 + $0xed0] sm:$0xff]
    %v2743 = vld [vmem:[#allocation19 + $0xed8] sm:$0xff]
    %v2744 = vld [vmem:[#allocation19 + $0xee0] sm:$0xff]
    %v2745 = vld [vmem:[#allocation19 + $0xee8] sm:$0xff]
    %v2746 = vld [vmem:[#allocation19 + $0xef0] sm:$0xff]
    %v2747 = vld [vmem:[#allocation19 + $0xef8] sm:$0xff]
    %v2748 = vld [vmem:[#allocation19 + $0xf00] sm:$0xff]
    %v2749 = vld [vmem:[#allocation19 + $0xf08] sm:$0xff]
    %v2750 = vld [vmem:[#allocation19 + $0xf10] sm:$0xff]
    %v2751 = vld [vmem:[#allocation19 + $0xf18] sm:$0xff]
    %v2752 = vld [vmem:[#allocation19 + $0xf20] sm:$0xff]
    %v2753 = vld [vmem:[#allocation19 + $0xf28] sm:$0xff]
    %v2754 = vld [vmem:[#allocation19 + $0xf30] sm:$0xff]
    %v2755 = vld [vmem:[#allocation19 + $0xf38] sm:$0xff]
    %v2756 = vld [vmem:[#allocation19 + $0xf40] sm:$0xff]
    %v2757 = vld [vmem:[#allocation19 + $0xf48] sm:$0xff]
    %v2758 = vld [vmem:[#allocation19 + $0xf50] sm:$0xff]
    %v2759 = vld [vmem:[#allocation19 + $0xf58] sm:$0xff]
    %v2760 = vld [vmem:[#allocation19 + $0xf60] sm:$0xff]
    %v2761 = vld [vmem:[#allocation19 + $0xf68] sm:$0xff]
    %v2762 = vld [vmem:[#allocation19 + $0xf70] sm:$0xff]
    %v2763 = vld [vmem:[#allocation19 + $0xf78] sm:$0xff]
    %v2764 = vld [vmem:[#allocation19 + $0xf80] sm:$0xff]
    %v2765 = vld [vmem:[#allocation19 + $0xf88] sm:$0xff]
    %v2766 = vld [vmem:[#allocation19 + $0xf90] sm:$0xff]
    %v2767 = vld [vmem:[#allocation19 + $0xf98] sm:$0xff]
    %v2768 = vld [vmem:[#allocation19 + $0xfa0] sm:$0xff]
    %v2769 = vld [vmem:[#allocation19 + $0xfa8] sm:$0xff]
    %v2770 = vld [vmem:[#allocation19 + $0xfb0] sm:$0xff]
    %v2771 = vld [vmem:[#allocation19 + $0xfb8] sm:$0xff]
    %v2772 = vld [vmem:[#allocation19 + $0xfc0] sm:$0xff]
    %v2773 = vld [vmem:[#allocation19 + $0xfc8] sm:$0xff]
    %v2774 = vld [vmem:[#allocation19 + $0xfd0] sm:$0xff]
    %v2775 = vld [vmem:[#allocation19 + $0xfd8] sm:$0xff]
    %v2776 = vld [vmem:[#allocation19 + $0xfe0] sm:$0xff]
    %v2777 = vld [vmem:[#allocation19 + $0xfe8] sm:$0xff]
    %v2778 = vld [vmem:[#allocation19 + $0xff0] sm:$0xff]
    %v2779 = vld [vmem:[#allocation19 + $0xff8] sm:$0xff]
    %v2780 = vld [vmem:[#allocation21] sm:$0xff]
    %v2781 = vld [vmem:[#allocation21 + $0x8] sm:$0xff]
    %v2784 = vlaneseq
    %v2785 = vshrl.u32 %v2784, 7
    %v2786 = vsub.s32 0, %v2785
    %v2787 = vrot.slane %v2780, %v2786
    %v2788 = vlaneseq
    %v2789 = vshrl.u32 %v2788, 7
    %v2790 = vsub.s32 1, %v2789
    %v2791 = vrot.slane %v2780, %v2790
    %v2792 = vlaneseq
    %v2793 = vshrl.u32 %v2792, 7
    %v2794 = vsub.s32 2, %v2793
    %v2795 = vrot.slane %v2780, %v2794
    %v2796 = vlaneseq
    %v2797 = vshrl.u32 %v2796, 7
    %v2798 = vsub.s32 3, %v2797
    %v2799 = vrot.slane %v2780, %v2798
    %v2800 = vlaneseq
    %v2801 = vshrl.u32 %v2800, 7
    %v2802 = vsub.s32 4, %v2801
    %v2803 = vrot.slane %v2780, %v2802
    %v2804 = vlaneseq
    %v2805 = vshrl.u32 %v2804, 7
    %v2806 = vsub.s32 5, %v2805
    %v2807 = vrot.slane %v2780, %v2806
    %v2808 = vlaneseq
    %v2809 = vshrl.u32 %v2808, 7
    %v2810 = vsub.s32 6, %v2809
    %v2811 = vrot.slane %v2780, %v2810
    %v2812 = vlaneseq
    %v2813 = vshrl.u32 %v2812, 7
    %v2814 = vsub.s32 7, %v2813
    %v2815 = vrot.slane %v2780, %v2814
    %v2816 = vlaneseq
    %v2817 = vshrl.u32 %v2816, 7
    %v2818 = vsub.s32 0, %v2817
    %v2819 = vrot.slane %v2781, %v2818
    %v2820 = vlaneseq
    %v2821 = vshrl.u32 %v2820, 7
    %v2822 = vsub.s32 1, %v2821
    %v2823 = vrot.slane %v2781, %v2822
    %v2824 = vlaneseq
    %v2825 = vshrl.u32 %v2824, 7
    %v2826 = vsub.s32 2, %v2825
    %v2827 = vrot.slane %v2781, %v2826
    %v2828 = vlaneseq
    %v2829 = vshrl.u32 %v2828, 7
    %v2830 = vsub.s32 3, %v2829
    %v2831 = vrot.slane %v2781, %v2830
    %v2832 = vlaneseq
    %v2833 = vshrl.u32 %v2832, 7
    %v2834 = vsub.s32 4, %v2833
    %v2835 = vrot.slane %v2781, %v2834
    %v2836 = vlaneseq
    %v2837 = vshrl.u32 %v2836, 7
    %v2838 = vsub.s32 5, %v2837
    %v2839 = vrot.slane %v2781, %v2838
    %v2840 = vlaneseq
    %v2841 = vshrl.u32 %v2840, 7
    %v2842 = vsub.s32 6, %v2841
    %v2843 = vrot.slane %v2781, %v2842
    %v2844 = vlaneseq
    %v2845 = vshrl.u32 %v2844, 7
    %v2846 = vsub.s32 7, %v2845
    %v2847 = vrot.slane %v2781, %v2846
    %v3376 = vunpack.c.l.b16 %v2268
    %v3377 = vunpack.c.h.b16 %v2268
    %v3378 = vunpack.c.l.b16 %v2269
    %v3379 = vunpack.c.h.b16 %v2269
    %v3380 = vunpack.c.l.b16 %v2270
    %v3381 = vunpack.c.h.b16 %v2270
    %v3382 = vunpack.c.l.b16 %v2271
    %v3383 = vunpack.c.h.b16 %v2271
    %v3384 = vunpack.c.l.b16 %v2272
    %v3385 = vunpack.c.h.b16 %v2272
    %v3386 = vunpack.c.l.b16 %v2273
    %v3387 = vunpack.c.h.b16 %v2273
    %v3388 = vunpack.c.l.b16 %v2274
    %v3389 = vunpack.c.h.b16 %v2274
    %v3390 = vunpack.c.l.b16 %v2275
    %v3391 = vunpack.c.h.b16 %v2275
    %v3392 = vunpack.c.l.b16 %v2276
    %v3393 = vunpack.c.h.b16 %v2276
    %v3394 = vunpack.c.l.b16 %v2277
    %v3395 = vunpack.c.h.b16 %v2277
    %v3396 = vunpack.c.l.b16 %v2278
    %v3397 = vunpack.c.h.b16 %v2278
    %v3398 = vunpack.c.l.b16 %v2279
    %v3399 = vunpack.c.h.b16 %v2279
    %v3400 = vunpack.c.l.b16 %v2280
    %v3401 = vunpack.c.h.b16 %v2280
    %v3402 = vunpack.c.l.b16 %v2281
    %v3403 = vunpack.c.h.b16 %v2281
    %v3404 = vunpack.c.l.b16 %v2282
    %v3405 = vunpack.c.h.b16 %v2282
    %v3406 = vunpack.c.l.b16 %v2283
    %v3407 = vunpack.c.h.b16 %v2283
    %v3408 = vunpack.c.l.b16 %v2284
    %v3409 = vunpack.c.h.b16 %v2284
    %v3410 = vunpack.c.l.b16 %v2285
    %v3411 = vunpack.c.h.b16 %v2285
    %v3412 = vunpack.c.l.b16 %v2286
    %v3413 = vunpack.c.h.b16 %v2286
    %v3414 = vunpack.c.l.b16 %v2287
    %v3415 = vunpack.c.h.b16 %v2287
    %v3416 = vunpack.c.l.b16 %v2288
    %v3417 = vunpack.c.h.b16 %v2288
    %v3418 = vunpack.c.l.b16 %v2289
    %v3419 = vunpack.c.h.b16 %v2289
    %v3420 = vunpack.c.l.b16 %v2290
    %v3421 = vunpack.c.h.b16 %v2290
    %v3422 = vunpack.c.l.b16 %v2291
    %v3423 = vunpack.c.h.b16 %v2291
    %v3424 = vunpack.c.l.b16 %v2292
    %v3425 = vunpack.c.h.b16 %v2292
    %v3426 = vunpack.c.l.b16 %v2293
    %v3427 = vunpack.c.h.b16 %v2293
    %v3428 = vunpack.c.l.b16 %v2294
    %v3429 = vunpack.c.h.b16 %v2294
    %v3430 = vunpack.c.l.b16 %v2295
    %v3431 = vunpack.c.h.b16 %v2295
    %v3432 = vunpack.c.l.b16 %v2296
    %v3433 = vunpack.c.h.b16 %v2296
    %v3434 = vunpack.c.l.b16 %v2297
    %v3435 = vunpack.c.h.b16 %v2297
    %v3436 = vunpack.c.l.b16 %v2298
    %v3437 = vunpack.c.h.b16 %v2298
    %v3438 = vunpack.c.l.b16 %v2299
    %v3439 = vunpack.c.h.b16 %v2299
    %v3440 = vunpack.c.l.b16 %v2300
    %v3441 = vunpack.c.h.b16 %v2300
    %v3442 = vunpack.c.l.b16 %v2301
    %v3443 = vunpack.c.h.b16 %v2301
    %v3444 = vunpack.c.l.b16 %v2302
    %v3445 = vunpack.c.h.b16 %v2302
    %v3446 = vunpack.c.l.b16 %v2303
    %v3447 = vunpack.c.h.b16 %v2303
    %v3448 = vunpack.c.l.b16 %v2304
    %v3449 = vunpack.c.h.b16 %v2304
    %v3450 = vunpack.c.l.b16 %v2305
    %v3451 = vunpack.c.h.b16 %v2305
    %v3452 = vunpack.c.l.b16 %v2306
    %v3453 = vunpack.c.h.b16 %v2306
    %v3454 = vunpack.c.l.b16 %v2307
    %v3455 = vunpack.c.h.b16 %v2307
    %v3456 = vunpack.c.l.b16 %v2308
    %v3457 = vunpack.c.h.b16 %v2308
    %v3458 = vunpack.c.l.b16 %v2309
    %v3459 = vunpack.c.h.b16 %v2309
    %v3460 = vunpack.c.l.b16 %v2310
    %v3461 = vunpack.c.h.b16 %v2310
    %v3462 = vunpack.c.l.b16 %v2311
    %v3463 = vunpack.c.h.b16 %v2311
    %v3464 = vunpack.c.l.b16 %v2312
    %v3465 = vunpack.c.h.b16 %v2312
    %v3466 = vunpack.c.l.b16 %v2313
    %v3467 = vunpack.c.h.b16 %v2313
    %v3468 = vunpack.c.l.b16 %v2314
    %v3469 = vunpack.c.h.b16 %v2314
    %v3470 = vunpack.c.l.b16 %v2315
    %v3471 = vunpack.c.h.b16 %v2315
    %v3472 = vunpack.c.l.b16 %v2316
    %v3473 = vunpack.c.h.b16 %v2316
    %v3474 = vunpack.c.l.b16 %v2317
    %v3475 = vunpack.c.h.b16 %v2317
    %v3476 = vunpack.c.l.b16 %v2318
    %v3477 = vunpack.c.h.b16 %v2318
    %v3478 = vunpack.c.l.b16 %v2319
    %v3479 = vunpack.c.h.b16 %v2319
    %v3480 = vunpack.c.l.b16 %v2320
    %v3481 = vunpack.c.h.b16 %v2320
    %v3482 = vunpack.c.l.b16 %v2321
    %v3483 = vunpack.c.h.b16 %v2321
    %v3484 = vunpack.c.l.b16 %v2322
    %v3485 = vunpack.c.h.b16 %v2322
    %v3486 = vunpack.c.l.b16 %v2323
    %v3487 = vunpack.c.h.b16 %v2323
    %v3488 = vunpack.c.l.b16 %v2324
    %v3489 = vunpack.c.h.b16 %v2324
    %v3490 = vunpack.c.l.b16 %v2325
    %v3491 = vunpack.c.h.b16 %v2325
    %v3492 = vunpack.c.l.b16 %v2326
    %v3493 = vunpack.c.h.b16 %v2326
    %v3494 = vunpack.c.l.b16 %v2327
    %v3495 = vunpack.c.h.b16 %v2327
    %v3496 = vunpack.c.l.b16 %v2328
    %v3497 = vunpack.c.h.b16 %v2328
    %v3498 = vunpack.c.l.b16 %v2329
    %v3499 = vunpack.c.h.b16 %v2329
    %v3500 = vunpack.c.l.b16 %v2330
    %v3501 = vunpack.c.h.b16 %v2330
    %v3502 = vunpack.c.l.b16 %v2331
    %v3503 = vunpack.c.h.b16 %v2331
    %v3504 = vunpack.c.l.b16 %v2332
    %v3505 = vunpack.c.h.b16 %v2332
    %v3506 = vunpack.c.l.b16 %v2333
    %v3507 = vunpack.c.h.b16 %v2333
    %v3508 = vunpack.c.l.b16 %v2334
    %v3509 = vunpack.c.h.b16 %v2334
    %v3510 = vunpack.c.l.b16 %v2335
    %v3511 = vunpack.c.h.b16 %v2335
    %v3512 = vunpack.c.l.b16 %v2336
    %v3513 = vunpack.c.h.b16 %v2336
    %v3514 = vunpack.c.l.b16 %v2337
    %v3515 = vunpack.c.h.b16 %v2337
    %v3516 = vunpack.c.l.b16 %v2338
    %v3517 = vunpack.c.h.b16 %v2338
    %v3518 = vunpack.c.l.b16 %v2339
    %v3519 = vunpack.c.h.b16 %v2339
    %v3520 = vunpack.c.l.b16 %v2340
    %v3521 = vunpack.c.h.b16 %v2340
    %v3522 = vunpack.c.l.b16 %v2341
    %v3523 = vunpack.c.h.b16 %v2341
    %v3524 = vunpack.c.l.b16 %v2342
    %v3525 = vunpack.c.h.b16 %v2342
    %v3526 = vunpack.c.l.b16 %v2343
    %v3527 = vunpack.c.h.b16 %v2343
    %v3528 = vunpack.c.l.b16 %v2344
    %v3529 = vunpack.c.h.b16 %v2344
    %v3530 = vunpack.c.l.b16 %v2345
    %v3531 = vunpack.c.h.b16 %v2345
    %v3532 = vunpack.c.l.b16 %v2346
    %v3533 = vunpack.c.h.b16 %v2346
    %v3534 = vunpack.c.l.b16 %v2347
    %v3535 = vunpack.c.h.b16 %v2347
    %v3536 = vunpack.c.l.b16 %v2348
    %v3537 = vunpack.c.h.b16 %v2348
    %v3538 = vunpack.c.l.b16 %v2349
    %v3539 = vunpack.c.h.b16 %v2349
    %v3540 = vunpack.c.l.b16 %v2350
    %v3541 = vunpack.c.h.b16 %v2350
    %v3542 = vunpack.c.l.b16 %v2351
    %v3543 = vunpack.c.h.b16 %v2351
    %v3544 = vunpack.c.l.b16 %v2352
    %v3545 = vunpack.c.h.b16 %v2352
    %v3546 = vunpack.c.l.b16 %v2353
    %v3547 = vunpack.c.h.b16 %v2353
    %v3548 = vunpack.c.l.b16 %v2354
    %v3549 = vunpack.c.h.b16 %v2354
    %v3550 = vunpack.c.l.b16 %v2355
    %v3551 = vunpack.c.h.b16 %v2355
    %v3552 = vunpack.c.l.b16 %v2356
    %v3553 = vunpack.c.h.b16 %v2356
    %v3554 = vunpack.c.l.b16 %v2357
    %v3555 = vunpack.c.h.b16 %v2357
    %v3556 = vunpack.c.l.b16 %v2358
    %v3557 = vunpack.c.h.b16 %v2358
    %v3558 = vunpack.c.l.b16 %v2359
    %v3559 = vunpack.c.h.b16 %v2359
    %v3560 = vunpack.c.l.b16 %v2360
    %v3561 = vunpack.c.h.b16 %v2360
    %v3562 = vunpack.c.l.b16 %v2361
    %v3563 = vunpack.c.h.b16 %v2361
    %v3564 = vunpack.c.l.b16 %v2362
    %v3565 = vunpack.c.h.b16 %v2362
    %v3566 = vunpack.c.l.b16 %v2363
    %v3567 = vunpack.c.h.b16 %v2363
    %v3568 = vunpack.c.l.b16 %v2364
    %v3569 = vunpack.c.h.b16 %v2364
    %v3570 = vunpack.c.l.b16 %v2365
    %v3571 = vunpack.c.h.b16 %v2365
    %v3572 = vunpack.c.l.b16 %v2366
    %v3573 = vunpack.c.h.b16 %v2366
    %v3574 = vunpack.c.l.b16 %v2367
    %v3575 = vunpack.c.h.b16 %v2367
    %v3576 = vunpack.c.l.b16 %v2368
    %v3577 = vunpack.c.h.b16 %v2368
    %v3578 = vunpack.c.l.b16 %v2369
    %v3579 = vunpack.c.h.b16 %v2369
    %v3580 = vunpack.c.l.b16 %v2370
    %v3581 = vunpack.c.h.b16 %v2370
    %v3582 = vunpack.c.l.b16 %v2371
    %v3583 = vunpack.c.h.b16 %v2371
    %v3584 = vunpack.c.l.b16 %v2372
    %v3585 = vunpack.c.h.b16 %v2372
    %v3586 = vunpack.c.l.b16 %v2373
    %v3587 = vunpack.c.h.b16 %v2373
    %v3588 = vunpack.c.l.b16 %v2374
    %v3589 = vunpack.c.h.b16 %v2374
    %v3590 = vunpack.c.l.b16 %v2375
    %v3591 = vunpack.c.h.b16 %v2375
    %v3592 = vunpack.c.l.b16 %v2376
    %v3593 = vunpack.c.h.b16 %v2376
    %v3594 = vunpack.c.l.b16 %v2377
    %v3595 = vunpack.c.h.b16 %v2377
    %v3596 = vunpack.c.l.b16 %v2378
    %v3597 = vunpack.c.h.b16 %v2378
    %v3598 = vunpack.c.l.b16 %v2379
    %v3599 = vunpack.c.h.b16 %v2379
    %v3600 = vunpack.c.l.b16 %v2380
    %v3601 = vunpack.c.h.b16 %v2380
    %v3602 = vunpack.c.l.b16 %v2381
    %v3603 = vunpack.c.h.b16 %v2381
    %v3604 = vunpack.c.l.b16 %v2382
    %v3605 = vunpack.c.h.b16 %v2382
    %v3606 = vunpack.c.l.b16 %v2383
    %v3607 = vunpack.c.h.b16 %v2383
    %v3608 = vunpack.c.l.b16 %v2384
    %v3609 = vunpack.c.h.b16 %v2384
    %v3610 = vunpack.c.l.b16 %v2385
    %v3611 = vunpack.c.h.b16 %v2385
    %v3612 = vunpack.c.l.b16 %v2386
    %v3613 = vunpack.c.h.b16 %v2386
    %v3614 = vunpack.c.l.b16 %v2387
    %v3615 = vunpack.c.h.b16 %v2387
    %v3616 = vunpack.c.l.b16 %v2388
    %v3617 = vunpack.c.h.b16 %v2388
    %v3618 = vunpack.c.l.b16 %v2389
    %v3619 = vunpack.c.h.b16 %v2389
    %v3620 = vunpack.c.l.b16 %v2390
    %v3621 = vunpack.c.h.b16 %v2390
    %v3622 = vunpack.c.l.b16 %v2391
    %v3623 = vunpack.c.h.b16 %v2391
    %v3624 = vunpack.c.l.b16 %v2392
    %v3625 = vunpack.c.h.b16 %v2392
    %v3626 = vunpack.c.l.b16 %v2393
    %v3627 = vunpack.c.h.b16 %v2393
    %v3628 = vunpack.c.l.b16 %v2394
    %v3629 = vunpack.c.h.b16 %v2394
    %v3630 = vunpack.c.l.b16 %v2395
    %v3631 = vunpack.c.h.b16 %v2395
    %v3632 = vunpack.c.l.b16 %v2396
    %v3633 = vunpack.c.h.b16 %v2396
    %v3634 = vunpack.c.l.b16 %v2397
    %v3635 = vunpack.c.h.b16 %v2397
    %v3636 = vunpack.c.l.b16 %v2398
    %v3637 = vunpack.c.h.b16 %v2398
    %v3638 = vunpack.c.l.b16 %v2399
    %v3639 = vunpack.c.h.b16 %v2399
    %v3640 = vunpack.c.l.b16 %v2400
    %v3641 = vunpack.c.h.b16 %v2400
    %v3642 = vunpack.c.l.b16 %v2401
    %v3643 = vunpack.c.h.b16 %v2401
    %v3644 = vunpack.c.l.b16 %v2402
    %v3645 = vunpack.c.h.b16 %v2402
    %v3646 = vunpack.c.l.b16 %v2403
    %v3647 = vunpack.c.h.b16 %v2403
    %v3648 = vunpack.c.l.b16 %v2404
    %v3649 = vunpack.c.h.b16 %v2404
    %v3650 = vunpack.c.l.b16 %v2405
    %v3651 = vunpack.c.h.b16 %v2405
    %v3652 = vunpack.c.l.b16 %v2406
    %v3653 = vunpack.c.h.b16 %v2406
    %v3654 = vunpack.c.l.b16 %v2407
    %v3655 = vunpack.c.h.b16 %v2407
    %v3656 = vunpack.c.l.b16 %v2408
    %v3657 = vunpack.c.h.b16 %v2408
    %v3658 = vunpack.c.l.b16 %v2409
    %v3659 = vunpack.c.h.b16 %v2409
    %v3660 = vunpack.c.l.b16 %v2410
    %v3661 = vunpack.c.h.b16 %v2410
    %v3662 = vunpack.c.l.b16 %v2411
    %v3663 = vunpack.c.h.b16 %v2411
    %v3664 = vunpack.c.l.b16 %v2412
    %v3665 = vunpack.c.h.b16 %v2412
    %v3666 = vunpack.c.l.b16 %v2413
    %v3667 = vunpack.c.h.b16 %v2413
    %v3668 = vunpack.c.l.b16 %v2414
    %v3669 = vunpack.c.h.b16 %v2414
    %v3670 = vunpack.c.l.b16 %v2415
    %v3671 = vunpack.c.h.b16 %v2415
    %v3672 = vunpack.c.l.b16 %v2416
    %v3673 = vunpack.c.h.b16 %v2416
    %v3674 = vunpack.c.l.b16 %v2417
    %v3675 = vunpack.c.h.b16 %v2417
    %v3676 = vunpack.c.l.b16 %v2418
    %v3677 = vunpack.c.h.b16 %v2418
    %v3678 = vunpack.c.l.b16 %v2419
    %v3679 = vunpack.c.h.b16 %v2419
    %v3680 = vunpack.c.l.b16 %v2420
    %v3681 = vunpack.c.h.b16 %v2420
    %v3682 = vunpack.c.l.b16 %v2421
    %v3683 = vunpack.c.h.b16 %v2421
    %v3684 = vunpack.c.l.b16 %v2422
    %v3685 = vunpack.c.h.b16 %v2422
    %v3686 = vunpack.c.l.b16 %v2423
    %v3687 = vunpack.c.h.b16 %v2423
    %v3688 = vunpack.c.l.b16 %v2424
    %v3689 = vunpack.c.h.b16 %v2424
    %v3690 = vunpack.c.l.b16 %v2425
    %v3691 = vunpack.c.h.b16 %v2425
    %v3692 = vunpack.c.l.b16 %v2426
    %v3693 = vunpack.c.h.b16 %v2426
    %v3694 = vunpack.c.l.b16 %v2427
    %v3695 = vunpack.c.h.b16 %v2427
    %v3696 = vunpack.c.l.b16 %v2428
    %v3697 = vunpack.c.h.b16 %v2428
    %v3698 = vunpack.c.l.b16 %v2429
    %v3699 = vunpack.c.h.b16 %v2429
    %v3700 = vunpack.c.l.b16 %v2430
    %v3701 = vunpack.c.h.b16 %v2430
    %v3702 = vunpack.c.l.b16 %v2431
    %v3703 = vunpack.c.h.b16 %v2431
    %v3704 = vunpack.c.l.b16 %v2432
    %v3705 = vunpack.c.h.b16 %v2432
    %v3706 = vunpack.c.l.b16 %v2433
    %v3707 = vunpack.c.h.b16 %v2433
    %v3708 = vunpack.c.l.b16 %v2434
    %v3709 = vunpack.c.h.b16 %v2434
    %v3710 = vunpack.c.l.b16 %v2435
    %v3711 = vunpack.c.h.b16 %v2435
    %v3712 = vunpack.c.l.b16 %v2436
    %v3713 = vunpack.c.h.b16 %v2436
    %v3714 = vunpack.c.l.b16 %v2437
    %v3715 = vunpack.c.h.b16 %v2437
    %v3716 = vunpack.c.l.b16 %v2438
    %v3717 = vunpack.c.h.b16 %v2438
    %v3718 = vunpack.c.l.b16 %v2439
    %v3719 = vunpack.c.h.b16 %v2439
    %v3720 = vunpack.c.l.b16 %v2440
    %v3721 = vunpack.c.h.b16 %v2440
    %v3722 = vunpack.c.l.b16 %v2441
    %v3723 = vunpack.c.h.b16 %v2441
    %v3724 = vunpack.c.l.b16 %v2442
    %v3725 = vunpack.c.h.b16 %v2442
    %v3726 = vunpack.c.l.b16 %v2443
    %v3727 = vunpack.c.h.b16 %v2443
    %v3728 = vunpack.c.l.b16 %v2444
    %v3729 = vunpack.c.h.b16 %v2444
    %v3730 = vunpack.c.l.b16 %v2445
    %v3731 = vunpack.c.h.b16 %v2445
    %v3732 = vunpack.c.l.b16 %v2446
    %v3733 = vunpack.c.h.b16 %v2446
    %v3734 = vunpack.c.l.b16 %v2447
    %v3735 = vunpack.c.h.b16 %v2447
    %v3736 = vunpack.c.l.b16 %v2448
    %v3737 = vunpack.c.h.b16 %v2448
    %v3738 = vunpack.c.l.b16 %v2449
    %v3739 = vunpack.c.h.b16 %v2449
    %v3740 = vunpack.c.l.b16 %v2450
    %v3741 = vunpack.c.h.b16 %v2450
    %v3742 = vunpack.c.l.b16 %v2451
    %v3743 = vunpack.c.h.b16 %v2451
    %v3744 = vunpack.c.l.b16 %v2452
    %v3745 = vunpack.c.h.b16 %v2452
    %v3746 = vunpack.c.l.b16 %v2453
    %v3747 = vunpack.c.h.b16 %v2453
    %v3748 = vunpack.c.l.b16 %v2454
    %v3749 = vunpack.c.h.b16 %v2454
    %v3750 = vunpack.c.l.b16 %v2455
    %v3751 = vunpack.c.h.b16 %v2455
    %v3752 = vunpack.c.l.b16 %v2456
    %v3753 = vunpack.c.h.b16 %v2456
    %v3754 = vunpack.c.l.b16 %v2457
    %v3755 = vunpack.c.h.b16 %v2457
    %v3756 = vunpack.c.l.b16 %v2458
    %v3757 = vunpack.c.h.b16 %v2458
    %v3758 = vunpack.c.l.b16 %v2459
    %v3759 = vunpack.c.h.b16 %v2459
    %v3760 = vunpack.c.l.b16 %v2460
    %v3761 = vunpack.c.h.b16 %v2460
    %v3762 = vunpack.c.l.b16 %v2461
    %v3763 = vunpack.c.h.b16 %v2461
    %v3764 = vunpack.c.l.b16 %v2462
    %v3765 = vunpack.c.h.b16 %v2462
    %v3766 = vunpack.c.l.b16 %v2463
    %v3767 = vunpack.c.h.b16 %v2463
    %v3768 = vunpack.c.l.b16 %v2464
    %v3769 = vunpack.c.h.b16 %v2464
    %v3770 = vunpack.c.l.b16 %v2465
    %v3771 = vunpack.c.h.b16 %v2465
    %v3772 = vunpack.c.l.b16 %v2466
    %v3773 = vunpack.c.h.b16 %v2466
    %v3774 = vunpack.c.l.b16 %v2467
    %v3775 = vunpack.c.h.b16 %v2467
    %v3776 = vunpack.c.l.b16 %v2468
    %v3777 = vunpack.c.h.b16 %v2468
    %v3778 = vunpack.c.l.b16 %v2469
    %v3779 = vunpack.c.h.b16 %v2469
    %v3780 = vunpack.c.l.b16 %v2470
    %v3781 = vunpack.c.h.b16 %v2470
    %v3782 = vunpack.c.l.b16 %v2471
    %v3783 = vunpack.c.h.b16 %v2471
    %v3784 = vunpack.c.l.b16 %v2472
    %v3785 = vunpack.c.h.b16 %v2472
    %v3786 = vunpack.c.l.b16 %v2473
    %v3787 = vunpack.c.h.b16 %v2473
    %v3788 = vunpack.c.l.b16 %v2474
    %v3789 = vunpack.c.h.b16 %v2474
    %v3790 = vunpack.c.l.b16 %v2475
    %v3791 = vunpack.c.h.b16 %v2475
    %v3792 = vunpack.c.l.b16 %v2476
    %v3793 = vunpack.c.h.b16 %v2476
    %v3794 = vunpack.c.l.b16 %v2477
    %v3795 = vunpack.c.h.b16 %v2477
    %v3796 = vunpack.c.l.b16 %v2478
    %v3797 = vunpack.c.h.b16 %v2478
    %v3798 = vunpack.c.l.b16 %v2479
    %v3799 = vunpack.c.h.b16 %v2479
    %v3800 = vunpack.c.l.b16 %v2480
    %v3801 = vunpack.c.h.b16 %v2480
    %v3802 = vunpack.c.l.b16 %v2481
    %v3803 = vunpack.c.h.b16 %v2481
    %v3804 = vunpack.c.l.b16 %v2482
    %v3805 = vunpack.c.h.b16 %v2482
    %v3806 = vunpack.c.l.b16 %v2483
    %v3807 = vunpack.c.h.b16 %v2483
    %v3808 = vunpack.c.l.b16 %v2484
    %v3809 = vunpack.c.h.b16 %v2484
    %v3810 = vunpack.c.l.b16 %v2485
    %v3811 = vunpack.c.h.b16 %v2485
    %v3812 = vunpack.c.l.b16 %v2486
    %v3813 = vunpack.c.h.b16 %v2486
    %v3814 = vunpack.c.l.b16 %v2487
    %v3815 = vunpack.c.h.b16 %v2487
    %v3816 = vunpack.c.l.b16 %v2488
    %v3817 = vunpack.c.h.b16 %v2488
    %v3818 = vunpack.c.l.b16 %v2489
    %v3819 = vunpack.c.h.b16 %v2489
    %v3820 = vunpack.c.l.b16 %v2490
    %v3821 = vunpack.c.h.b16 %v2490
    %v3822 = vunpack.c.l.b16 %v2491
    %v3823 = vunpack.c.h.b16 %v2491
    %v3824 = vunpack.c.l.b16 %v2492
    %v3825 = vunpack.c.h.b16 %v2492
    %v3826 = vunpack.c.l.b16 %v2493
    %v3827 = vunpack.c.h.b16 %v2493
    %v3828 = vunpack.c.l.b16 %v2494
    %v3829 = vunpack.c.h.b16 %v2494
    %v3830 = vunpack.c.l.b16 %v2495
    %v3831 = vunpack.c.h.b16 %v2495
    %v3832 = vunpack.c.l.b16 %v2496
    %v3833 = vunpack.c.h.b16 %v2496
    %v3834 = vunpack.c.l.b16 %v2497
    %v3835 = vunpack.c.h.b16 %v2497
    %v3836 = vunpack.c.l.b16 %v2498
    %v3837 = vunpack.c.h.b16 %v2498
    %v3838 = vunpack.c.l.b16 %v2499
    %v3839 = vunpack.c.h.b16 %v2499
    %v3840 = vunpack.c.l.b16 %v2500
    %v3841 = vunpack.c.h.b16 %v2500
    %v3842 = vunpack.c.l.b16 %v2501
    %v3843 = vunpack.c.h.b16 %v2501
    %v3844 = vunpack.c.l.b16 %v2502
    %v3845 = vunpack.c.h.b16 %v2502
    %v3846 = vunpack.c.l.b16 %v2503
    %v3847 = vunpack.c.h.b16 %v2503
    %v3848 = vunpack.c.l.b16 %v2504
    %v3849 = vunpack.c.h.b16 %v2504
    %v3850 = vunpack.c.l.b16 %v2505
    %v3851 = vunpack.c.h.b16 %v2505
    %v3852 = vunpack.c.l.b16 %v2506
    %v3853 = vunpack.c.h.b16 %v2506
    %v3854 = vunpack.c.l.b16 %v2507
    %v3855 = vunpack.c.h.b16 %v2507
    %v3856 = vunpack.c.l.b16 %v2508
    %v3857 = vunpack.c.h.b16 %v2508
    %v3858 = vunpack.c.l.b16 %v2509
    %v3859 = vunpack.c.h.b16 %v2509
    %v3860 = vunpack.c.l.b16 %v2510
    %v3861 = vunpack.c.h.b16 %v2510
    %v3862 = vunpack.c.l.b16 %v2511
    %v3863 = vunpack.c.h.b16 %v2511
    %v3864 = vunpack.c.l.b16 %v2512
    %v3865 = vunpack.c.h.b16 %v2512
    %v3866 = vunpack.c.l.b16 %v2513
    %v3867 = vunpack.c.h.b16 %v2513
    %v3868 = vunpack.c.l.b16 %v2514
    %v3869 = vunpack.c.h.b16 %v2514
    %v3870 = vunpack.c.l.b16 %v2515
    %v3871 = vunpack.c.h.b16 %v2515
    %v3872 = vunpack.c.l.b16 %v2516
    %v3873 = vunpack.c.h.b16 %v2516
    %v3874 = vunpack.c.l.b16 %v2517
    %v3875 = vunpack.c.h.b16 %v2517
    %v3876 = vunpack.c.l.b16 %v2518
    %v3877 = vunpack.c.h.b16 %v2518
    %v3878 = vunpack.c.l.b16 %v2519
    %v3879 = vunpack.c.h.b16 %v2519
    %v3880 = vunpack.c.l.b16 %v2520
    %v3881 = vunpack.c.h.b16 %v2520
    %v3882 = vunpack.c.l.b16 %v2521
    %v3883 = vunpack.c.h.b16 %v2521
    %v3884 = vunpack.c.l.b16 %v2522
    %v3885 = vunpack.c.h.b16 %v2522
    %v3886 = vunpack.c.l.b16 %v2523
    %v3887 = vunpack.c.h.b16 %v2523
    %v3888 = vunpack.c.l.b16 %v2524
    %v3889 = vunpack.c.h.b16 %v2524
    %v3890 = vunpack.c.l.b16 %v2525
    %v3891 = vunpack.c.h.b16 %v2525
    %v3892 = vunpack.c.l.b16 %v2526
    %v3893 = vunpack.c.h.b16 %v2526
    %v3894 = vunpack.c.l.b16 %v2527
    %v3895 = vunpack.c.h.b16 %v2527
    %v3896 = vunpack.c.l.b16 %v2528
    %v3897 = vunpack.c.h.b16 %v2528
    %v3898 = vunpack.c.l.b16 %v2529
    %v3899 = vunpack.c.h.b16 %v2529
    %v3900 = vunpack.c.l.b16 %v2530
    %v3901 = vunpack.c.h.b16 %v2530
    %v3902 = vunpack.c.l.b16 %v2531
    %v3903 = vunpack.c.h.b16 %v2531
    %v3904 = vunpack.c.l.b16 %v2532
    %v3905 = vunpack.c.h.b16 %v2532
    %v3906 = vunpack.c.l.b16 %v2533
    %v3907 = vunpack.c.h.b16 %v2533
    %v3908 = vunpack.c.l.b16 %v2534
    %v3909 = vunpack.c.h.b16 %v2534
    %v3910 = vunpack.c.l.b16 %v2535
    %v3911 = vunpack.c.h.b16 %v2535
    %v3912 = vunpack.c.l.b16 %v2536
    %v3913 = vunpack.c.h.b16 %v2536
    %v3914 = vunpack.c.l.b16 %v2537
    %v3915 = vunpack.c.h.b16 %v2537
    %v3916 = vunpack.c.l.b16 %v2538
    %v3917 = vunpack.c.h.b16 %v2538
    %v3918 = vunpack.c.l.b16 %v2539
    %v3919 = vunpack.c.h.b16 %v2539
    %v3920 = vunpack.c.l.b16 %v2540
    %v3921 = vunpack.c.h.b16 %v2540
    %v3922 = vunpack.c.l.b16 %v2541
    %v3923 = vunpack.c.h.b16 %v2541
    %v3924 = vunpack.c.l.b16 %v2542
    %v3925 = vunpack.c.h.b16 %v2542
    %v3926 = vunpack.c.l.b16 %v2543
    %v3927 = vunpack.c.h.b16 %v2543
    %v3928 = vunpack.c.l.b16 %v2544
    %v3929 = vunpack.c.h.b16 %v2544
    %v3930 = vunpack.c.l.b16 %v2545
    %v3931 = vunpack.c.h.b16 %v2545
    %v3932 = vunpack.c.l.b16 %v2546
    %v3933 = vunpack.c.h.b16 %v2546
    %v3934 = vunpack.c.l.b16 %v2547
    %v3935 = vunpack.c.h.b16 %v2547
    %v3936 = vunpack.c.l.b16 %v2548
    %v3937 = vunpack.c.h.b16 %v2548
    %v3938 = vunpack.c.l.b16 %v2549
    %v3939 = vunpack.c.h.b16 %v2549
    %v3940 = vunpack.c.l.b16 %v2550
    %v3941 = vunpack.c.h.b16 %v2550
    %v3942 = vunpack.c.l.b16 %v2551
    %v3943 = vunpack.c.h.b16 %v2551
    %v3944 = vunpack.c.l.b16 %v2552
    %v3945 = vunpack.c.h.b16 %v2552
    %v3946 = vunpack.c.l.b16 %v2553
    %v3947 = vunpack.c.h.b16 %v2553
    %v3948 = vunpack.c.l.b16 %v2554
    %v3949 = vunpack.c.h.b16 %v2554
    %v3950 = vunpack.c.l.b16 %v2555
    %v3951 = vunpack.c.h.b16 %v2555
    %v3952 = vunpack.c.l.b16 %v2556
    %v3953 = vunpack.c.h.b16 %v2556
    %v3954 = vunpack.c.l.b16 %v2557
    %v3955 = vunpack.c.h.b16 %v2557
    %v3956 = vunpack.c.l.b16 %v2558
    %v3957 = vunpack.c.h.b16 %v2558
    %v3958 = vunpack.c.l.b16 %v2559
    %v3959 = vunpack.c.h.b16 %v2559
    %v3960 = vunpack.c.l.b16 %v2560
    %v3961 = vunpack.c.h.b16 %v2560
    %v3962 = vunpack.c.l.b16 %v2561
    %v3963 = vunpack.c.h.b16 %v2561
    %v3964 = vunpack.c.l.b16 %v2562
    %v3965 = vunpack.c.h.b16 %v2562
    %v3966 = vunpack.c.l.b16 %v2563
    %v3967 = vunpack.c.h.b16 %v2563
    %v3968 = vunpack.c.l.b16 %v2564
    %v3969 = vunpack.c.h.b16 %v2564
    %v3970 = vunpack.c.l.b16 %v2565
    %v3971 = vunpack.c.h.b16 %v2565
    %v3972 = vunpack.c.l.b16 %v2566
    %v3973 = vunpack.c.h.b16 %v2566
    %v3974 = vunpack.c.l.b16 %v2567
    %v3975 = vunpack.c.h.b16 %v2567
    %v3976 = vunpack.c.l.b16 %v2568
    %v3977 = vunpack.c.h.b16 %v2568
    %v3978 = vunpack.c.l.b16 %v2569
    %v3979 = vunpack.c.h.b16 %v2569
    %v3980 = vunpack.c.l.b16 %v2570
    %v3981 = vunpack.c.h.b16 %v2570
    %v3982 = vunpack.c.l.b16 %v2571
    %v3983 = vunpack.c.h.b16 %v2571
    %v3984 = vunpack.c.l.b16 %v2572
    %v3985 = vunpack.c.h.b16 %v2572
    %v3986 = vunpack.c.l.b16 %v2573
    %v3987 = vunpack.c.h.b16 %v2573
    %v3988 = vunpack.c.l.b16 %v2574
    %v3989 = vunpack.c.h.b16 %v2574
    %v3990 = vunpack.c.l.b16 %v2575
    %v3991 = vunpack.c.h.b16 %v2575
    %v3992 = vunpack.c.l.b16 %v2576
    %v3993 = vunpack.c.h.b16 %v2576
    %v3994 = vunpack.c.l.b16 %v2577
    %v3995 = vunpack.c.h.b16 %v2577
    %v3996 = vunpack.c.l.b16 %v2578
    %v3997 = vunpack.c.h.b16 %v2578
    %v3998 = vunpack.c.l.b16 %v2579
    %v3999 = vunpack.c.h.b16 %v2579
    %v4000 = vunpack.c.l.b16 %v2580
    %v4001 = vunpack.c.h.b16 %v2580
    %v4002 = vunpack.c.l.b16 %v2581
    %v4003 = vunpack.c.h.b16 %v2581
    %v4004 = vunpack.c.l.b16 %v2582
    %v4005 = vunpack.c.h.b16 %v2582
    %v4006 = vunpack.c.l.b16 %v2583
    %v4007 = vunpack.c.h.b16 %v2583
    %v4008 = vunpack.c.l.b16 %v2584
    %v4009 = vunpack.c.h.b16 %v2584
    %v4010 = vunpack.c.l.b16 %v2585
    %v4011 = vunpack.c.h.b16 %v2585
    %v4012 = vunpack.c.l.b16 %v2586
    %v4013 = vunpack.c.h.b16 %v2586
    %v4014 = vunpack.c.l.b16 %v2587
    %v4015 = vunpack.c.h.b16 %v2587
    %v4016 = vunpack.c.l.b16 %v2588
    %v4017 = vunpack.c.h.b16 %v2588
    %v4018 = vunpack.c.l.b16 %v2589
    %v4019 = vunpack.c.h.b16 %v2589
    %v4020 = vunpack.c.l.b16 %v2590
    %v4021 = vunpack.c.h.b16 %v2590
    %v4022 = vunpack.c.l.b16 %v2591
    %v4023 = vunpack.c.h.b16 %v2591
    %v4024 = vunpack.c.l.b16 %v2592
    %v4025 = vunpack.c.h.b16 %v2592
    %v4026 = vunpack.c.l.b16 %v2593
    %v4027 = vunpack.c.h.b16 %v2593
    %v4028 = vunpack.c.l.b16 %v2594
    %v4029 = vunpack.c.h.b16 %v2594
    %v4030 = vunpack.c.l.b16 %v2595
    %v4031 = vunpack.c.h.b16 %v2595
    %v4032 = vunpack.c.l.b16 %v2596
    %v4033 = vunpack.c.h.b16 %v2596
    %v4034 = vunpack.c.l.b16 %v2597
    %v4035 = vunpack.c.h.b16 %v2597
    %v4036 = vunpack.c.l.b16 %v2598
    %v4037 = vunpack.c.h.b16 %v2598
    %v4038 = vunpack.c.l.b16 %v2599
    %v4039 = vunpack.c.h.b16 %v2599
    %v4040 = vunpack.c.l.b16 %v2600
    %v4041 = vunpack.c.h.b16 %v2600
    %v4042 = vunpack.c.l.b16 %v2601
    %v4043 = vunpack.c.h.b16 %v2601
    %v4044 = vunpack.c.l.b16 %v2602
    %v4045 = vunpack.c.h.b16 %v2602
    %v4046 = vunpack.c.l.b16 %v2603
    %v4047 = vunpack.c.h.b16 %v2603
    %v4048 = vunpack.c.l.b16 %v2604
    %v4049 = vunpack.c.h.b16 %v2604
    %v4050 = vunpack.c.l.b16 %v2605
    %v4051 = vunpack.c.h.b16 %v2605
    %v4052 = vunpack.c.l.b16 %v2606
    %v4053 = vunpack.c.h.b16 %v2606
    %v4054 = vunpack.c.l.b16 %v2607
    %v4055 = vunpack.c.h.b16 %v2607
    %v4056 = vunpack.c.l.b16 %v2608
    %v4057 = vunpack.c.h.b16 %v2608
    %v4058 = vunpack.c.l.b16 %v2609
    %v4059 = vunpack.c.h.b16 %v2609
    %v4060 = vunpack.c.l.b16 %v2610
    %v4061 = vunpack.c.h.b16 %v2610
    %v4062 = vunpack.c.l.b16 %v2611
    %v4063 = vunpack.c.h.b16 %v2611
    %v4064 = vunpack.c.l.b16 %v2612
    %v4065 = vunpack.c.h.b16 %v2612
    %v4066 = vunpack.c.l.b16 %v2613
    %v4067 = vunpack.c.h.b16 %v2613
    %v4068 = vunpack.c.l.b16 %v2614
    %v4069 = vunpack.c.h.b16 %v2614
    %v4070 = vunpack.c.l.b16 %v2615
    %v4071 = vunpack.c.h.b16 %v2615
    %v4072 = vunpack.c.l.b16 %v2616
    %v4073 = vunpack.c.h.b16 %v2616
    %v4074 = vunpack.c.l.b16 %v2617
    %v4075 = vunpack.c.h.b16 %v2617
    %v4076 = vunpack.c.l.b16 %v2618
    %v4077 = vunpack.c.h.b16 %v2618
    %v4078 = vunpack.c.l.b16 %v2619
    %v4079 = vunpack.c.h.b16 %v2619
    %v4080 = vunpack.c.l.b16 %v2620
    %v4081 = vunpack.c.h.b16 %v2620
    %v4082 = vunpack.c.l.b16 %v2621
    %v4083 = vunpack.c.h.b16 %v2621
    %v4084 = vunpack.c.l.b16 %v2622
    %v4085 = vunpack.c.h.b16 %v2622
    %v4086 = vunpack.c.l.b16 %v2623
    %v4087 = vunpack.c.h.b16 %v2623
    %v4088 = vunpack.c.l.b16 %v2624
    %v4089 = vunpack.c.h.b16 %v2624
    %v4090 = vunpack.c.l.b16 %v2625
    %v4091 = vunpack.c.h.b16 %v2625
    %v4092 = vunpack.c.l.b16 %v2626
    %v4093 = vunpack.c.h.b16 %v2626
    %v4094 = vunpack.c.l.b16 %v2627
    %v4095 = vunpack.c.h.b16 %v2627
    %v4096 = vunpack.c.l.b16 %v2628
    %v4097 = vunpack.c.h.b16 %v2628
    %v4098 = vunpack.c.l.b16 %v2629
    %v4099 = vunpack.c.h.b16 %v2629
    %v4100 = vunpack.c.l.b16 %v2630
    %v4101 = vunpack.c.h.b16 %v2630
    %v4102 = vunpack.c.l.b16 %v2631
    %v4103 = vunpack.c.h.b16 %v2631
    %v4104 = vunpack.c.l.b16 %v2632
    %v4105 = vunpack.c.h.b16 %v2632
    %v4106 = vunpack.c.l.b16 %v2633
    %v4107 = vunpack.c.h.b16 %v2633
    %v4108 = vunpack.c.l.b16 %v2634
    %v4109 = vunpack.c.h.b16 %v2634
    %v4110 = vunpack.c.l.b16 %v2635
    %v4111 = vunpack.c.h.b16 %v2635
    %v4112 = vunpack.c.l.b16 %v2636
    %v4113 = vunpack.c.h.b16 %v2636
    %v4114 = vunpack.c.l.b16 %v2637
    %v4115 = vunpack.c.h.b16 %v2637
    %v4116 = vunpack.c.l.b16 %v2638
    %v4117 = vunpack.c.h.b16 %v2638
    %v4118 = vunpack.c.l.b16 %v2639
    %v4119 = vunpack.c.h.b16 %v2639
    %v4120 = vunpack.c.l.b16 %v2640
    %v4121 = vunpack.c.h.b16 %v2640
    %v4122 = vunpack.c.l.b16 %v2641
    %v4123 = vunpack.c.h.b16 %v2641
    %v4124 = vunpack.c.l.b16 %v2642
    %v4125 = vunpack.c.h.b16 %v2642
    %v4126 = vunpack.c.l.b16 %v2643
    %v4127 = vunpack.c.h.b16 %v2643
    %v4128 = vunpack.c.l.b16 %v2644
    %v4129 = vunpack.c.h.b16 %v2644
    %v4130 = vunpack.c.l.b16 %v2645
    %v4131 = vunpack.c.h.b16 %v2645
    %v4132 = vunpack.c.l.b16 %v2646
    %v4133 = vunpack.c.h.b16 %v2646
    %v4134 = vunpack.c.l.b16 %v2647
    %v4135 = vunpack.c.h.b16 %v2647
    %v4136 = vunpack.c.l.b16 %v2648
    %v4137 = vunpack.c.h.b16 %v2648
    %v4138 = vunpack.c.l.b16 %v2649
    %v4139 = vunpack.c.h.b16 %v2649
    %v4140 = vunpack.c.l.b16 %v2650
    %v4141 = vunpack.c.h.b16 %v2650
    %v4142 = vunpack.c.l.b16 %v2651
    %v4143 = vunpack.c.h.b16 %v2651
    %v4144 = vunpack.c.l.b16 %v2652
    %v4145 = vunpack.c.h.b16 %v2652
    %v4146 = vunpack.c.l.b16 %v2653
    %v4147 = vunpack.c.h.b16 %v2653
    %v4148 = vunpack.c.l.b16 %v2654
    %v4149 = vunpack.c.h.b16 %v2654
    %v4150 = vunpack.c.l.b16 %v2655
    %v4151 = vunpack.c.h.b16 %v2655
    %v4152 = vunpack.c.l.b16 %v2656
    %v4153 = vunpack.c.h.b16 %v2656
    %v4154 = vunpack.c.l.b16 %v2657
    %v4155 = vunpack.c.h.b16 %v2657
    %v4156 = vunpack.c.l.b16 %v2658
    %v4157 = vunpack.c.h.b16 %v2658
    %v4158 = vunpack.c.l.b16 %v2659
    %v4159 = vunpack.c.h.b16 %v2659
    %v4160 = vunpack.c.l.b16 %v2660
    %v4161 = vunpack.c.h.b16 %v2660
    %v4162 = vunpack.c.l.b16 %v2661
    %v4163 = vunpack.c.h.b16 %v2661
    %v4164 = vunpack.c.l.b16 %v2662
    %v4165 = vunpack.c.h.b16 %v2662
    %v4166 = vunpack.c.l.b16 %v2663
    %v4167 = vunpack.c.h.b16 %v2663
    %v4168 = vunpack.c.l.b16 %v2664
    %v4169 = vunpack.c.h.b16 %v2664
    %v4170 = vunpack.c.l.b16 %v2665
    %v4171 = vunpack.c.h.b16 %v2665
    %v4172 = vunpack.c.l.b16 %v2666
    %v4173 = vunpack.c.h.b16 %v2666
    %v4174 = vunpack.c.l.b16 %v2667
    %v4175 = vunpack.c.h.b16 %v2667
    %v4176 = vunpack.c.l.b16 %v2668
    %v4177 = vunpack.c.h.b16 %v2668
    %v4178 = vunpack.c.l.b16 %v2669
    %v4179 = vunpack.c.h.b16 %v2669
    %v4180 = vunpack.c.l.b16 %v2670
    %v4181 = vunpack.c.h.b16 %v2670
    %v4182 = vunpack.c.l.b16 %v2671
    %v4183 = vunpack.c.h.b16 %v2671
    %v4184 = vunpack.c.l.b16 %v2672
    %v4185 = vunpack.c.h.b16 %v2672
    %v4186 = vunpack.c.l.b16 %v2673
    %v4187 = vunpack.c.h.b16 %v2673
    %v4188 = vunpack.c.l.b16 %v2674
    %v4189 = vunpack.c.h.b16 %v2674
    %v4190 = vunpack.c.l.b16 %v2675
    %v4191 = vunpack.c.h.b16 %v2675
    %v4192 = vunpack.c.l.b16 %v2676
    %v4193 = vunpack.c.h.b16 %v2676
    %v4194 = vunpack.c.l.b16 %v2677
    %v4195 = vunpack.c.h.b16 %v2677
    %v4196 = vunpack.c.l.b16 %v2678
    %v4197 = vunpack.c.h.b16 %v2678
    %v4198 = vunpack.c.l.b16 %v2679
    %v4199 = vunpack.c.h.b16 %v2679
    %v4200 = vunpack.c.l.b16 %v2680
    %v4201 = vunpack.c.h.b16 %v2680
    %v4202 = vunpack.c.l.b16 %v2681
    %v4203 = vunpack.c.h.b16 %v2681
    %v4204 = vunpack.c.l.b16 %v2682
    %v4205 = vunpack.c.h.b16 %v2682
    %v4206 = vunpack.c.l.b16 %v2683
    %v4207 = vunpack.c.h.b16 %v2683
    %v4208 = vunpack.c.l.b16 %v2684
    %v4209 = vunpack.c.h.b16 %v2684
    %v4210 = vunpack.c.l.b16 %v2685
    %v4211 = vunpack.c.h.b16 %v2685
    %v4212 = vunpack.c.l.b16 %v2686
    %v4213 = vunpack.c.h.b16 %v2686
    %v4214 = vunpack.c.l.b16 %v2687
    %v4215 = vunpack.c.h.b16 %v2687
    %v4216 = vunpack.c.l.b16 %v2688
    %v4217 = vunpack.c.h.b16 %v2688
    %v4218 = vunpack.c.l.b16 %v2689
    %v4219 = vunpack.c.h.b16 %v2689
    %v4220 = vunpack.c.l.b16 %v2690
    %v4221 = vunpack.c.h.b16 %v2690
    %v4222 = vunpack.c.l.b16 %v2691
    %v4223 = vunpack.c.h.b16 %v2691
    %v4224 = vunpack.c.l.b16 %v2692
    %v4225 = vunpack.c.h.b16 %v2692
    %v4226 = vunpack.c.l.b16 %v2693
    %v4227 = vunpack.c.h.b16 %v2693
    %v4228 = vunpack.c.l.b16 %v2694
    %v4229 = vunpack.c.h.b16 %v2694
    %v4230 = vunpack.c.l.b16 %v2695
    %v4231 = vunpack.c.h.b16 %v2695
    %v4232 = vunpack.c.l.b16 %v2696
    %v4233 = vunpack.c.h.b16 %v2696
    %v4234 = vunpack.c.l.b16 %v2697
    %v4235 = vunpack.c.h.b16 %v2697
    %v4236 = vunpack.c.l.b16 %v2698
    %v4237 = vunpack.c.h.b16 %v2698
    %v4238 = vunpack.c.l.b16 %v2699
    %v4239 = vunpack.c.h.b16 %v2699
    %v4240 = vunpack.c.l.b16 %v2700
    %v4241 = vunpack.c.h.b16 %v2700
    %v4242 = vunpack.c.l.b16 %v2701
    %v4243 = vunpack.c.h.b16 %v2701
    %v4244 = vunpack.c.l.b16 %v2702
    %v4245 = vunpack.c.h.b16 %v2702
    %v4246 = vunpack.c.l.b16 %v2703
    %v4247 = vunpack.c.h.b16 %v2703
    %v4248 = vunpack.c.l.b16 %v2704
    %v4249 = vunpack.c.h.b16 %v2704
    %v4250 = vunpack.c.l.b16 %v2705
    %v4251 = vunpack.c.h.b16 %v2705
    %v4252 = vunpack.c.l.b16 %v2706
    %v4253 = vunpack.c.h.b16 %v2706
    %v4254 = vunpack.c.l.b16 %v2707
    %v4255 = vunpack.c.h.b16 %v2707
    %v4256 = vunpack.c.l.b16 %v2708
    %v4257 = vunpack.c.h.b16 %v2708
    %v4258 = vunpack.c.l.b16 %v2709
    %v4259 = vunpack.c.h.b16 %v2709
    %v4260 = vunpack.c.l.b16 %v2710
    %v4261 = vunpack.c.h.b16 %v2710
    %v4262 = vunpack.c.l.b16 %v2711
    %v4263 = vunpack.c.h.b16 %v2711
    %v4264 = vunpack.c.l.b16 %v2712
    %v4265 = vunpack.c.h.b16 %v2712
    %v4266 = vunpack.c.l.b16 %v2713
    %v4267 = vunpack.c.h.b16 %v2713
    %v4268 = vunpack.c.l.b16 %v2714
    %v4269 = vunpack.c.h.b16 %v2714
    %v4270 = vunpack.c.l.b16 %v2715
    %v4271 = vunpack.c.h.b16 %v2715
    %v4272 = vunpack.c.l.b16 %v2716
    %v4273 = vunpack.c.h.b16 %v2716
    %v4274 = vunpack.c.l.b16 %v2717
    %v4275 = vunpack.c.h.b16 %v2717
    %v4276 = vunpack.c.l.b16 %v2718
    %v4277 = vunpack.c.h.b16 %v2718
    %v4278 = vunpack.c.l.b16 %v2719
    %v4279 = vunpack.c.h.b16 %v2719
    %v4280 = vunpack.c.l.b16 %v2720
    %v4281 = vunpack.c.h.b16 %v2720
    %v4282 = vunpack.c.l.b16 %v2721
    %v4283 = vunpack.c.h.b16 %v2721
    %v4284 = vunpack.c.l.b16 %v2722
    %v4285 = vunpack.c.h.b16 %v2722
    %v4286 = vunpack.c.l.b16 %v2723
    %v4287 = vunpack.c.h.b16 %v2723
    %v4288 = vunpack.c.l.b16 %v2724
    %v4289 = vunpack.c.h.b16 %v2724
    %v4290 = vunpack.c.l.b16 %v2725
    %v4291 = vunpack.c.h.b16 %v2725
    %v4292 = vunpack.c.l.b16 %v2726
    %v4293 = vunpack.c.h.b16 %v2726
    %v4294 = vunpack.c.l.b16 %v2727
    %v4295 = vunpack.c.h.b16 %v2727
    %v4296 = vunpack.c.l.b16 %v2728
    %v4297 = vunpack.c.h.b16 %v2728
    %v4298 = vunpack.c.l.b16 %v2729
    %v4299 = vunpack.c.h.b16 %v2729
    %v4300 = vunpack.c.l.b16 %v2730
    %v4301 = vunpack.c.h.b16 %v2730
    %v4302 = vunpack.c.l.b16 %v2731
    %v4303 = vunpack.c.h.b16 %v2731
    %v4304 = vunpack.c.l.b16 %v2732
    %v4305 = vunpack.c.h.b16 %v2732
    %v4306 = vunpack.c.l.b16 %v2733
    %v4307 = vunpack.c.h.b16 %v2733
    %v4308 = vunpack.c.l.b16 %v2734
    %v4309 = vunpack.c.h.b16 %v2734
    %v4310 = vunpack.c.l.b16 %v2735
    %v4311 = vunpack.c.h.b16 %v2735
    %v4312 = vunpack.c.l.b16 %v2736
    %v4313 = vunpack.c.h.b16 %v2736
    %v4314 = vunpack.c.l.b16 %v2737
    %v4315 = vunpack.c.h.b16 %v2737
    %v4316 = vunpack.c.l.b16 %v2738
    %v4317 = vunpack.c.h.b16 %v2738
    %v4318 = vunpack.c.l.b16 %v2739
    %v4319 = vunpack.c.h.b16 %v2739
    %v4320 = vunpack.c.l.b16 %v2740
    %v4321 = vunpack.c.h.b16 %v2740
    %v4322 = vunpack.c.l.b16 %v2741
    %v4323 = vunpack.c.h.b16 %v2741
    %v4324 = vunpack.c.l.b16 %v2742
    %v4325 = vunpack.c.h.b16 %v2742
    %v4326 = vunpack.c.l.b16 %v2743
    %v4327 = vunpack.c.h.b16 %v2743
    %v4328 = vunpack.c.l.b16 %v2744
    %v4329 = vunpack.c.h.b16 %v2744
    %v4330 = vunpack.c.l.b16 %v2745
    %v4331 = vunpack.c.h.b16 %v2745
    %v4332 = vunpack.c.l.b16 %v2746
    %v4333 = vunpack.c.h.b16 %v2746
    %v4334 = vunpack.c.l.b16 %v2747
    %v4335 = vunpack.c.h.b16 %v2747
    %v4336 = vunpack.c.l.b16 %v2748
    %v4337 = vunpack.c.h.b16 %v2748
    %v4338 = vunpack.c.l.b16 %v2749
    %v4339 = vunpack.c.h.b16 %v2749
    %v4340 = vunpack.c.l.b16 %v2750
    %v4341 = vunpack.c.h.b16 %v2750
    %v4342 = vunpack.c.l.b16 %v2751
    %v4343 = vunpack.c.h.b16 %v2751
    %v4344 = vunpack.c.l.b16 %v2752
    %v4345 = vunpack.c.h.b16 %v2752
    %v4346 = vunpack.c.l.b16 %v2753
    %v4347 = vunpack.c.h.b16 %v2753
    %v4348 = vunpack.c.l.b16 %v2754
    %v4349 = vunpack.c.h.b16 %v2754
    %v4350 = vunpack.c.l.b16 %v2755
    %v4351 = vunpack.c.h.b16 %v2755
    %v4352 = vunpack.c.l.b16 %v2756
    %v4353 = vunpack.c.h.b16 %v2756
    %v4354 = vunpack.c.l.b16 %v2757
    %v4355 = vunpack.c.h.b16 %v2757
    %v4356 = vunpack.c.l.b16 %v2758
    %v4357 = vunpack.c.h.b16 %v2758
    %v4358 = vunpack.c.l.b16 %v2759
    %v4359 = vunpack.c.h.b16 %v2759
    %v4360 = vunpack.c.l.b16 %v2760
    %v4361 = vunpack.c.h.b16 %v2760
    %v4362 = vunpack.c.l.b16 %v2761
    %v4363 = vunpack.c.h.b16 %v2761
    %v4364 = vunpack.c.l.b16 %v2762
    %v4365 = vunpack.c.h.b16 %v2762
    %v4366 = vunpack.c.l.b16 %v2763
    %v4367 = vunpack.c.h.b16 %v2763
    %v4368 = vunpack.c.l.b16 %v2764
    %v4369 = vunpack.c.h.b16 %v2764
    %v4370 = vunpack.c.l.b16 %v2765
    %v4371 = vunpack.c.h.b16 %v2765
    %v4372 = vunpack.c.l.b16 %v2766
    %v4373 = vunpack.c.h.b16 %v2766
    %v4374 = vunpack.c.l.b16 %v2767
    %v4375 = vunpack.c.h.b16 %v2767
    %v4376 = vunpack.c.l.b16 %v2768
    %v4377 = vunpack.c.h.b16 %v2768
    %v4378 = vunpack.c.l.b16 %v2769
    %v4379 = vunpack.c.h.b16 %v2769
    %v4380 = vunpack.c.l.b16 %v2770
    %v4381 = vunpack.c.h.b16 %v2770
    %v4382 = vunpack.c.l.b16 %v2771
    %v4383 = vunpack.c.h.b16 %v2771
    %v4384 = vunpack.c.l.b16 %v2772
    %v4385 = vunpack.c.h.b16 %v2772
    %v4386 = vunpack.c.l.b16 %v2773
    %v4387 = vunpack.c.h.b16 %v2773
    %v4388 = vunpack.c.l.b16 %v2774
    %v4389 = vunpack.c.h.b16 %v2774
    %v4390 = vunpack.c.l.b16 %v2775
    %v4391 = vunpack.c.h.b16 %v2775
    %v4392 = vunpack.c.l.b16 %v2776
    %v4393 = vunpack.c.h.b16 %v2776
    %v4394 = vunpack.c.l.b16 %v2777
    %v4395 = vunpack.c.h.b16 %v2777
    %v4396 = vunpack.c.l.b16 %v2778
    %v4397 = vunpack.c.h.b16 %v2778
    %v4398 = vunpack.c.l.b16 %v2779
    %v4399 = vunpack.c.h.b16 %v2779
    %v4400 = vpack.c.b16 %v3392, %v3376
    %v4401 = vpack.c.b16 %v3393, %v3377
    %v4402 = vpack.c.b16 %v3394, %v3378
    %v4403 = vpack.c.b16 %v3395, %v3379
    %v4404 = vpack.c.b16 %v3396, %v3380
    %v4405 = vpack.c.b16 %v3397, %v3381
    %v4406 = vpack.c.b16 %v3398, %v3382
    %v4407 = vpack.c.b16 %v3399, %v3383
    %v4408 = vpack.c.b16 %v3400, %v3384
    %v4409 = vpack.c.b16 %v3401, %v3385
    %v4410 = vpack.c.b16 %v3402, %v3386
    %v4411 = vpack.c.b16 %v3403, %v3387
    %v4412 = vpack.c.b16 %v3404, %v3388
    %v4413 = vpack.c.b16 %v3405, %v3389
    %v4414 = vpack.c.b16 %v3406, %v3390
    %v4415 = vpack.c.b16 %v3407, %v3391
    %v4416 = vpack.c.b16 %v3424, %v3408
    %v4417 = vpack.c.b16 %v3425, %v3409
    %v4418 = vpack.c.b16 %v3426, %v3410
    %v4419 = vpack.c.b16 %v3427, %v3411
    %v4420 = vpack.c.b16 %v3428, %v3412
    %v4421 = vpack.c.b16 %v3429, %v3413
    %v4422 = vpack.c.b16 %v3430, %v3414
    %v4423 = vpack.c.b16 %v3431, %v3415
    %v4424 = vpack.c.b16 %v3432, %v3416
    %v4425 = vpack.c.b16 %v3433, %v3417
    %v4426 = vpack.c.b16 %v3434, %v3418
    %v4427 = vpack.c.b16 %v3435, %v3419
    %v4428 = vpack.c.b16 %v3436, %v3420
    %v4429 = vpack.c.b16 %v3437, %v3421
    %v4430 = vpack.c.b16 %v3438, %v3422
    %v4431 = vpack.c.b16 %v3439, %v3423
    %v4432 = vpack.c.b16 %v3456, %v3440
    %v4433 = vpack.c.b16 %v3457, %v3441
    %v4434 = vpack.c.b16 %v3458, %v3442
    %v4435 = vpack.c.b16 %v3459, %v3443
    %v4436 = vpack.c.b16 %v3460, %v3444
    %v4437 = vpack.c.b16 %v3461, %v3445
    %v4438 = vpack.c.b16 %v3462, %v3446
    %v4439 = vpack.c.b16 %v3463, %v3447
    %v4440 = vpack.c.b16 %v3464, %v3448
    %v4441 = vpack.c.b16 %v3465, %v3449
    %v4442 = vpack.c.b16 %v3466, %v3450
    %v4443 = vpack.c.b16 %v3467, %v3451
    %v4444 = vpack.c.b16 %v3468, %v3452
    %v4445 = vpack.c.b16 %v3469, %v3453
    %v4446 = vpack.c.b16 %v3470, %v3454
    %v4447 = vpack.c.b16 %v3471, %v3455
    %v4448 = vpack.c.b16 %v3488, %v3472
    %v4449 = vpack.c.b16 %v3489, %v3473
    %v4450 = vpack.c.b16 %v3490, %v3474
    %v4451 = vpack.c.b16 %v3491, %v3475
    %v4452 = vpack.c.b16 %v3492, %v3476
    %v4453 = vpack.c.b16 %v3493, %v3477
    %v4454 = vpack.c.b16 %v3494, %v3478
    %v4455 = vpack.c.b16 %v3495, %v3479
    %v4456 = vpack.c.b16 %v3496, %v3480
    %v4457 = vpack.c.b16 %v3497, %v3481
    %v4458 = vpack.c.b16 %v3498, %v3482
    %v4459 = vpack.c.b16 %v3499, %v3483
    %v4460 = vpack.c.b16 %v3500, %v3484
    %v4461 = vpack.c.b16 %v3501, %v3485
    %v4462 = vpack.c.b16 %v3502, %v3486
    %v4463 = vpack.c.b16 %v3503, %v3487
    %v4464 = vpack.c.b16 %v3520, %v3504
    %v4465 = vpack.c.b16 %v3521, %v3505
    %v4466 = vpack.c.b16 %v3522, %v3506
    %v4467 = vpack.c.b16 %v3523, %v3507
    %v4468 = vpack.c.b16 %v3524, %v3508
    %v4469 = vpack.c.b16 %v3525, %v3509
    %v4470 = vpack.c.b16 %v3526, %v3510
    %v4471 = vpack.c.b16 %v3527, %v3511
    %v4472 = vpack.c.b16 %v3528, %v3512
    %v4473 = vpack.c.b16 %v3529, %v3513
    %v4474 = vpack.c.b16 %v3530, %v3514
    %v4475 = vpack.c.b16 %v3531, %v3515
    %v4476 = vpack.c.b16 %v3532, %v3516
    %v4477 = vpack.c.b16 %v3533, %v3517
    %v4478 = vpack.c.b16 %v3534, %v3518
    %v4479 = vpack.c.b16 %v3535, %v3519
    %v4480 = vpack.c.b16 %v3552, %v3536
    %v4481 = vpack.c.b16 %v3553, %v3537
    %v4482 = vpack.c.b16 %v3554, %v3538
    %v4483 = vpack.c.b16 %v3555, %v3539
    %v4484 = vpack.c.b16 %v3556, %v3540
    %v4485 = vpack.c.b16 %v3557, %v3541
    %v4486 = vpack.c.b16 %v3558, %v3542
    %v4487 = vpack.c.b16 %v3559, %v3543
    %v4488 = vpack.c.b16 %v3560, %v3544
    %v4489 = vpack.c.b16 %v3561, %v3545
    %v4490 = vpack.c.b16 %v3562, %v3546
    %v4491 = vpack.c.b16 %v3563, %v3547
    %v4492 = vpack.c.b16 %v3564, %v3548
    %v4493 = vpack.c.b16 %v3565, %v3549
    %v4494 = vpack.c.b16 %v3566, %v3550
    %v4495 = vpack.c.b16 %v3567, %v3551
    %v4496 = vpack.c.b16 %v3584, %v3568
    %v4497 = vpack.c.b16 %v3585, %v3569
    %v4498 = vpack.c.b16 %v3586, %v3570
    %v4499 = vpack.c.b16 %v3587, %v3571
    %v4500 = vpack.c.b16 %v3588, %v3572
    %v4501 = vpack.c.b16 %v3589, %v3573
    %v4502 = vpack.c.b16 %v3590, %v3574
    %v4503 = vpack.c.b16 %v3591, %v3575
    %v4504 = vpack.c.b16 %v3592, %v3576
    %v4505 = vpack.c.b16 %v3593, %v3577
    %v4506 = vpack.c.b16 %v3594, %v3578
    %v4507 = vpack.c.b16 %v3595, %v3579
    %v4508 = vpack.c.b16 %v3596, %v3580
    %v4509 = vpack.c.b16 %v3597, %v3581
    %v4510 = vpack.c.b16 %v3598, %v3582
    %v4511 = vpack.c.b16 %v3599, %v3583
    %v4512 = vpack.c.b16 %v3616, %v3600
    %v4513 = vpack.c.b16 %v3617, %v3601
    %v4514 = vpack.c.b16 %v3618, %v3602
    %v4515 = vpack.c.b16 %v3619, %v3603
    %v4516 = vpack.c.b16 %v3620, %v3604
    %v4517 = vpack.c.b16 %v3621, %v3605
    %v4518 = vpack.c.b16 %v3622, %v3606
    %v4519 = vpack.c.b16 %v3623, %v3607
    %v4520 = vpack.c.b16 %v3624, %v3608
    %v4521 = vpack.c.b16 %v3625, %v3609
    %v4522 = vpack.c.b16 %v3626, %v3610
    %v4523 = vpack.c.b16 %v3627, %v3611
    %v4524 = vpack.c.b16 %v3628, %v3612
    %v4525 = vpack.c.b16 %v3629, %v3613
    %v4526 = vpack.c.b16 %v3630, %v3614
    %v4527 = vpack.c.b16 %v3631, %v3615
    %v4528 = vpack.c.b16 %v3648, %v3632
    %v4529 = vpack.c.b16 %v3649, %v3633
    %v4530 = vpack.c.b16 %v3650, %v3634
    %v4531 = vpack.c.b16 %v3651, %v3635
    %v4532 = vpack.c.b16 %v3652, %v3636
    %v4533 = vpack.c.b16 %v3653, %v3637
    %v4534 = vpack.c.b16 %v3654, %v3638
    %v4535 = vpack.c.b16 %v3655, %v3639
    %v4536 = vpack.c.b16 %v3656, %v3640
    %v4537 = vpack.c.b16 %v3657, %v3641
    %v4538 = vpack.c.b16 %v3658, %v3642
    %v4539 = vpack.c.b16 %v3659, %v3643
    %v4540 = vpack.c.b16 %v3660, %v3644
    %v4541 = vpack.c.b16 %v3661, %v3645
    %v4542 = vpack.c.b16 %v3662, %v3646
    %v4543 = vpack.c.b16 %v3663, %v3647
    %v4544 = vpack.c.b16 %v3680, %v3664
    %v4545 = vpack.c.b16 %v3681, %v3665
    %v4546 = vpack.c.b16 %v3682, %v3666
    %v4547 = vpack.c.b16 %v3683, %v3667
    %v4548 = vpack.c.b16 %v3684, %v3668
    %v4549 = vpack.c.b16 %v3685, %v3669
    %v4550 = vpack.c.b16 %v3686, %v3670
    %v4551 = vpack.c.b16 %v3687, %v3671
    %v4552 = vpack.c.b16 %v3688, %v3672
    %v4553 = vpack.c.b16 %v3689, %v3673
    %v4554 = vpack.c.b16 %v3690, %v3674
    %v4555 = vpack.c.b16 %v3691, %v3675
    %v4556 = vpack.c.b16 %v3692, %v3676
    %v4557 = vpack.c.b16 %v3693, %v3677
    %v4558 = vpack.c.b16 %v3694, %v3678
    %v4559 = vpack.c.b16 %v3695, %v3679
    %v4560 = vpack.c.b16 %v3712, %v3696
    %v4561 = vpack.c.b16 %v3713, %v3697
    %v4562 = vpack.c.b16 %v3714, %v3698
    %v4563 = vpack.c.b16 %v3715, %v3699
    %v4564 = vpack.c.b16 %v3716, %v3700
    %v4565 = vpack.c.b16 %v3717, %v3701
    %v4566 = vpack.c.b16 %v3718, %v3702
    %v4567 = vpack.c.b16 %v3719, %v3703
    %v4568 = vpack.c.b16 %v3720, %v3704
    %v4569 = vpack.c.b16 %v3721, %v3705
    %v4570 = vpack.c.b16 %v3722, %v3706
    %v4571 = vpack.c.b16 %v3723, %v3707
    %v4572 = vpack.c.b16 %v3724, %v3708
    %v4573 = vpack.c.b16 %v3725, %v3709
    %v4574 = vpack.c.b16 %v3726, %v3710
    %v4575 = vpack.c.b16 %v3727, %v3711
    %v4576 = vpack.c.b16 %v3744, %v3728
    %v4577 = vpack.c.b16 %v3745, %v3729
    %v4578 = vpack.c.b16 %v3746, %v3730
    %v4579 = vpack.c.b16 %v3747, %v3731
    %v4580 = vpack.c.b16 %v3748, %v3732
    %v4581 = vpack.c.b16 %v3749, %v3733
    %v4582 = vpack.c.b16 %v3750, %v3734
    %v4583 = vpack.c.b16 %v3751, %v3735
    %v4584 = vpack.c.b16 %v3752, %v3736
    %v4585 = vpack.c.b16 %v3753, %v3737
    %v4586 = vpack.c.b16 %v3754, %v3738
    %v4587 = vpack.c.b16 %v3755, %v3739
    %v4588 = vpack.c.b16 %v3756, %v3740
    %v4589 = vpack.c.b16 %v3757, %v3741
    %v4590 = vpack.c.b16 %v3758, %v3742
    %v4591 = vpack.c.b16 %v3759, %v3743
    %v4592 = vpack.c.b16 %v3776, %v3760
    %v4593 = vpack.c.b16 %v3777, %v3761
    %v4594 = vpack.c.b16 %v3778, %v3762
    %v4595 = vpack.c.b16 %v3779, %v3763
    %v4596 = vpack.c.b16 %v3780, %v3764
    %v4597 = vpack.c.b16 %v3781, %v3765
    %v4598 = vpack.c.b16 %v3782, %v3766
    %v4599 = vpack.c.b16 %v3783, %v3767
    %v4600 = vpack.c.b16 %v3784, %v3768
    %v4601 = vpack.c.b16 %v3785, %v3769
    %v4602 = vpack.c.b16 %v3786, %v3770
    %v4603 = vpack.c.b16 %v3787, %v3771
    %v4604 = vpack.c.b16 %v3788, %v3772
    %v4605 = vpack.c.b16 %v3789, %v3773
    %v4606 = vpack.c.b16 %v3790, %v3774
    %v4607 = vpack.c.b16 %v3791, %v3775
    %v4608 = vpack.c.b16 %v3808, %v3792
    %v4609 = vpack.c.b16 %v3809, %v3793
    %v4610 = vpack.c.b16 %v3810, %v3794
    %v4611 = vpack.c.b16 %v3811, %v3795
    %v4612 = vpack.c.b16 %v3812, %v3796
    %v4613 = vpack.c.b16 %v3813, %v3797
    %v4614 = vpack.c.b16 %v3814, %v3798
    %v4615 = vpack.c.b16 %v3815, %v3799
    %v4616 = vpack.c.b16 %v3816, %v3800
    %v4617 = vpack.c.b16 %v3817, %v3801
    %v4618 = vpack.c.b16 %v3818, %v3802
    %v4619 = vpack.c.b16 %v3819, %v3803
    %v4620 = vpack.c.b16 %v3820, %v3804
    %v4621 = vpack.c.b16 %v3821, %v3805
    %v4622 = vpack.c.b16 %v3822, %v3806
    %v4623 = vpack.c.b16 %v3823, %v3807
    %v4624 = vpack.c.b16 %v3840, %v3824
    %v4625 = vpack.c.b16 %v3841, %v3825
    %v4626 = vpack.c.b16 %v3842, %v3826
    %v4627 = vpack.c.b16 %v3843, %v3827
    %v4628 = vpack.c.b16 %v3844, %v3828
    %v4629 = vpack.c.b16 %v3845, %v3829
    %v4630 = vpack.c.b16 %v3846, %v3830
    %v4631 = vpack.c.b16 %v3847, %v3831
    %v4632 = vpack.c.b16 %v3848, %v3832
    %v4633 = vpack.c.b16 %v3849, %v3833
    %v4634 = vpack.c.b16 %v3850, %v3834
    %v4635 = vpack.c.b16 %v3851, %v3835
    %v4636 = vpack.c.b16 %v3852, %v3836
    %v4637 = vpack.c.b16 %v3853, %v3837
    %v4638 = vpack.c.b16 %v3854, %v3838
    %v4639 = vpack.c.b16 %v3855, %v3839
    %v4640 = vpack.c.b16 %v3872, %v3856
    %v4641 = vpack.c.b16 %v3873, %v3857
    %v4642 = vpack.c.b16 %v3874, %v3858
    %v4643 = vpack.c.b16 %v3875, %v3859
    %v4644 = vpack.c.b16 %v3876, %v3860
    %v4645 = vpack.c.b16 %v3877, %v3861
    %v4646 = vpack.c.b16 %v3878, %v3862
    %v4647 = vpack.c.b16 %v3879, %v3863
    %v4648 = vpack.c.b16 %v3880, %v3864
    %v4649 = vpack.c.b16 %v3881, %v3865
    %v4650 = vpack.c.b16 %v3882, %v3866
    %v4651 = vpack.c.b16 %v3883, %v3867
    %v4652 = vpack.c.b16 %v3884, %v3868
    %v4653 = vpack.c.b16 %v3885, %v3869
    %v4654 = vpack.c.b16 %v3886, %v3870
    %v4655 = vpack.c.b16 %v3887, %v3871
    %v4656 = vpack.c.b16 %v3904, %v3888
    %v4657 = vpack.c.b16 %v3905, %v3889
    %v4658 = vpack.c.b16 %v3906, %v3890
    %v4659 = vpack.c.b16 %v3907, %v3891
    %v4660 = vpack.c.b16 %v3908, %v3892
    %v4661 = vpack.c.b16 %v3909, %v3893
    %v4662 = vpack.c.b16 %v3910, %v3894
    %v4663 = vpack.c.b16 %v3911, %v3895
    %v4664 = vpack.c.b16 %v3912, %v3896
    %v4665 = vpack.c.b16 %v3913, %v3897
    %v4666 = vpack.c.b16 %v3914, %v3898
    %v4667 = vpack.c.b16 %v3915, %v3899
    %v4668 = vpack.c.b16 %v3916, %v3900
    %v4669 = vpack.c.b16 %v3917, %v3901
    %v4670 = vpack.c.b16 %v3918, %v3902
    %v4671 = vpack.c.b16 %v3919, %v3903
    %v4672 = vpack.c.b16 %v3936, %v3920
    %v4673 = vpack.c.b16 %v3937, %v3921
    %v4674 = vpack.c.b16 %v3938, %v3922
    %v4675 = vpack.c.b16 %v3939, %v3923
    %v4676 = vpack.c.b16 %v3940, %v3924
    %v4677 = vpack.c.b16 %v3941, %v3925
    %v4678 = vpack.c.b16 %v3942, %v3926
    %v4679 = vpack.c.b16 %v3943, %v3927
    %v4680 = vpack.c.b16 %v3944, %v3928
    %v4681 = vpack.c.b16 %v3945, %v3929
    %v4682 = vpack.c.b16 %v3946, %v3930
    %v4683 = vpack.c.b16 %v3947, %v3931
    %v4684 = vpack.c.b16 %v3948, %v3932
    %v4685 = vpack.c.b16 %v3949, %v3933
    %v4686 = vpack.c.b16 %v3950, %v3934
    %v4687 = vpack.c.b16 %v3951, %v3935
    %v4688 = vpack.c.b16 %v3968, %v3952
    %v4689 = vpack.c.b16 %v3969, %v3953
    %v4690 = vpack.c.b16 %v3970, %v3954
    %v4691 = vpack.c.b16 %v3971, %v3955
    %v4692 = vpack.c.b16 %v3972, %v3956
    %v4693 = vpack.c.b16 %v3973, %v3957
    %v4694 = vpack.c.b16 %v3974, %v3958
    %v4695 = vpack.c.b16 %v3975, %v3959
    %v4696 = vpack.c.b16 %v3976, %v3960
    %v4697 = vpack.c.b16 %v3977, %v3961
    %v4698 = vpack.c.b16 %v3978, %v3962
    %v4699 = vpack.c.b16 %v3979, %v3963
    %v4700 = vpack.c.b16 %v3980, %v3964
    %v4701 = vpack.c.b16 %v3981, %v3965
    %v4702 = vpack.c.b16 %v3982, %v3966
    %v4703 = vpack.c.b16 %v3983, %v3967
    %v4704 = vpack.c.b16 %v4000, %v3984
    %v4705 = vpack.c.b16 %v4001, %v3985
    %v4706 = vpack.c.b16 %v4002, %v3986
    %v4707 = vpack.c.b16 %v4003, %v3987
    %v4708 = vpack.c.b16 %v4004, %v3988
    %v4709 = vpack.c.b16 %v4005, %v3989
    %v4710 = vpack.c.b16 %v4006, %v3990
    %v4711 = vpack.c.b16 %v4007, %v3991
    %v4712 = vpack.c.b16 %v4008, %v3992
    %v4713 = vpack.c.b16 %v4009, %v3993
    %v4714 = vpack.c.b16 %v4010, %v3994
    %v4715 = vpack.c.b16 %v4011, %v3995
    %v4716 = vpack.c.b16 %v4012, %v3996
    %v4717 = vpack.c.b16 %v4013, %v3997
    %v4718 = vpack.c.b16 %v4014, %v3998
    %v4719 = vpack.c.b16 %v4015, %v3999
    %v4720 = vpack.c.b16 %v4032, %v4016
    %v4721 = vpack.c.b16 %v4033, %v4017
    %v4722 = vpack.c.b16 %v4034, %v4018
    %v4723 = vpack.c.b16 %v4035, %v4019
    %v4724 = vpack.c.b16 %v4036, %v4020
    %v4725 = vpack.c.b16 %v4037, %v4021
    %v4726 = vpack.c.b16 %v4038, %v4022
    %v4727 = vpack.c.b16 %v4039, %v4023
    %v4728 = vpack.c.b16 %v4040, %v4024
    %v4729 = vpack.c.b16 %v4041, %v4025
    %v4730 = vpack.c.b16 %v4042, %v4026
    %v4731 = vpack.c.b16 %v4043, %v4027
    %v4732 = vpack.c.b16 %v4044, %v4028
    %v4733 = vpack.c.b16 %v4045, %v4029
    %v4734 = vpack.c.b16 %v4046, %v4030
    %v4735 = vpack.c.b16 %v4047, %v4031
    %v4736 = vpack.c.b16 %v4064, %v4048
    %v4737 = vpack.c.b16 %v4065, %v4049
    %v4738 = vpack.c.b16 %v4066, %v4050
    %v4739 = vpack.c.b16 %v4067, %v4051
    %v4740 = vpack.c.b16 %v4068, %v4052
    %v4741 = vpack.c.b16 %v4069, %v4053
    %v4742 = vpack.c.b16 %v4070, %v4054
    %v4743 = vpack.c.b16 %v4071, %v4055
    %v4744 = vpack.c.b16 %v4072, %v4056
    %v4745 = vpack.c.b16 %v4073, %v4057
    %v4746 = vpack.c.b16 %v4074, %v4058
    %v4747 = vpack.c.b16 %v4075, %v4059
    %v4748 = vpack.c.b16 %v4076, %v4060
    %v4749 = vpack.c.b16 %v4077, %v4061
    %v4750 = vpack.c.b16 %v4078, %v4062
    %v4751 = vpack.c.b16 %v4079, %v4063
    %v4752 = vpack.c.b16 %v4096, %v4080
    %v4753 = vpack.c.b16 %v4097, %v4081
    %v4754 = vpack.c.b16 %v4098, %v4082
    %v4755 = vpack.c.b16 %v4099, %v4083
    %v4756 = vpack.c.b16 %v4100, %v4084
    %v4757 = vpack.c.b16 %v4101, %v4085
    %v4758 = vpack.c.b16 %v4102, %v4086
    %v4759 = vpack.c.b16 %v4103, %v4087
    %v4760 = vpack.c.b16 %v4104, %v4088
    %v4761 = vpack.c.b16 %v4105, %v4089
    %v4762 = vpack.c.b16 %v4106, %v4090
    %v4763 = vpack.c.b16 %v4107, %v4091
    %v4764 = vpack.c.b16 %v4108, %v4092
    %v4765 = vpack.c.b16 %v4109, %v4093
    %v4766 = vpack.c.b16 %v4110, %v4094
    %v4767 = vpack.c.b16 %v4111, %v4095
    %v4768 = vpack.c.b16 %v4128, %v4112
    %v4769 = vpack.c.b16 %v4129, %v4113
    %v4770 = vpack.c.b16 %v4130, %v4114
    %v4771 = vpack.c.b16 %v4131, %v4115
    %v4772 = vpack.c.b16 %v4132, %v4116
    %v4773 = vpack.c.b16 %v4133, %v4117
    %v4774 = vpack.c.b16 %v4134, %v4118
    %v4775 = vpack.c.b16 %v4135, %v4119
    %v4776 = vpack.c.b16 %v4136, %v4120
    %v4777 = vpack.c.b16 %v4137, %v4121
    %v4778 = vpack.c.b16 %v4138, %v4122
    %v4779 = vpack.c.b16 %v4139, %v4123
    %v4780 = vpack.c.b16 %v4140, %v4124
    %v4781 = vpack.c.b16 %v4141, %v4125
    %v4782 = vpack.c.b16 %v4142, %v4126
    %v4783 = vpack.c.b16 %v4143, %v4127
    %v4784 = vpack.c.b16 %v4160, %v4144
    %v4785 = vpack.c.b16 %v4161, %v4145
    %v4786 = vpack.c.b16 %v4162, %v4146
    %v4787 = vpack.c.b16 %v4163, %v4147
    %v4788 = vpack.c.b16 %v4164, %v4148
    %v4789 = vpack.c.b16 %v4165, %v4149
    %v4790 = vpack.c.b16 %v4166, %v4150
    %v4791 = vpack.c.b16 %v4167, %v4151
    %v4792 = vpack.c.b16 %v4168, %v4152
    %v4793 = vpack.c.b16 %v4169, %v4153
    %v4794 = vpack.c.b16 %v4170, %v4154
    %v4795 = vpack.c.b16 %v4171, %v4155
    %v4796 = vpack.c.b16 %v4172, %v4156
    %v4797 = vpack.c.b16 %v4173, %v4157
    %v4798 = vpack.c.b16 %v4174, %v4158
    %v4799 = vpack.c.b16 %v4175, %v4159
    %v4800 = vpack.c.b16 %v4192, %v4176
    %v4801 = vpack.c.b16 %v4193, %v4177
    %v4802 = vpack.c.b16 %v4194, %v4178
    %v4803 = vpack.c.b16 %v4195, %v4179
    %v4804 = vpack.c.b16 %v4196, %v4180
    %v4805 = vpack.c.b16 %v4197, %v4181
    %v4806 = vpack.c.b16 %v4198, %v4182
    %v4807 = vpack.c.b16 %v4199, %v4183
    %v4808 = vpack.c.b16 %v4200, %v4184
    %v4809 = vpack.c.b16 %v4201, %v4185
    %v4810 = vpack.c.b16 %v4202, %v4186
    %v4811 = vpack.c.b16 %v4203, %v4187
    %v4812 = vpack.c.b16 %v4204, %v4188
    %v4813 = vpack.c.b16 %v4205, %v4189
    %v4814 = vpack.c.b16 %v4206, %v4190
    %v4815 = vpack.c.b16 %v4207, %v4191
    %v4816 = vpack.c.b16 %v4224, %v4208
    %v4817 = vpack.c.b16 %v4225, %v4209
    %v4818 = vpack.c.b16 %v4226, %v4210
    %v4819 = vpack.c.b16 %v4227, %v4211
    %v4820 = vpack.c.b16 %v4228, %v4212
    %v4821 = vpack.c.b16 %v4229, %v4213
    %v4822 = vpack.c.b16 %v4230, %v4214
    %v4823 = vpack.c.b16 %v4231, %v4215
    %v4824 = vpack.c.b16 %v4232, %v4216
    %v4825 = vpack.c.b16 %v4233, %v4217
    %v4826 = vpack.c.b16 %v4234, %v4218
    %v4827 = vpack.c.b16 %v4235, %v4219
    %v4828 = vpack.c.b16 %v4236, %v4220
    %v4829 = vpack.c.b16 %v4237, %v4221
    %v4830 = vpack.c.b16 %v4238, %v4222
    %v4831 = vpack.c.b16 %v4239, %v4223
    %v4832 = vpack.c.b16 %v4256, %v4240
    %v4833 = vpack.c.b16 %v4257, %v4241
    %v4834 = vpack.c.b16 %v4258, %v4242
    %v4835 = vpack.c.b16 %v4259, %v4243
    %v4836 = vpack.c.b16 %v4260, %v4244
    %v4837 = vpack.c.b16 %v4261, %v4245
    %v4838 = vpack.c.b16 %v4262, %v4246
    %v4839 = vpack.c.b16 %v4263, %v4247
    %v4840 = vpack.c.b16 %v4264, %v4248
    %v4841 = vpack.c.b16 %v4265, %v4249
    %v4842 = vpack.c.b16 %v4266, %v4250
    %v4843 = vpack.c.b16 %v4267, %v4251
    %v4844 = vpack.c.b16 %v4268, %v4252
    %v4845 = vpack.c.b16 %v4269, %v4253
    %v4846 = vpack.c.b16 %v4270, %v4254
    %v4847 = vpack.c.b16 %v4271, %v4255
    %v4848 = vpack.c.b16 %v4288, %v4272
    %v4849 = vpack.c.b16 %v4289, %v4273
    %v4850 = vpack.c.b16 %v4290, %v4274
    %v4851 = vpack.c.b16 %v4291, %v4275
    %v4852 = vpack.c.b16 %v4292, %v4276
    %v4853 = vpack.c.b16 %v4293, %v4277
    %v4854 = vpack.c.b16 %v4294, %v4278
    %v4855 = vpack.c.b16 %v4295, %v4279
    %v4856 = vpack.c.b16 %v4296, %v4280
    %v4857 = vpack.c.b16 %v4297, %v4281
    %v4858 = vpack.c.b16 %v4298, %v4282
    %v4859 = vpack.c.b16 %v4299, %v4283
    %v4860 = vpack.c.b16 %v4300, %v4284
    %v4861 = vpack.c.b16 %v4301, %v4285
    %v4862 = vpack.c.b16 %v4302, %v4286
    %v4863 = vpack.c.b16 %v4303, %v4287
    %v4864 = vpack.c.b16 %v4320, %v4304
    %v4865 = vpack.c.b16 %v4321, %v4305
    %v4866 = vpack.c.b16 %v4322, %v4306
    %v4867 = vpack.c.b16 %v4323, %v4307
    %v4868 = vpack.c.b16 %v4324, %v4308
    %v4869 = vpack.c.b16 %v4325, %v4309
    %v4870 = vpack.c.b16 %v4326, %v4310
    %v4871 = vpack.c.b16 %v4327, %v4311
    %v4872 = vpack.c.b16 %v4328, %v4312
    %v4873 = vpack.c.b16 %v4329, %v4313
    %v4874 = vpack.c.b16 %v4330, %v4314
    %v4875 = vpack.c.b16 %v4331, %v4315
    %v4876 = vpack.c.b16 %v4332, %v4316
    %v4877 = vpack.c.b16 %v4333, %v4317
    %v4878 = vpack.c.b16 %v4334, %v4318
    %v4879 = vpack.c.b16 %v4335, %v4319
    %v4880 = vpack.c.b16 %v4352, %v4336
    %v4881 = vpack.c.b16 %v4353, %v4337
    %v4882 = vpack.c.b16 %v4354, %v4338
    %v4883 = vpack.c.b16 %v4355, %v4339
    %v4884 = vpack.c.b16 %v4356, %v4340
    %v4885 = vpack.c.b16 %v4357, %v4341
    %v4886 = vpack.c.b16 %v4358, %v4342
    %v4887 = vpack.c.b16 %v4359, %v4343
    %v4888 = vpack.c.b16 %v4360, %v4344
    %v4889 = vpack.c.b16 %v4361, %v4345
    %v4890 = vpack.c.b16 %v4362, %v4346
    %v4891 = vpack.c.b16 %v4363, %v4347
    %v4892 = vpack.c.b16 %v4364, %v4348
    %v4893 = vpack.c.b16 %v4365, %v4349
    %v4894 = vpack.c.b16 %v4366, %v4350
    %v4895 = vpack.c.b16 %v4367, %v4351
    %v4896 = vpack.c.b16 %v4384, %v4368
    %v4897 = vpack.c.b16 %v4385, %v4369
    %v4898 = vpack.c.b16 %v4386, %v4370
    %v4899 = vpack.c.b16 %v4387, %v4371
    %v4900 = vpack.c.b16 %v4388, %v4372
    %v4901 = vpack.c.b16 %v4389, %v4373
    %v4902 = vpack.c.b16 %v4390, %v4374
    %v4903 = vpack.c.b16 %v4391, %v4375
    %v4904 = vpack.c.b16 %v4392, %v4376
    %v4905 = vpack.c.b16 %v4393, %v4377
    %v4906 = vpack.c.b16 %v4394, %v4378
    %v4907 = vpack.c.b16 %v4395, %v4379
    %v4908 = vpack.c.b16 %v4396, %v4380
    %v4909 = vpack.c.b16 %v4397, %v4381
    %v4910 = vpack.c.b16 %v4398, %v4382
    %v4911 = vpack.c.b16 %v4399, %v4383
    %5424 = vmatprep.subr.bf16.mxu0 %v4401
    %5425 = vmatpush1.bf16.msra.mxu0 %v4400
    %5426 = vmatprep.subr.bf16.mxu0 %v4417
    %5427 = vmatpush1.bf16.msra.mxu0 %v4416
    %5428 = vmatprep.subr.bf16.mxu0 %v4433
    %5429 = vmatpush1.bf16.msra.mxu0 %v4432
    %5430 = vmatprep.subr.bf16.mxu0 %v4449
    %5431 = vmatpush1.bf16.msra.mxu0 %v4448
    %5432 = vmatprep.subr.bf16.mxu0 %v4465
    %5433 = vmatpush1.bf16.msra.mxu0 %v4464
    %5434 = vmatprep.subr.bf16.mxu0 %v4481
    %5435 = vmatpush1.bf16.msra.mxu0 %v4480
    %5436 = vmatprep.subr.bf16.mxu0 %v4497
    %5437 = vmatpush1.bf16.msra.mxu0 %v4496
    %5438 = vmatprep.subr.bf16.mxu0 %v4513
    %5439 = vmatpush1.bf16.msra.mxu0 %v4512
    %5440 = vmatprep.subr.bf16.mxu0 %v4529
    %5441 = vmatpush1.bf16.msra.mxu0 %v4528
    %5442 = vmatprep.subr.bf16.mxu0 %v4545
    %5443 = vmatpush1.bf16.msra.mxu0 %v4544
    %5444 = vmatprep.subr.bf16.mxu0 %v4561
    %5445 = vmatpush1.bf16.msra.mxu0 %v4560
    %5446 = vmatprep.subr.bf16.mxu0 %v4577
    %5447 = vmatpush1.bf16.msra.mxu0 %v4576
    %5448 = vmatprep.subr.bf16.mxu0 %v4593
    %5449 = vmatpush1.bf16.msra.mxu0 %v4592
    %5450 = vmatprep.subr.bf16.mxu0 %v4609
    %5451 = vmatpush1.bf16.msra.mxu0 %v4608
    %5452 = vmatprep.subr.bf16.mxu0 %v4625
    %5453 = vmatpush1.bf16.msra.mxu0 %v4624
    %5454 = vmatprep.subr.bf16.mxu0 %v4641
    %5455 = vmatpush1.bf16.msra.mxu0 %v4640
    %5456 = vmatprep.mubr.bf16.mxu0 %v2265
    %5457 = vmatmul.mubr.bf16.gmra.mrb[0].mxu0 %v2264
    %v5458 = vpop.f32.mrb[0].mxu0
    %v5459 = vadd.f32 %v2787, %v5458
    %v5460 = vpop.f32.mrb[0].mxu0
    %v5461 = vadd.f32 %v2791, %v5460
    %v5462 = vpop.f32.mrb[0].mxu0
    %v5463 = vadd.f32 %v2787, %v5462
    %v5464 = vpop.f32.mrb[0].mxu0
    %v5465 = vadd.f32 %v2791, %v5464
    %5466 = vdwg.mxu0
    %5467 = vmatprep.subr.bf16.mxu0 %v4657
    %5468 = vmatpush1.bf16.msra.mxu0 %v4656
    %5469 = vmatprep.subr.bf16.mxu0 %v4673
    %5470 = vmatpush1.bf16.msra.mxu0 %v4672
    %5471 = vmatprep.subr.bf16.mxu0 %v4689
    %5472 = vmatpush1.bf16.msra.mxu0 %v4688
    %5473 = vmatprep.subr.bf16.mxu0 %v4705
    %5474 = vmatpush1.bf16.msra.mxu0 %v4704
    %5475 = vmatprep.subr.bf16.mxu0 %v4721
    %5476 = vmatpush1.bf16.msra.mxu0 %v4720
    %5477 = vmatprep.subr.bf16.mxu0 %v4737
    %5478 = vmatpush1.bf16.msra.mxu0 %v4736
    %5479 = vmatprep.subr.bf16.mxu0 %v4753
    %5480 = vmatpush1.bf16.msra.mxu0 %v4752
    %5481 = vmatprep.subr.bf16.mxu0 %v4769
    %5482 = vmatpush1.bf16.msra.mxu0 %v4768
    %5483 = vmatprep.subr.bf16.mxu0 %v4785
    %5484 = vmatpush1.bf16.msra.mxu0 %v4784
    %5485 = vmatprep.subr.bf16.mxu0 %v4801
    %5486 = vmatpush1.bf16.msra.mxu0 %v4800
    %5487 = vmatprep.subr.bf16.mxu0 %v4817
    %5488 = vmatpush1.bf16.msra.mxu0 %v4816
    %5489 = vmatprep.subr.bf16.mxu0 %v4833
    %5490 = vmatpush1.bf16.msra.mxu0 %v4832
    %5491 = vmatprep.subr.bf16.mxu0 %v4849
    %5492 = vmatpush1.bf16.msra.mxu0 %v4848
    %5493 = vmatprep.subr.bf16.mxu0 %v4865
    %5494 = vmatpush1.bf16.msra.mxu0 %v4864
    %5495 = vmatprep.subr.bf16.mxu0 %v4881
    %5496 = vmatpush1.bf16.msra.mxu0 %v4880
    %5497 = vmatprep.subr.bf16.mxu0 %v4897
    %5498 = vmatpush1.bf16.msra.mxu0 %v4896
    %5499 = vmatprep.mubr.bf16.mxu0 %v2267
    %5500 = vmatmul.mubr.bf16.gmra.mrb[0].mxu0 %v2266
    %v5501 = vpop.f32.mrb[0].mxu0
    %v5502 = vadd.f32 %v5459, %v5501
    %v5503 = vpop.f32.mrb[0].mxu0
    %v5504 = vadd.f32 %v5461, %v5503
    %v5505 = vpop.f32.mrb[0].mxu0
    %v5506 = vadd.f32 %v5463, %v5505
    %v5507 = vpop.f32.mrb[0].mxu0
    %v5508 = vadd.f32 %v5465, %v5507
    %5509 = vdwg.mxu0
    %5510 = vmatprep.subr.bf16.mxu0 %v4403
    %5511 = vmatpush1.bf16.msra.mxu0 %v4402
    %5512 = vmatprep.subr.bf16.mxu0 %v4419
    %5513 = vmatpush1.bf16.msra.mxu0 %v4418
    %5514 = vmatprep.subr.bf16.mxu0 %v4435
    %5515 = vmatpush1.bf16.msra.mxu0 %v4434
    %5516 = vmatprep.subr.bf16.mxu0 %v4451
    %5517 = vmatpush1.bf16.msra.mxu0 %v4450
    %5518 = vmatprep.subr.bf16.mxu0 %v4467
    %5519 = vmatpush1.bf16.msra.mxu0 %v4466
    %5520 = vmatprep.subr.bf16.mxu0 %v4483
    %5521 = vmatpush1.bf16.msra.mxu0 %v4482
    %5522 = vmatprep.subr.bf16.mxu0 %v4499
    %5523 = vmatpush1.bf16.msra.mxu0 %v4498
    %5524 = vmatprep.subr.bf16.mxu0 %v4515
    %5525 = vmatpush1.bf16.msra.mxu0 %v4514
    %5526 = vmatprep.subr.bf16.mxu0 %v4531
    %5527 = vmatpush1.bf16.msra.mxu0 %v4530
    %5528 = vmatprep.subr.bf16.mxu0 %v4547
    %5529 = vmatpush1.bf16.msra.mxu0 %v4546
    %5530 = vmatprep.subr.bf16.mxu0 %v4563
    %5531 = vmatpush1.bf16.msra.mxu0 %v4562
    %5532 = vmatprep.subr.bf16.mxu0 %v4579
    %5533 = vmatpush1.bf16.msra.mxu0 %v4578
    %5534 = vmatprep.subr.bf16.mxu0 %v4595
    %5535 = vmatpush1.bf16.msra.mxu0 %v4594
    %5536 = vmatprep.subr.bf16.mxu0 %v4611
    %5537 = vmatpush1.bf16.msra.mxu0 %v4610
    %5538 = vmatprep.subr.bf16.mxu0 %v4627
    %5539 = vmatpush1.bf16.msra.mxu0 %v4626
    %5540 = vmatprep.subr.bf16.mxu0 %v4643
    %5541 = vmatpush1.bf16.msra.mxu0 %v4642
    %5542 = vmatprep.mubr.bf16.mxu0 %v2265
    %5543 = vmatmul.mubr.bf16.gmra.mrb[0].mxu0 %v2264
    %v5544 = vpop.f32.mrb[0].mxu0
    %v5545 = vadd.f32 %v2795, %v5544
    %v5546 = vpop.f32.mrb[0].mxu0
    %v5547 = vadd.f32 %v2799, %v5546
    %v5548 = vpop.f32.mrb[0].mxu0
    %v5549 = vadd.f32 %v2795, %v5548
    %v5550 = vpop.f32.mrb[0].mxu0
    %v5551 = vadd.f32 %v2799, %v5550
    %5552 = vdwg.mxu0
    %5553 = vmatprep.subr.bf16.mxu0 %v4659
    %5554 = vmatpush1.bf16.msra.mxu0 %v4658
    %5555 = vmatprep.subr.bf16.mxu0 %v4675
    %5556 = vmatpush1.bf16.msra.mxu0 %v4674
    %5557 = vmatprep.subr.bf16.mxu0 %v4691
    %5558 = vmatpush1.bf16.msra.mxu0 %v4690
    %5559 = vmatprep.subr.bf16.mxu0 %v4707
    %5560 = vmatpush1.bf16.msra.mxu0 %v4706
    %5561 = vmatprep.subr.bf16.mxu0 %v4723
    %5562 = vmatpush1.bf16.msra.mxu0 %v4722
    %5563 = vmatprep.subr.bf16.mxu0 %v4739
    %5564 = vmatpush1.bf16.msra.mxu0 %v4738
    %5565 = vmatprep.subr.bf16.mxu0 %v4755
    %5566 = vmatpush1.bf16.msra.mxu0 %v4754
    %5567 = vmatprep.subr.bf16.mxu0 %v4771
    %5568 = vmatpush1.bf16.msra.mxu0 %v4770
    %5569 = vmatprep.subr.bf16.mxu0 %v4787
    %5570 = vmatpush1.bf16.msra.mxu0 %v4786
    %5571 = vmatprep.subr.bf16.mxu0 %v4803
    %5572 = vmatpush1.bf16.msra.mxu0 %v4802
    %5573 = vmatprep.subr.bf16.mxu0 %v4819
    %5574 = vmatpush1.bf16.msra.mxu0 %v4818
    %5575 = vmatprep.subr.bf16.mxu0 %v4835
    %5576 = vmatpush1.bf16.msra.mxu0 %v4834
    %5577 = vmatprep.subr.bf16.mxu0 %v4851
    %5578 = vmatpush1.bf16.msra.mxu0 %v4850
    %5579 = vmatprep.subr.bf16.mxu0 %v4867
    %5580 = vmatpush1.bf16.msra.mxu0 %v4866
    %5581 = vmatprep.subr.bf16.mxu0 %v4883
    %5582 = vmatpush1.bf16.msra.mxu0 %v4882
    %5583 = vmatprep.subr.bf16.mxu0 %v4899
    %5584 = vmatpush1.bf16.msra.mxu0 %v4898
    %5585 = vmatprep.mubr.bf16.mxu0 %v2267
    %5586 = vmatmul.mubr.bf16.gmra.mrb[0].mxu0 %v2266
    %v5587 = vpop.f32.mrb[0].mxu0
    %v5588 = vadd.f32 %v5545, %v5587
    %v5589 = vpop.f32.mrb[0].mxu0
    %v5590 = vadd.f32 %v5547, %v5589
    %v5591 = vpop.f32.mrb[0].mxu0
    %v5592 = vadd.f32 %v5549, %v5591
    %v5593 = vpop.f32.mrb[0].mxu0
    %v5594 = vadd.f32 %v5551, %v5593
    %5595 = vdwg.mxu0
    %5596 = vmatprep.subr.bf16.mxu0 %v4405
    %5597 = vmatpush1.bf16.msra.mxu0 %v4404
    %5598 = vmatprep.subr.bf16.mxu0 %v4421
    %5599 = vmatpush1.bf16.msra.mxu0 %v4420
    %5600 = vmatprep.subr.bf16.mxu0 %v4437
    %5601 = vmatpush1.bf16.msra.mxu0 %v4436
    %5602 = vmatprep.subr.bf16.mxu0 %v4453
    %5603 = vmatpush1.bf16.msra.mxu0 %v4452
    %5604 = vmatprep.subr.bf16.mxu0 %v4469
    %5605 = vmatpush1.bf16.msra.mxu0 %v4468
    %5606 = vmatprep.subr.bf16.mxu0 %v4485
    %5607 = vmatpush1.bf16.msra.mxu0 %v4484
    %5608 = vmatprep.subr.bf16.mxu0 %v4501
    %5609 = vmatpush1.bf16.msra.mxu0 %v4500
    %5610 = vmatprep.subr.bf16.mxu0 %v4517
    %5611 = vmatpush1.bf16.msra.mxu0 %v4516
    %5612 = vmatprep.subr.bf16.mxu0 %v4533
    %5613 = vmatpush1.bf16.msra.mxu0 %v4532
    %5614 = vmatprep.subr.bf16.mxu0 %v4549
    %5615 = vmatpush1.bf16.msra.mxu0 %v4548
    %5616 = vmatprep.subr.bf16.mxu0 %v4565
    %5617 = vmatpush1.bf16.msra.mxu0 %v4564
    %5618 = vmatprep.subr.bf16.mxu0 %v4581
    %5619 = vmatpush1.bf16.msra.mxu0 %v4580
    %5620 = vmatprep.subr.bf16.mxu0 %v4597
    %5621 = vmatpush1.bf16.msra.mxu0 %v4596
    %5622 = vmatprep.subr.bf16.mxu0 %v4613
    %5623 = vmatpush1.bf16.msra.mxu0 %v4612
    %5624 = vmatprep.subr.bf16.mxu0 %v4629
    %5625 = vmatpush1.bf16.msra.mxu0 %v4628
    %5626 = vmatprep.subr.bf16.mxu0 %v4645
    %5627 = vmatpush1.bf16.msra.mxu0 %v4644
    %5628 = vmatprep.mubr.bf16.mxu0 %v2265
    %5629 = vmatmul.mubr.bf16.gmra.mrb[0].mxu0 %v2264
    %v5630 = vpop.f32.mrb[0].mxu0
    %v5631 = vadd.f32 %v2803, %v5630
    %v5632 = vpop.f32.mrb[0].mxu0
    %v5633 = vadd.f32 %v2807, %v5632
    %v5634 = vpop.f32.mrb[0].mxu0
    %v5635 = vadd.f32 %v2803, %v5634
    %v5636 = vpop.f32.mrb[0].mxu0
    %v5637 = vadd.f32 %v2807, %v5636
    %5638 = vdwg.mxu0
    %5639 = vmatprep.subr.bf16.mxu0 %v4661
    %5640 = vmatpush1.bf16.msra.mxu0 %v4660
    %5641 = vmatprep.subr.bf16.mxu0 %v4677
    %5642 = vmatpush1.bf16.msra.mxu0 %v4676
    %5643 = vmatprep.subr.bf16.mxu0 %v4693
    %5644 = vmatpush1.bf16.msra.mxu0 %v4692
    %5645 = vmatprep.subr.bf16.mxu0 %v4709
    %5646 = vmatpush1.bf16.msra.mxu0 %v4708
    %5647 = vmatprep.subr.bf16.mxu0 %v4725
    %5648 = vmatpush1.bf16.msra.mxu0 %v4724
    %5649 = vmatprep.subr.bf16.mxu0 %v4741
    %5650 = vmatpush1.bf16.msra.mxu0 %v4740
    %5651 = vmatprep.subr.bf16.mxu0 %v4757
    %5652 = vmatpush1.bf16.msra.mxu0 %v4756
    %5653 = vmatprep.subr.bf16.mxu0 %v4773
    %5654 = vmatpush1.bf16.msra.mxu0 %v4772
    %5655 = vmatprep.subr.bf16.mxu0 %v4789
    %5656 = vmatpush1.bf16.msra.mxu0 %v4788
    %5657 = vmatprep.subr.bf16.mxu0 %v4805
    %5658 = vmatpush1.bf16.msra.mxu0 %v4804
    %5659 = vmatprep.subr.bf16.mxu0 %v4821
    %5660 = vmatpush1.bf16.msra.mxu0 %v4820
    %5661 = vmatprep.subr.bf16.mxu0 %v4837
    %5662 = vmatpush1.bf16.msra.mxu0 %v4836
    %5663 = vmatprep.subr.bf16.mxu0 %v4853
    %5664 = vmatpush1.bf16.msra.mxu0 %v4852
    %5665 = vmatprep.subr.bf16.mxu0 %v4869
    %5666 = vmatpush1.bf16.msra.mxu0 %v4868
    %5667 = vmatprep.subr.bf16.mxu0 %v4885
    %5668 = vmatpush1.bf16.msra.mxu0 %v4884
    %5669 = vmatprep.subr.bf16.mxu0 %v4901
    %5670 = vmatpush1.bf16.msra.mxu0 %v4900
    %5671 = vmatprep.mubr.bf16.mxu0 %v2267
    %5672 = vmatmul.mubr.bf16.gmra.mrb[0].mxu0 %v2266
    %v5673 = vpop.f32.mrb[0].mxu0
    %v5674 = vadd.f32 %v5631, %v5673
    %v5675 = vpop.f32.mrb[0].mxu0
    %v5676 = vadd.f32 %v5633, %v5675
    %v5677 = vpop.f32.mrb[0].mxu0
    %v5678 = vadd.f32 %v5635, %v5677
    %v5679 = vpop.f32.mrb[0].mxu0
    %v5680 = vadd.f32 %v5637, %v5679
    %5681 = vdwg.mxu0
    %5682 = vmatprep.subr.bf16.mxu0 %v4407
    %5683 = vmatpush1.bf16.msra.mxu0 %v4406
    %5684 = vmatprep.subr.bf16.mxu0 %v4423
    %5685 = vmatpush1.bf16.msra.mxu0 %v4422
    %5686 = vmatprep.subr.bf16.mxu0 %v4439
    %5687 = vmatpush1.bf16.msra.mxu0 %v4438
    %5688 = vmatprep.subr.bf16.mxu0 %v4455
    %5689 = vmatpush1.bf16.msra.mxu0 %v4454
    %5690 = vmatprep.subr.bf16.mxu0 %v4471
    %5691 = vmatpush1.bf16.msra.mxu0 %v4470
    %5692 = vmatprep.subr.bf16.mxu0 %v4487
    %5693 = vmatpush1.bf16.msra.mxu0 %v4486
    %5694 = vmatprep.subr.bf16.mxu0 %v4503
    %5695 = vmatpush1.bf16.msra.mxu0 %v4502
    %5696 = vmatprep.subr.bf16.mxu0 %v4519
    %5697 = vmatpush1.bf16.msra.mxu0 %v4518
    %5698 = vmatprep.subr.bf16.mxu0 %v4535
    %5699 = vmatpush1.bf16.msra.mxu0 %v4534
    %5700 = vmatprep.subr.bf16.mxu0 %v4551
    %5701 = vmatpush1.bf16.msra.mxu0 %v4550
    %5702 = vmatprep.subr.bf16.mxu0 %v4567
    %5703 = vmatpush1.bf16.msra.mxu0 %v4566
    %5704 = vmatprep.subr.bf16.mxu0 %v4583
    %5705 = vmatpush1.bf16.msra.mxu0 %v4582
    %5706 = vmatprep.subr.bf16.mxu0 %v4599
    %5707 = vmatpush1.bf16.msra.mxu0 %v4598
    %5708 = vmatprep.subr.bf16.mxu0 %v4615
    %5709 = vmatpush1.bf16.msra.mxu0 %v4614
    %5710 = vmatprep.subr.bf16.mxu0 %v4631
    %5711 = vmatpush1.bf16.msra.mxu0 %v4630
    %5712 = vmatprep.subr.bf16.mxu0 %v4647
    %5713 = vmatpush1.bf16.msra.mxu0 %v4646
    %5714 = vmatprep.mubr.bf16.mxu0 %v2265
    %5715 = vmatmul.mubr.bf16.gmra.mrb[0].mxu0 %v2264
    %v5716 = vpop.f32.mrb[0].mxu0
    %v5717 = vadd.f32 %v2811, %v5716
    %v5718 = vpop.f32.mrb[0].mxu0
    %v5719 = vadd.f32 %v2815, %v5718
    %v5720 = vpop.f32.mrb[0].mxu0
    %v5721 = vadd.f32 %v2811, %v5720
    %v5722 = vpop.f32.mrb[0].mxu0
    %v5723 = vadd.f32 %v2815, %v5722
    %5724 = vdwg.mxu0
    %5725 = vmatprep.subr.bf16.mxu0 %v4663
    %5726 = vmatpush1.bf16.msra.mxu0 %v4662
    %5727 = vmatprep.subr.bf16.mxu0 %v4679
    %5728 = vmatpush1.bf16.msra.mxu0 %v4678
    %5729 = vmatprep.subr.bf16.mxu0 %v4695
    %5730 = vmatpush1.bf16.msra.mxu0 %v4694
    %5731 = vmatprep.subr.bf16.mxu0 %v4711
    %5732 = vmatpush1.bf16.msra.mxu0 %v4710
    %5733 = vmatprep.subr.bf16.mxu0 %v4727
    %5734 = vmatpush1.bf16.msra.mxu0 %v4726
    %5735 = vmatprep.subr.bf16.mxu0 %v4743
    %5736 = vmatpush1.bf16.msra.mxu0 %v4742
    %5737 = vmatprep.subr.bf16.mxu0 %v4759
    %5738 = vmatpush1.bf16.msra.mxu0 %v4758
    %5739 = vmatprep.subr.bf16.mxu0 %v4775
    %5740 = vmatpush1.bf16.msra.mxu0 %v4774
    %5741 = vmatprep.subr.bf16.mxu0 %v4791
    %5742 = vmatpush1.bf16.msra.mxu0 %v4790
    %5743 = vmatprep.subr.bf16.mxu0 %v4807
    %5744 = vmatpush1.bf16.msra.mxu0 %v4806
    %5745 = vmatprep.subr.bf16.mxu0 %v4823
    %5746 = vmatpush1.bf16.msra.mxu0 %v4822
    %5747 = vmatprep.subr.bf16.mxu0 %v4839
    %5748 = vmatpush1.bf16.msra.mxu0 %v4838
    %5749 = vmatprep.subr.bf16.mxu0 %v4855
    %5750 = vmatpush1.bf16.msra.mxu0 %v4854
    %5751 = vmatprep.subr.bf16.mxu0 %v4871
    %5752 = vmatpush1.bf16.msra.mxu0 %v4870
    %5753 = vmatprep.subr.bf16.mxu0 %v4887
    %5754 = vmatpush1.bf16.msra.mxu0 %v4886
    %5755 = vmatprep.subr.bf16.mxu0 %v4903
    %5756 = vmatpush1.bf16.msra.mxu0 %v4902
    %5757 = vmatprep.mubr.bf16.mxu0 %v2267
    %5758 = vmatmul.mubr.bf16.gmra.mrb[0].mxu0 %v2266
    %v5759 = vpop.f32.mrb[0].mxu0
    %v5760 = vadd.f32 %v5717, %v5759
    %v5761 = vpop.f32.mrb[0].mxu0
    %v5762 = vadd.f32 %v5719, %v5761
    %v5763 = vpop.f32.mrb[0].mxu0
    %v5764 = vadd.f32 %v5721, %v5763
    %v5765 = vpop.f32.mrb[0].mxu0
    %v5766 = vadd.f32 %v5723, %v5765
    %5767 = vdwg.mxu0
    %5768 = vmatprep.subr.bf16.mxu0 %v4409
    %5769 = vmatpush1.bf16.msra.mxu0 %v4408
    %5770 = vmatprep.subr.bf16.mxu0 %v4425
    %5771 = vmatpush1.bf16.msra.mxu0 %v4424
    %5772 = vmatprep.subr.bf16.mxu0 %v4441
    %5773 = vmatpush1.bf16.msra.mxu0 %v4440
    %5774 = vmatprep.subr.bf16.mxu0 %v4457
    %5775 = vmatpush1.bf16.msra.mxu0 %v4456
    %5776 = vmatprep.subr.bf16.mxu0 %v4473
    %5777 = vmatpush1.bf16.msra.mxu0 %v4472
    %5778 = vmatprep.subr.bf16.mxu0 %v4489
    %5779 = vmatpush1.bf16.msra.mxu0 %v4488
    %5780 = vmatprep.subr.bf16.mxu0 %v4505
    %5781 = vmatpush1.bf16.msra.mxu0 %v4504
    %5782 = vmatprep.subr.bf16.mxu0 %v4521
    %5783 = vmatpush1.bf16.msra.mxu0 %v4520
    %5784 = vmatprep.subr.bf16.mxu0 %v4537
    %5785 = vmatpush1.bf16.msra.mxu0 %v4536
    %5786 = vmatprep.subr.bf16.mxu0 %v4553
    %5787 = vmatpush1.bf16.msra.mxu0 %v4552
    %5788 = vmatprep.subr.bf16.mxu0 %v4569
    %5789 = vmatpush1.bf16.msra.mxu0 %v4568
    %5790 = vmatprep.subr.bf16.mxu0 %v4585
    %5791 = vmatpush1.bf16.msra.mxu0 %v4584
    %5792 = vmatprep.subr.bf16.mxu0 %v4601
    %5793 = vmatpush1.bf16.msra.mxu0 %v4600
    %5794 = vmatprep.subr.bf16.mxu0 %v4617
    %5795 = vmatpush1.bf16.msra.mxu0 %v4616
    %5796 = vmatprep.subr.bf16.mxu0 %v4633
    %5797 = vmatpush1.bf16.msra.mxu0 %v4632
    %5798 = vmatprep.subr.bf16.mxu0 %v4649
    %5799 = vmatpush1.bf16.msra.mxu0 %v4648
    %5800 = vmatprep.mubr.bf16.mxu0 %v2265
    %5801 = vmatmul.mubr.bf16.gmra.mrb[0].mxu0 %v2264
    %v5802 = vpop.f32.mrb[0].mxu0
    %v5803 = vadd.f32 %v2819, %v5802
    %v5804 = vpop.f32.mrb[0].mxu0
    %v5805 = vadd.f32 %v2823, %v5804
    %v5806 = vpop.f32.mrb[0].mxu0
    %v5807 = vadd.f32 %v2819, %v5806
    %v5808 = vpop.f32.mrb[0].mxu0
    %v5809 = vadd.f32 %v2823, %v5808
    %5810 = vdwg.mxu0
    %5811 = vmatprep.subr.bf16.mxu0 %v4665
    %5812 = vmatpush1.bf16.msra.mxu0 %v4664
    %5813 = vmatprep.subr.bf16.mxu0 %v4681
    %5814 = vmatpush1.bf16.msra.mxu0 %v4680
    %5815 = vmatprep.subr.bf16.mxu0 %v4697
    %5816 = vmatpush1.bf16.msra.mxu0 %v4696
    %5817 = vmatprep.subr.bf16.mxu0 %v4713
    %5818 = vmatpush1.bf16.msra.mxu0 %v4712
    %5819 = vmatprep.subr.bf16.mxu0 %v4729
    %5820 = vmatpush1.bf16.msra.mxu0 %v4728
    %5821 = vmatprep.subr.bf16.mxu0 %v4745
    %5822 = vmatpush1.bf16.msra.mxu0 %v4744
    %5823 = vmatprep.subr.bf16.mxu0 %v4761
    %5824 = vmatpush1.bf16.msra.mxu0 %v4760
    %5825 = vmatprep.subr.bf16.mxu0 %v4777
    %5826 = vmatpush1.bf16.msra.mxu0 %v4776
    %5827 = vmatprep.subr.bf16.mxu0 %v4793
    %5828 = vmatpush1.bf16.msra.mxu0 %v4792
    %5829 = vmatprep.subr.bf16.mxu0 %v4809
    %5830 = vmatpush1.bf16.msra.mxu0 %v4808
    %5831 = vmatprep.subr.bf16.mxu0 %v4825
    %5832 = vmatpush1.bf16.msra.mxu0 %v4824
    %5833 = vmatprep.subr.bf16.mxu0 %v4841
    %5834 = vmatpush1.bf16.msra.mxu0 %v4840
    %5835 = vmatprep.subr.bf16.mxu0 %v4857
    %5836 = vmatpush1.bf16.msra.mxu0 %v4856
    %5837 = vmatprep.subr.bf16.mxu0 %v4873
    %5838 = vmatpush1.bf16.msra.mxu0 %v4872
    %5839 = vmatprep.subr.bf16.mxu0 %v4889
    %5840 = vmatpush1.bf16.msra.mxu0 %v4888
    %5841 = vmatprep.subr.bf16.mxu0 %v4905
    %5842 = vmatpush1.bf16.msra.mxu0 %v4904
    %5843 = vmatprep.mubr.bf16.mxu0 %v2267
    %5844 = vmatmul.mubr.bf16.gmra.mrb[0].mxu0 %v2266
    %v5845 = vpop.f32.mrb[0].mxu0
    %v5846 = vadd.f32 %v5803, %v5845
    %v5847 = vpop.f32.mrb[0].mxu0
    %v5848 = vadd.f32 %v5805, %v5847
    %v5849 = vpop.f32.mrb[0].mxu0
    %v5850 = vadd.f32 %v5807, %v5849
    %v5851 = vpop.f32.mrb[0].mxu0
    %v5852 = vadd.f32 %v5809, %v5851
    %5853 = vdwg.mxu0
    %5854 = vmatprep.subr.bf16.mxu0 %v4411
    %5855 = vmatpush1.bf16.msra.mxu0 %v4410
    %5856 = vmatprep.subr.bf16.mxu0 %v4427
    %5857 = vmatpush1.bf16.msra.mxu0 %v4426
    %5858 = vmatprep.subr.bf16.mxu0 %v4443
    %5859 = vmatpush1.bf16.msra.mxu0 %v4442
    %5860 = vmatprep.subr.bf16.mxu0 %v4459
    %5861 = vmatpush1.bf16.msra.mxu0 %v4458
    %5862 = vmatprep.subr.bf16.mxu0 %v4475
    %5863 = vmatpush1.bf16.msra.mxu0 %v4474
    %5864 = vmatprep.subr.bf16.mxu0 %v4491
    %5865 = vmatpush1.bf16.msra.mxu0 %v4490
    %5866 = vmatprep.subr.bf16.mxu0 %v4507
    %5867 = vmatpush1.bf16.msra.mxu0 %v4506
    %5868 = vmatprep.subr.bf16.mxu0 %v4523
    %5869 = vmatpush1.bf16.msra.mxu0 %v4522
    %5870 = vmatprep.subr.bf16.mxu0 %v4539
    %5871 = vmatpush1.bf16.msra.mxu0 %v4538
    %5872 = vmatprep.subr.bf16.mxu0 %v4555
    %5873 = vmatpush1.bf16.msra.mxu0 %v4554
    %5874 = vmatprep.subr.bf16.mxu0 %v4571
    %5875 = vmatpush1.bf16.msra.mxu0 %v4570
    %5876 = vmatprep.subr.bf16.mxu0 %v4587
    %5877 = vmatpush1.bf16.msra.mxu0 %v4586
    %5878 = vmatprep.subr.bf16.mxu0 %v4603
    %5879 = vmatpush1.bf16.msra.mxu0 %v4602
    %5880 = vmatprep.subr.bf16.mxu0 %v4619
    %5881 = vmatpush1.bf16.msra.mxu0 %v4618
    %5882 = vmatprep.subr.bf16.mxu0 %v4635
    %5883 = vmatpush1.bf16.msra.mxu0 %v4634
    %5884 = vmatprep.subr.bf16.mxu0 %v4651
    %5885 = vmatpush1.bf16.msra.mxu0 %v4650
    %5886 = vmatprep.mubr.bf16.mxu0 %v2265
    %5887 = vmatmul.mubr.bf16.gmra.mrb[0].mxu0 %v2264
    %v5888 = vpop.f32.mrb[0].mxu0
    %v5889 = vadd.f32 %v2827, %v5888
    %v5890 = vpop.f32.mrb[0].mxu0
    %v5891 = vadd.f32 %v2831, %v5890
    %v5892 = vpop.f32.mrb[0].mxu0
    %v5893 = vadd.f32 %v2827, %v5892
    %v5894 = vpop.f32.mrb[0].mxu0
    %v5895 = vadd.f32 %v2831, %v5894
    %5896 = vdwg.mxu0
    %5897 = vmatprep.subr.bf16.mxu0 %v4667
    %5898 = vmatpush1.bf16.msra.mxu0 %v4666
    %5899 = vmatprep.subr.bf16.mxu0 %v4683
    %5900 = vmatpush1.bf16.msra.mxu0 %v4682
    %5901 = vmatprep.subr.bf16.mxu0 %v4699
    %5902 = vmatpush1.bf16.msra.mxu0 %v4698
    %5903 = vmatprep.subr.bf16.mxu0 %v4715
    %5904 = vmatpush1.bf16.msra.mxu0 %v4714
    %5905 = vmatprep.subr.bf16.mxu0 %v4731
    %5906 = vmatpush1.bf16.msra.mxu0 %v4730
    %5907 = vmatprep.subr.bf16.mxu0 %v4747
    %5908 = vmatpush1.bf16.msra.mxu0 %v4746
    %5909 = vmatprep.subr.bf16.mxu0 %v4763
    %5910 = vmatpush1.bf16.msra.mxu0 %v4762
    %5911 = vmatprep.subr.bf16.mxu0 %v4779
    %5912 = vmatpush1.bf16.msra.mxu0 %v4778
    %5913 = vmatprep.subr.bf16.mxu0 %v4795
    %5914 = vmatpush1.bf16.msra.mxu0 %v4794
    %5915 = vmatprep.subr.bf16.mxu0 %v4811
    %5916 = vmatpush1.bf16.msra.mxu0 %v4810
    %5917 = vmatprep.subr.bf16.mxu0 %v4827
    %5918 = vmatpush1.bf16.msra.mxu0 %v4826
    %5919 = vmatprep.subr.bf16.mxu0 %v4843
    %5920 = vmatpush1.bf16.msra.mxu0 %v4842
    %5921 = vmatprep.subr.bf16.mxu0 %v4859
    %5922 = vmatpush1.bf16.msra.mxu0 %v4858
    %5923 = vmatprep.subr.bf16.mxu0 %v4875
    %5924 = vmatpush1.bf16.msra.mxu0 %v4874
    %5925 = vmatprep.subr.bf16.mxu0 %v4891
    %5926 = vmatpush1.bf16.msra.mxu0 %v4890
    %5927 = vmatprep.subr.bf16.mxu0 %v4907
    %5928 = vmatpush1.bf16.msra.mxu0 %v4906
    %5929 = vmatprep.mubr.bf16.mxu0 %v2267
    %5930 = vmatmul.mubr.bf16.gmra.mrb[0].mxu0 %v2266
    %v5931 = vpop.f32.mrb[0].mxu0
    %v5932 = vadd.f32 %v5889, %v5931
    %v5933 = vpop.f32.mrb[0].mxu0
    %v5934 = vadd.f32 %v5891, %v5933
    %v5935 = vpop.f32.mrb[0].mxu0
    %v5936 = vadd.f32 %v5893, %v5935
    %v5937 = vpop.f32.mrb[0].mxu0
    %v5938 = vadd.f32 %v5895, %v5937
    %5939 = vdwg.mxu0
    %5940 = vmatprep.subr.bf16.mxu0 %v4413
    %5941 = vmatpush1.bf16.msra.mxu0 %v4412
    %5942 = vmatprep.subr.bf16.mxu0 %v4429
    %5943 = vmatpush1.bf16.msra.mxu0 %v4428
    %5944 = vmatprep.subr.bf16.mxu0 %v4445
    %5945 = vmatpush1.bf16.msra.mxu0 %v4444
    %5946 = vmatprep.subr.bf16.mxu0 %v4461
    %5947 = vmatpush1.bf16.msra.mxu0 %v4460
    %5948 = vmatprep.subr.bf16.mxu0 %v4477
    %5949 = vmatpush1.bf16.msra.mxu0 %v4476
    %5950 = vmatprep.subr.bf16.mxu0 %v4493
    %5951 = vmatpush1.bf16.msra.mxu0 %v4492
    %5952 = vmatprep.subr.bf16.mxu0 %v4509
    %5953 = vmatpush1.bf16.msra.mxu0 %v4508
    %5954 = vmatprep.subr.bf16.mxu0 %v4525
    %5955 = vmatpush1.bf16.msra.mxu0 %v4524
    %5956 = vmatprep.subr.bf16.mxu0 %v4541
    %5957 = vmatpush1.bf16.msra.mxu0 %v4540
    %5958 = vmatprep.subr.bf16.mxu0 %v4557
    %5959 = vmatpush1.bf16.msra.mxu0 %v4556
    %5960 = vmatprep.subr.bf16.mxu0 %v4573
    %5961 = vmatpush1.bf16.msra.mxu0 %v4572
    %5962 = vmatprep.subr.bf16.mxu0 %v4589
    %5963 = vmatpush1.bf16.msra.mxu0 %v4588
    %5964 = vmatprep.subr.bf16.mxu0 %v4605
    %5965 = vmatpush1.bf16.msra.mxu0 %v4604
    %5966 = vmatprep.subr.bf16.mxu0 %v4621
    %5967 = vmatpush1.bf16.msra.mxu0 %v4620
    %5968 = vmatprep.subr.bf16.mxu0 %v4637
    %5969 = vmatpush1.bf16.msra.mxu0 %v4636
    %5970 = vmatprep.subr.bf16.mxu0 %v4653
    %5971 = vmatpush1.bf16.msra.mxu0 %v4652
    %5972 = vmatprep.mubr.bf16.mxu0 %v2265
    %5973 = vmatmul.mubr.bf16.gmra.mrb[0].mxu0 %v2264
    %v5974 = vpop.f32.mrb[0].mxu0
    %v5975 = vadd.f32 %v2835, %v5974
    %v5976 = vpop.f32.mrb[0].mxu0
    %v5977 = vadd.f32 %v2839, %v5976
    %v5978 = vpop.f32.mrb[0].mxu0
    %v5979 = vadd.f32 %v2835, %v5978
    %v5980 = vpop.f32.mrb[0].mxu0
    %v5981 = vadd.f32 %v2839, %v5980
    %5982 = vdwg.mxu0
    %5983 = vmatprep.subr.bf16.mxu0 %v4669
    %5984 = vmatpush1.bf16.msra.mxu0 %v4668
    %5985 = vmatprep.subr.bf16.mxu0 %v4685
    %5986 = vmatpush1.bf16.msra.mxu0 %v4684
    %5987 = vmatprep.subr.bf16.mxu0 %v4701
    %5988 = vmatpush1.bf16.msra.mxu0 %v4700
    %5989 = vmatprep.subr.bf16.mxu0 %v4717
    %5990 = vmatpush1.bf16.msra.mxu0 %v4716
    %5991 = vmatprep.subr.bf16.mxu0 %v4733
    %5992 = vmatpush1.bf16.msra.mxu0 %v4732
    %5993 = vmatprep.subr.bf16.mxu0 %v4749
    %5994 = vmatpush1.bf16.msra.mxu0 %v4748
    %5995 = vmatprep.subr.bf16.mxu0 %v4765
    %5996 = vmatpush1.bf16.msra.mxu0 %v4764
    %5997 = vmatprep.subr.bf16.mxu0 %v4781
    %5998 = vmatpush1.bf16.msra.mxu0 %v4780
    %5999 = vmatprep.subr.bf16.mxu0 %v4797
    %6000 = vmatpush1.bf16.msra.mxu0 %v4796
    %6001 = vmatprep.subr.bf16.mxu0 %v4813
    %6002 = vmatpush1.bf16.msra.mxu0 %v4812
    %6003 = vmatprep.subr.bf16.mxu0 %v4829
    %6004 = vmatpush1.bf16.msra.mxu0 %v4828
    %6005 = vmatprep.subr.bf16.mxu0 %v4845
    %6006 = vmatpush1.bf16.msra.mxu0 %v4844
    %6007 = vmatprep.subr.bf16.mxu0 %v4861
    %6008 = vmatpush1.bf16.msra.mxu0 %v4860
    %6009 = vmatprep.subr.bf16.mxu0 %v4877
    %6010 = vmatpush1.bf16.msra.mxu0 %v4876
    %6011 = vmatprep.subr.bf16.mxu0 %v4893
    %6012 = vmatpush1.bf16.msra.mxu0 %v4892
    %6013 = vmatprep.subr.bf16.mxu0 %v4909
    %6014 = vmatpush1.bf16.msra.mxu0 %v4908
    %6015 = vmatprep.mubr.bf16.mxu0 %v2267
    %6016 = vmatmul.mubr.bf16.gmra.mrb[0].mxu0 %v2266
    %v6017 = vpop.f32.mrb[0].mxu0
    %v6018 = vadd.f32 %v5975, %v6017
    %v6019 = vpop.f32.mrb[0].mxu0
    %v6020 = vadd.f32 %v5977, %v6019
    %v6021 = vpop.f32.mrb[0].mxu0
    %v6022 = vadd.f32 %v5979, %v6021
    %v6023 = vpop.f32.mrb[0].mxu0
    %v6024 = vadd.f32 %v5981, %v6023
    %6025 = vdwg.mxu0
    %6026 = vmatprep.subr.bf16.mxu0 %v4415
    %6027 = vmatpush1.bf16.msra.mxu0 %v4414
    %6028 = vmatprep.subr.bf16.mxu0 %v4431
    %6029 = vmatpush1.bf16.msra.mxu0 %v4430
    %6030 = vmatprep.subr.bf16.mxu0 %v4447
    %6031 = vmatpush1.bf16.msra.mxu0 %v4446
    %6032 = vmatprep.subr.bf16.mxu0 %v4463
    %6033 = vmatpush1.bf16.msra.mxu0 %v4462
    %6034 = vmatprep.subr.bf16.mxu0 %v4479
    %6035 = vmatpush1.bf16.msra.mxu0 %v4478
    %6036 = vmatprep.subr.bf16.mxu0 %v4495
    %6037 = vmatpush1.bf16.msra.mxu0 %v4494
    %6038 = vmatprep.subr.bf16.mxu0 %v4511
    %6039 = vmatpush1.bf16.msra.mxu0 %v4510
    %6040 = vmatprep.subr.bf16.mxu0 %v4527
    %6041 = vmatpush1.bf16.msra.mxu0 %v4526
    %6042 = vmatprep.subr.bf16.mxu0 %v4543
    %6043 = vmatpush1.bf16.msra.mxu0 %v4542
    %6044 = vmatprep.subr.bf16.mxu0 %v4559
    %6045 = vmatpush1.bf16.msra.mxu0 %v4558
    %6046 = vmatprep.subr.bf16.mxu0 %v4575
    %6047 = vmatpush1.bf16.msra.mxu0 %v4574
    %6048 = vmatprep.subr.bf16.mxu0 %v4591
    %6049 = vmatpush1.bf16.msra.mxu0 %v4590
    %6050 = vmatprep.subr.bf16.mxu0 %v4607
    %6051 = vmatpush1.bf16.msra.mxu0 %v4606
    %6052 = vmatprep.subr.bf16.mxu0 %v4623
    %6053 = vmatpush1.bf16.msra.mxu0 %v4622
    %6054 = vmatprep.subr.bf16.mxu0 %v4639
    %6055 = vmatpush1.bf16.msra.mxu0 %v4638
    %6056 = vmatprep.subr.bf16.mxu0 %v4655
    %6057 = vmatpush1.bf16.msra.mxu0 %v4654
    %6058 = vmatprep.mubr.bf16.mxu0 %v2265
    %6059 = vmatmul.mubr.bf16.gmra.mrb[0].mxu0 %v2264
    %v6060 = vpop.f32.mrb[0].mxu0
    %v6061 = vadd.f32 %v2843, %v6060
    %v6062 = vpop.f32.mrb[0].mxu0
    %v6063 = vadd.f32 %v2847, %v6062
    %v6064 = vpop.f32.mrb[0].mxu0
    %v6065 = vadd.f32 %v2843, %v6064
    %v6066 = vpop.f32.mrb[0].mxu0
    %v6067 = vadd.f32 %v2847, %v6066
    %6068 = vdwg.mxu0
    %6069 = vmatprep.subr.bf16.mxu0 %v4671
    %6070 = vmatpush1.bf16.msra.mxu0 %v4670
    %6071 = vmatprep.subr.bf16.mxu0 %v4687
    %6072 = vmatpush1.bf16.msra.mxu0 %v4686
    %6073 = vmatprep.subr.bf16.mxu0 %v4703
    %6074 = vmatpush1.bf16.msra.mxu0 %v4702
    %6075 = vmatprep.subr.bf16.mxu0 %v4719
    %6076 = vmatpush1.bf16.msra.mxu0 %v4718
    %6077 = vmatprep.subr.bf16.mxu0 %v4735
    %6078 = vmatpush1.bf16.msra.mxu0 %v4734
    %6079 = vmatprep.subr.bf16.mxu0 %v4751
    %6080 = vmatpush1.bf16.msra.mxu0 %v4750
    %6081 = vmatprep.subr.bf16.mxu0 %v4767
    %6082 = vmatpush1.bf16.msra.mxu0 %v4766
    %6083 = vmatprep.subr.bf16.mxu0 %v4783
    %6084 = vmatpush1.bf16.msra.mxu0 %v4782
    %6085 = vmatprep.subr.bf16.mxu0 %v4799
    %6086 = vmatpush1.bf16.msra.mxu0 %v4798
    %6087 = vmatprep.subr.bf16.mxu0 %v4815
    %6088 = vmatpush1.bf16.msra.mxu0 %v4814
    %6089 = vmatprep.subr.bf16.mxu0 %v4831
    %6090 = vmatpush1.bf16.msra.mxu0 %v4830
    %6091 = vmatprep.subr.bf16.mxu0 %v4847
    %6092 = vmatpush1.bf16.msra.mxu0 %v4846
    %6093 = vmatprep.subr.bf16.mxu0 %v4863
    %6094 = vmatpush1.bf16.msra.mxu0 %v4862
    %6095 = vmatprep.subr.bf16.mxu0 %v4879
    %6096 = vmatpush1.bf16.msra.mxu0 %v4878
    %6097 = vmatprep.subr.bf16.mxu0 %v4895
    %6098 = vmatpush1.bf16.msra.mxu0 %v4894
    %6099 = vmatprep.subr.bf16.mxu0 %v4911
    %6100 = vmatpush1.bf16.msra.mxu0 %v4910
    %6101 = vmatprep.mubr.bf16.mxu0 %v2267
    %6102 = vmatmul.mubr.bf16.gmra.mrb[0].mxu0 %v2266
    %v6103 = vpop.f32.mrb[0].mxu0
    %v6104 = vadd.f32 %v6061, %v6103
    %v6105 = vpop.f32.mrb[0].mxu0
    %v6106 = vadd.f32 %v6063, %v6105
    %v6107 = vpop.f32.mrb[0].mxu0
    %v6108 = vadd.f32 %v6065, %v6107
    %v6109 = vpop.f32.mrb[0].mxu0
    %v6110 = vadd.f32 %v6067, %v6109
    %6111 = vdwg.mxu0
    %vm6112 = vcmp.ge.f32.partialorder %v5502, 0.0
    %vm6113 = vcmp.ge.f32.partialorder %v5504, 0.0
    %vm6114 = vcmp.ge.f32.partialorder %v5588, 0.0
    %vm6115 = vcmp.ge.f32.partialorder %v5590, 0.0
    %vm6116 = vcmp.ge.f32.partialorder %v5674, 0.0
    %vm6117 = vcmp.ge.f32.partialorder %v5676, 0.0
    %vm6118 = vcmp.ge.f32.partialorder %v5760, 0.0
    %vm6119 = vcmp.ge.f32.partialorder %v5762, 0.0
    %vm6120 = vcmp.ge.f32.partialorder %v5846, 0.0
    %vm6121 = vcmp.ge.f32.partialorder %v5848, 0.0
    %vm6122 = vcmp.ge.f32.partialorder %v5932, 0.0
    %vm6123 = vcmp.ge.f32.partialorder %v5934, 0.0
    %vm6124 = vcmp.ge.f32.partialorder %v6018, 0.0
    %vm6125 = vcmp.ge.f32.partialorder %v6020, 0.0
    %vm6126 = vcmp.ge.f32.partialorder %v6104, 0.0
    %vm6127 = vcmp.ge.f32.partialorder %v6106, 0.0
    %vm6128 = vcmp.ge.f32.partialorder %v5506, 0.0
    %vm6129 = vcmp.ge.f32.partialorder %v5508, 0.0
    %vm6130 = vcmp.ge.f32.partialorder %v5592, 0.0
    %vm6131 = vcmp.ge.f32.partialorder %v5594, 0.0
    %vm6132 = vcmp.ge.f32.partialorder %v5678, 0.0
    %vm6133 = vcmp.ge.f32.partialorder %v5680, 0.0
    %vm6134 = vcmp.ge.f32.partialorder %v5764, 0.0
    %vm6135 = vcmp.ge.f32.partialorder %v5766, 0.0
    %vm6136 = vcmp.ge.f32.partialorder %v5850, 0.0
    %vm6137 = vcmp.ge.f32.partialorder %v5852, 0.0
    %vm6138 = vcmp.ge.f32.partialorder %v5936, 0.0
    %vm6139 = vcmp.ge.f32.partialorder %v5938, 0.0
    %vm6140 = vcmp.ge.f32.partialorder %v6022, 0.0
    %vm6141 = vcmp.ge.f32.partialorder %v6024, 0.0
    %vm6142 = vcmp.ge.f32.partialorder %v6108, 0.0
    %vm6143 = vcmp.ge.f32.partialorder %v6110, 0.0
    %v6144 = vmul.f32 %v5502, 0.01
    %v6145 = vmul.f32 %v5504, 0.01
    %v6146 = vmul.f32 %v5588, 0.01
    %v6147 = vmul.f32 %v5590, 0.01
    %v6148 = vmul.f32 %v5674, 0.01
    %v6149 = vmul.f32 %v5676, 0.01
    %v6150 = vmul.f32 %v5760, 0.01
    %v6151 = vmul.f32 %v5762, 0.01
    %v6152 = vmul.f32 %v5846, 0.01
    %v6153 = vmul.f32 %v5848, 0.01
    %v6154 = vmul.f32 %v5932, 0.01
    %v6155 = vmul.f32 %v5934, 0.01
    %v6156 = vmul.f32 %v6018, 0.01
    %v6157 = vmul.f32 %v6020, 0.01
    %v6158 = vmul.f32 %v6104, 0.01
    %v6159 = vmul.f32 %v6106, 0.01
    %v6160 = vmul.f32 %v5506, 0.01
    %v6161 = vmul.f32 %v5508, 0.01
    %v6162 = vmul.f32 %v5592, 0.01
    %v6163 = vmul.f32 %v5594, 0.01
    %v6164 = vmul.f32 %v5678, 0.01
    %v6165 = vmul.f32 %v5680, 0.01
    %v6166 = vmul.f32 %v5764, 0.01
    %v6167 = vmul.f32 %v5766, 0.01
    %v6168 = vmul.f32 %v5850, 0.01
    %v6169 = vmul.f32 %v5852, 0.01
    %v6170 = vmul.f32 %v5936, 0.01
    %v6171 = vmul.f32 %v5938, 0.01
    %v6172 = vmul.f32 %v6022, 0.01
    %v6173 = vmul.f32 %v6024, 0.01
    %v6174 = vmul.f32 %v6108, 0.01
    %v6175 = vmul.f32 %v6110, 0.01
    %v6176 = vsel %vm6112, %v5502, %v6144
    %v6177 = vsel %vm6113, %v5504, %v6145
    %v6178 = vsel %vm6114, %v5588, %v6146
    %v6179 = vsel %vm6115, %v5590, %v6147
    %v6180 = vsel %vm6116, %v5674, %v6148
    %v6181 = vsel %vm6117, %v5676, %v6149
    %v6182 = vsel %vm6118, %v5760, %v6150
    %v6183 = vsel %vm6119, %v5762, %v6151
    %v6184 = vsel %vm6120, %v5846, %v6152
    %v6185 = vsel %vm6121, %v5848, %v6153
    %v6186 = vsel %vm6122, %v5932, %v6154
    %v6187 = vsel %vm6123, %v5934, %v6155
    %v6188 = vsel %vm6124, %v6018, %v6156
    %v6189 = vsel %vm6125, %v6020, %v6157
    %v6190 = vsel %vm6126, %v6104, %v6158
    %v6191 = vsel %vm6127, %v6106, %v6159
    %v6192 = vsel %vm6128, %v5506, %v6160
    %v6193 = vsel %vm6129, %v5508, %v6161
    %v6194 = vsel %vm6130, %v5592, %v6162
    %v6195 = vsel %vm6131, %v5594, %v6163
    %v6196 = vsel %vm6132, %v5678, %v6164
    %v6197 = vsel %vm6133, %v5680, %v6165
    %v6198 = vsel %vm6134, %v5764, %v6166
    %v6199 = vsel %vm6135, %v5766, %v6167
    %v6200 = vsel %vm6136, %v5850, %v6168
    %v6201 = vsel %vm6137, %v5852, %v6169
    %v6202 = vsel %vm6138, %v5936, %v6170
    %v6203 = vsel %vm6139, %v5938, %v6171
    %v6204 = vsel %vm6140, %v6022, %v6172
    %v6205 = vsel %vm6141, %v6024, %v6173
    %v6206 = vsel %vm6142, %v6108, %v6174
    %v6207 = vsel %vm6143, %v6110, %v6175
    %v6208 = vld [vmem:[#allocation22] sm:$0xff]
    %v6209 = vld [vmem:[#allocation22 + $0x8] sm:$0xff]
    %v6210 = vunpack.c.l.bf16 %v6208
    %v6211 = vunpack.c.h.bf16 %v6208
    %v6212 = vunpack.c.l.bf16 %v6209
    %v6213 = vunpack.c.h.bf16 %v6209
    %v6218 = vlaneseq
    %v6219 = vshrl.u32 %v6218, 7
    %v6220 = vsub.s32 0, %v6219
    %v6221 = vrot.slane %v6210, %v6220
    %v6222 = vlaneseq
    %v6223 = vshrl.u32 %v6222, 7
    %v6224 = vsub.s32 2, %v6223
    %v6225 = vrot.slane %v6210, %v6224
    %v6226 = vlaneseq
    %v6227 = vshrl.u32 %v6226, 7
    %v6228 = vsub.s32 4, %v6227
    %v6229 = vrot.slane %v6210, %v6228
    %v6230 = vlaneseq
    %v6231 = vshrl.u32 %v6230, 7
    %v6232 = vsub.s32 6, %v6231
    %v6233 = vrot.slane %v6210, %v6232
    %v6234 = vlaneseq
    %v6235 = vshrl.u32 %v6234, 7
    %v6236 = vsub.s32 0, %v6235
    %v6237 = vrot.slane %v6211, %v6236
    %v6238 = vlaneseq
    %v6239 = vshrl.u32 %v6238, 7
    %v6240 = vsub.s32 2, %v6239
    %v6241 = vrot.slane %v6211, %v6240
    %v6242 = vlaneseq
    %v6243 = vshrl.u32 %v6242, 7
    %v6244 = vsub.s32 4, %v6243
    %v6245 = vrot.slane %v6211, %v6244
    %v6246 = vlaneseq
    %v6247 = vshrl.u32 %v6246, 7
    %v6248 = vsub.s32 6, %v6247
    %v6249 = vrot.slane %v6211, %v6248
    %v6250 = vlaneseq
    %v6251 = vshrl.u32 %v6250, 7
    %v6252 = vsub.s32 0, %v6251
    %v6253 = vrot.slane %v6212, %v6252
    %v6254 = vlaneseq
    %v6255 = vshrl.u32 %v6254, 7
    %v6256 = vsub.s32 2, %v6255
    %v6257 = vrot.slane %v6212, %v6256
    %v6258 = vlaneseq
    %v6259 = vshrl.u32 %v6258, 7
    %v6260 = vsub.s32 4, %v6259
    %v6261 = vrot.slane %v6212, %v6260
    %v6262 = vlaneseq
    %v6263 = vshrl.u32 %v6262, 7
    %v6264 = vsub.s32 6, %v6263
    %v6265 = vrot.slane %v6212, %v6264
    %v6266 = vlaneseq
    %v6267 = vshrl.u32 %v6266, 7
    %v6268 = vsub.s32 0, %v6267
    %v6269 = vrot.slane %v6213, %v6268
    %v6270 = vlaneseq
    %v6271 = vshrl.u32 %v6270, 7
    %v6272 = vsub.s32 2, %v6271
    %v6273 = vrot.slane %v6213, %v6272
    %v6274 = vlaneseq
    %v6275 = vshrl.u32 %v6274, 7
    %v6276 = vsub.s32 4, %v6275
    %v6277 = vrot.slane %v6213, %v6276
    %v6278 = vlaneseq
    %v6279 = vshrl.u32 %v6278, 7
    %v6280 = vsub.s32 6, %v6279
    %v6281 = vrot.slane %v6213, %v6280
    %v6298 = vlaneseq
    %v6299 = vshrl.u32 %v6298, 7
    %v6300 = vsub.s32 0, %v6299
    %v6301 = vrot.slane %v6221, %v6300
    %v6302 = vlaneseq
    %v6303 = vshrl.u32 %v6302, 7
    %v6304 = vsub.s32 0, %v6303
    %v6305 = vrot.slane %v6225, %v6304
    %v6306 = vlaneseq
    %v6307 = vshrl.u32 %v6306, 7
    %v6308 = vsub.s32 0, %v6307
    %v6309 = vrot.slane %v6229, %v6308
    %v6310 = vlaneseq
    %v6311 = vshrl.u32 %v6310, 7
    %v6312 = vsub.s32 0, %v6311
    %v6313 = vrot.slane %v6233, %v6312
    %v6314 = vlaneseq
    %v6315 = vshrl.u32 %v6314, 7
    %v6316 = vsub.s32 0, %v6315
    %v6317 = vrot.slane %v6237, %v6316
    %v6318 = vlaneseq
    %v6319 = vshrl.u32 %v6318, 7
    %v6320 = vsub.s32 0, %v6319
    %v6321 = vrot.slane %v6241, %v6320
    %v6322 = vlaneseq
    %v6323 = vshrl.u32 %v6322, 7
    %v6324 = vsub.s32 0, %v6323
    %v6325 = vrot.slane %v6245, %v6324
    %v6326 = vlaneseq
    %v6327 = vshrl.u32 %v6326, 7
    %v6328 = vsub.s32 0, %v6327
    %v6329 = vrot.slane %v6249, %v6328
    %v6330 = vlaneseq
    %v6331 = vshrl.u32 %v6330, 7
    %v6332 = vsub.s32 0, %v6331
    %v6333 = vrot.slane %v6253, %v6332
    %v6334 = vlaneseq
    %v6335 = vshrl.u32 %v6334, 7
    %v6336 = vsub.s32 0, %v6335
    %v6337 = vrot.slane %v6257, %v6336
    %v6338 = vlaneseq
    %v6339 = vshrl.u32 %v6338, 7
    %v6340 = vsub.s32 0, %v6339
    %v6341 = vrot.slane %v6261, %v6340
    %v6342 = vlaneseq
    %v6343 = vshrl.u32 %v6342, 7
    %v6344 = vsub.s32 0, %v6343
    %v6345 = vrot.slane %v6265, %v6344
    %v6346 = vlaneseq
    %v6347 = vshrl.u32 %v6346, 7
    %v6348 = vsub.s32 0, %v6347
    %v6349 = vrot.slane %v6269, %v6348
    %v6350 = vlaneseq
    %v6351 = vshrl.u32 %v6350, 7
    %v6352 = vsub.s32 0, %v6351
    %v6353 = vrot.slane %v6273, %v6352
    %v6354 = vlaneseq
    %v6355 = vshrl.u32 %v6354, 7
    %v6356 = vsub.s32 0, %v6355
    %v6357 = vrot.slane %v6277, %v6356
    %v6358 = vlaneseq
    %v6359 = vshrl.u32 %v6358, 7
    %v6360 = vsub.s32 0, %v6359
    %v6361 = vrot.slane %v6281, %v6360
    %v6362 = vmul.f32 %v6176, %v6301
    %v6363 = vmul.f32 %v6177, %v6305
    %v6364 = vmul.f32 %v6178, %v6309
    %v6365 = vmul.f32 %v6179, %v6313
    %v6366 = vmul.f32 %v6180, %v6317
    %v6367 = vmul.f32 %v6181, %v6321
    %v6368 = vmul.f32 %v6182, %v6325
    %v6369 = vmul.f32 %v6183, %v6329
    %v6370 = vmul.f32 %v6184, %v6333
    %v6371 = vmul.f32 %v6185, %v6337
    %v6372 = vmul.f32 %v6186, %v6341
    %v6373 = vmul.f32 %v6187, %v6345
    %v6374 = vmul.f32 %v6188, %v6349
    %v6375 = vmul.f32 %v6189, %v6353
    %v6376 = vmul.f32 %v6190, %v6357
    %v6377 = vmul.f32 %v6191, %v6361
    %v6378 = vmul.f32 %v6192, %v6301
    %v6379 = vmul.f32 %v6193, %v6305
    %v6380 = vmul.f32 %v6194, %v6309
    %v6381 = vmul.f32 %v6195, %v6313
    %v6382 = vmul.f32 %v6196, %v6317
    %v6383 = vmul.f32 %v6197, %v6321
    %v6384 = vmul.f32 %v6198, %v6325
    %v6385 = vmul.f32 %v6199, %v6329
    %v6386 = vmul.f32 %v6200, %v6333
    %v6387 = vmul.f32 %v6201, %v6337
    %v6388 = vmul.f32 %v6202, %v6341
    %v6389 = vmul.f32 %v6203, %v6345
    %v6390 = vmul.f32 %v6204, %v6349
    %v6391 = vmul.f32 %v6205, %v6353
    %v6392 = vmul.f32 %v6206, %v6357
    %v6393 = vmul.f32 %v6207, %v6361
    %v6394 = vadd.f32 %v6362, %v6364
    %v6395 = vadd.f32 %v6363, %v6365
    %v6396 = vadd.f32 %v6378, %v6380
    %v6397 = vadd.f32 %v6379, %v6381
    %v6398 = vadd.f32 %v6366, %v6368
    %v6399 = vadd.f32 %v6367, %v6369
    %v6400 = vadd.f32 %v6382, %v6384
    %v6401 = vadd.f32 %v6383, %v6385
    %v6402 = vadd.f32 %v6370, %v6372
    %v6403 = vadd.f32 %v6371, %v6373
    %v6404 = vadd.f32 %v6386, %v6388
    %v6405 = vadd.f32 %v6387, %v6389
    %v6406 = vadd.f32 %v6374, %v6376
    %v6407 = vadd.f32 %v6375, %v6377
    %v6408 = vadd.f32 %v6390, %v6392
    %v6409 = vadd.f32 %v6391, %v6393
    %v6410 = vadd.f32 %v6394, %v6398
    %v6411 = vadd.f32 %v6395, %v6399
    %v6412 = vadd.f32 %v6396, %v6400
    %v6413 = vadd.f32 %v6397, %v6401
    %v6414 = vadd.f32 %v6402, %v6406
    %v6415 = vadd.f32 %v6403, %v6407
    %v6416 = vadd.f32 %v6404, %v6408
    %v6417 = vadd.f32 %v6405, %v6409
    %v6418 = vadd.f32 %v6410, %v6414
    %v6419 = vadd.f32 %v6411, %v6415
    %v6420 = vadd.f32 %v6412, %v6416
    %v6421 = vadd.f32 %v6413, %v6417
    %v6422 = vld [vmem:[#allocation24] sm:$0x3]
    %v6424 = vlaneseq
    %v6425 = vshrl.u32 %v6424, 7
    %v6426 = vsub.s32 0, %v6425
    %v6427 = vrot.slane %v6422, %v6426
    %v6428 = vlaneseq
    %v6429 = vshrl.u32 %v6428, 7
    %v6430 = vsub.s32 1, %v6429
    %v6431 = vrot.slane %v6422, %v6430
    %v6434 = vadd.f32 %v6418, %v6427
    %v6435 = vadd.f32 %v6419, %v6431
    %v6436 = vadd.f32 %v6420, %v6427
    %v6437 = vadd.f32 %v6421, %v6431
    %6438 = vst [vmem:[%s17] sm:$0xff] %v6434
    %6439 = vst [vmem:[%s17 + $0x8] sm:$0xff] %v6435
    %6440 = vst [vmem:[%s17 + $0x10] sm:$0xff] %v6436
    %6441 = vst [vmem:[%s17 + $0x18] sm:$0xff] %v6437
    // Predicated region
    $region130: #{vae_forward.1} parent=1 // pred_check
      _
    $region131: #{vae_forward.1} parent=1 // pred_check_branch
      %6443 = sbr.rel (0) target = $region133
    $region132: #{vae_forward.1} parent=1 // pred_region
      _
    $region133: #{vae_forward.1} parent=1 // pred_fallthru
      _
    // Predicated region
    $region134: #{vae_forward.1} parent=1 // pred_check
      _
    $region135: #{vae_forward.1} parent=1 // pred_check_branch
      %6445 = sbr.rel (0) target = $region137
    $region136: #{vae_forward.1} parent=1 // pred_region
      _
    $region137: #{vae_forward.1} parent=1 // pred_fallthru
      _
    // Predicated region
    $region138: #{vae_forward.1} parent=1 // pred_check
      _
    $region139: #{vae_forward.1} parent=1 // pred_check_branch
      %6447 = sbr.rel (0) target = $region141
    $region140: #{vae_forward.1} parent=1 // pred_region
      _
    $region141: #{vae_forward.1} parent=1 // pred_fallthru
      _
    // Predicated region
    $region142: #{vae_forward.1} parent=1 // pred_check
      _
    $region143: #{vae_forward.1} parent=1 // pred_check_branch
      %6449 = sbr.rel (0) target = $region145
    $region144: #{vae_forward.1} parent=1 // pred_region
      _
    $region145: #{vae_forward.1} parent=1 // pred_fallthru
      _
    %6450 = vsyncpa [#allocation3], 1
    %6451 = vsyncpa [#allocation5], 1
    %6452 = vsyncpa [#allocation8], 1
    %6453 = vsyncpa [#allocation11], 1
    %6454 = vsyncpa [#allocation14], 1
    %6455 = vsyncpa [#allocation17], 1
    %6456 = vsyncpa [#allocation20], 1
    %6457 = vsyncpa [#allocation23], 1

</llo_original>
